<compile_context>
chip_gen: v7x
topology: tpu7x:2x2x1
jax: 0.10.0
libtpu: 0.0.40
codegen_flags: <defaults>
</compile_context>

<pallas_src>
import functools

import jax
import jax.numpy as jnp
from jax.experimental import pallas as pl

# ----- model hyperparameters (small, consistent with the forward pass) -----
D_MODEL = 32          # xlnet.config.d_model (scaled down)
N_HEADS = 2
HEAD_DIM = D_MODEL // N_HEADS
D_FF = 64
N_LAYERS = 2
VOCAB = 64
FEAT_HID = 64         # torch.nn.Linear(num_feats, 64)
LN_EPS = 1e-12
VEC_W = 3 * D_MODEL   # lane width of the packed per-layer bias/scale rows


def _layer_norm(z, g, b):
    mu = jnp.mean(z, axis=-1, keepdims=True)
    var = jnp.mean((z - mu) ** 2, axis=-1, keepdims=True)
    return (z - mu) * jax.lax.rsqrt(var + LN_EPS) * g + b


# ------------------------- fused forward kernel -----------------------------
def _fused_forward_kernel(hidden_ref, mask_ref, feats_ref,
                          wqkv_ref, wo_ref, w1_ref, w2_ref, vecs_ref,
                          wf_ref, bf_ref, wcp_ref, wcf_ref, bc_ref,
                          out_ref, *, batch, seq):
    D, H, HD, F = D_MODEL, N_HEADS, HEAD_DIM, D_FF
    scale = 1.0 / (HD ** 0.5)

    x = hidden_ref[...].astype(jnp.float32)        # (B*S, D)
    mask = mask_ref[...].astype(jnp.float32)       # (B, S), 1 = attend
    neg_bias = (mask - 1.0) * 1e9                  # 0 keep / -1e9 masked

    # ---- transformer layers, weights stacked along leading N_LAYERS axis ----
    for L in range(N_LAYERS):                      # static unroll (N_LAYERS=2)
        wqkv = wqkv_ref[L]                         # (D, 3D)
        wo = wo_ref[L]                             # (D, D)
        w1 = w1_ref[L]                             # (D, D_FF)
        w2 = w2_ref[L]                             # (D_FF, D)
        vec = vecs_ref[L]                          # (8, VEC_W) packed vectors
        bqkv = vec[0:1, :]                         # (1, 3D)
        bo = vec[1:2, :D]
        g1 = vec[2:3, :D]
        be1 = vec[3:4, :D]
        b1 = vec[4:5, :F]
        b2 = vec[5:6, :D]
        g2 = vec[6:7, :D]
        be2 = vec[7:8, :D]

        # fused Q|K|V projection over the whole (B*S, D) slab
        qkv = jnp.dot(x, wqkv, preferred_element_type=jnp.float32) + bqkv

        attn_rows = []
        for b in range(batch):                     # static unroll (B=2)
            rows = slice(b * seq, (b + 1) * seq)
            bias_b = neg_bias[b:b + 1, :]          # (1, S), broadcast over q
            acc = jnp.zeros((seq, D), jnp.float32)
            for h in range(H):                     # static unroll (H=2)
                qh = qkv[rows, h * HD:(h + 1) * HD]
                kh = qkv[rows, D + h * HD:D + (h + 1) * HD]
                vh = qkv[rows, 2 * D + h * HD:2 * D + (h + 1) * HD]
                s = jnp.dot(qh, kh.T,
                            preferred_element_type=jnp.float32) * scale
                s = s + bias_b
                s = s - jnp.max(s, axis=-1, keepdims=True)
                p = jnp.exp(s)
                p = p * pl.reciprocal(jnp.sum(p, axis=-1, keepdims=True),
                                      approx=True)
                ctx = jnp.dot(p, vh, preferred_element_type=jnp.float32)
                # fold the head's output-projection slice in (no lane concat)
                acc = acc + jnp.dot(ctx, wo[h * HD:(h + 1) * HD, :],
                                    preferred_element_type=jnp.float32)
            attn_rows.append(acc)
        attn = jnp.concatenate(attn_rows, axis=0) + bo       # (B*S, D)

        h1 = _layer_norm(x + attn, g1, be1)
        ff = jnp.dot(h1, w1, preferred_element_type=jnp.float32) + b1
        ff = jax.nn.gelu(ff, approximate=True)
        ff = jnp.dot(ff, w2, preferred_element_type=jnp.float32) + b2
        x = _layer_norm(h1 + ff, g2, be2)

    # ---- head: pooled token-0 state + feature MLP + classifier -------------
    pooled = jnp.concatenate(
        [x[b * seq:b * seq + 1, :] for b in range(batch)], axis=0)   # (B, D)

    feats = feats_ref[...].astype(jnp.float32)                       # (B, nf)
    feat_out = (jnp.dot(feats, wf_ref[...],
                        preferred_element_type=jnp.float32) + bf_ref[...])
    # concat([pooled, feat_out]) @ Wc  ==  pooled @ Wc_p + feat_out @ Wc_f
    logits = (jnp.dot(pooled, wcp_ref[...], preferred_element_type=jnp.float32)
              + jnp.dot(feat_out, wcf_ref[...],
                        preferred_element_type=jnp.float32)
              + bc_ref[...])
    out_ref[...] = logits.astype(out_ref.dtype)


# --------------------------- parameter creation -----------------------------
def init_params(key, num_feats, num_labels):
    keys = iter(jax.random.split(key, 64))

    def dense(shape):
        return (0.02 * jax.random.normal(next(keys), shape)).astype(jnp.float32)

    def pad_row(v):
        return jnp.pad(v, ((0, 0), (0, VEC_W - v.shape[1])))

    params = {"emb": dense((VOCAB, D_MODEL))}

    wqkv, wo, w1, w2, vecs = [], [], [], [], []
    for _ in range(N_LAYERS):
        wq = dense((D_MODEL, D_MODEL))
        wk = dense((D_MODEL, D_MODEL))
        wv = dense((D_MODEL, D_MODEL))
        wqkv.append(jnp.concatenate([wq, wk, wv], axis=1))        # (D, 3D)
        wo.append(dense((D_MODEL, D_MODEL)))
        w1.append(dense((D_MODEL, D_FF)))
        w2.append(dense((D_FF, D_MODEL)))
        # packed per-layer small vectors: one (8, VEC_W) slab
        rows = [
            jnp.zeros((1, VEC_W), jnp.float32),                    # bqkv
            pad_row(jnp.zeros((1, D_MODEL), jnp.float32)),         # bo
            pad_row(jnp.ones((1, D_MODEL), jnp.float32)),          # g1
            pad_row(jnp.zeros((1, D_MODEL), jnp.float32)),         # be1
            pad_row(jnp.zeros((1, D_FF), jnp.float32)),            # b1
            pad_row(jnp.zeros((1, D_MODEL), jnp.float32)),         # b2
            pad_row(jnp.ones((1, D_MODEL), jnp.float32)),          # g2
            pad_row(jnp.zeros((1, D_MODEL), jnp.float32)),         # be2
        ]
        vecs.append(jnp.concatenate(rows, axis=0))

    params["wqkv"] = jnp.stack(wqkv)       # (N_LAYERS, D, 3D)
    params["wo"] = jnp.stack(wo)           # (N_LAYERS, D, D)
    params["w1"] = jnp.stack(w1)           # (N_LAYERS, D, D_FF)
    params["w2"] = jnp.stack(w2)           # (N_LAYERS, D_FF, D)
    params["vecs"] = jnp.stack(vecs)       # (N_LAYERS, 8, VEC_W)

    params["head"] = {
        "wf": dense((num_feats, FEAT_HID)),     # self.feats
        "bf": jnp.zeros((1, FEAT_HID), jnp.float32),
        "wcp": dense((D_MODEL, num_labels)),    # classifier weight, pooled part
        "wcf": dense((FEAT_HID, num_labels)),   # classifier weight, feats part
        "bc": jnp.zeros((1, num_labels), jnp.float32),
    }
    return params


# ------------------------------- forward ------------------------------------
def xlnet_with_feats_forward(params, input_ids, attention_mask, feats):
    B, S = input_ids.shape
    # embedding lookup (glue, plain JAX)
    hidden = jnp.take(params["emb"], input_ids, axis=0).reshape(B * S, D_MODEL)
    mask = attention_mask.astype(jnp.float32)                    # (B, S)
    hp = params["head"]
    num_labels = hp["bc"].shape[-1]

    args = [hidden, mask, feats.astype(jnp.float32),
            params["wqkv"], params["wo"], params["w1"], params["w2"],
            params["vecs"],
            hp["wf"], hp["bf"], hp["wcp"], hp["wcf"], hp["bc"]]

    def full_spec(a):
        n = a.ndim
        return pl.BlockSpec(a.shape, lambda n=n: (0,) * n)

    kernel = functools.partial(_fused_forward_kernel, batch=B, seq=S)
    return pl.pallas_call(
        kernel,
        out_shape=jax.ShapeDtypeStruct((B, num_labels), jnp.float32),
        in_specs=[full_spec(a) for a in args],
        out_specs=pl.BlockSpec((B, num_labels), lambda: (0, 0)),
    )(*args)


if __name__ == "__main__":
    B, S = 2, 8
    num_feats, num_labels = 4, 3

    key = jax.random.PRNGKey(0)
    k_param, k_ids, k_feats = jax.random.split(key, 3)

    params = init_params(k_param, num_feats, num_labels)

    input_ids = jax.random.randint(k_ids, (B, S), 0, VOCAB, dtype=jnp.int32)
    attention_mask = jnp.array(
        [[1, 1, 1, 1, 1, 1, 1, 1],
         [1, 1, 1, 1, 1, 0, 0, 0]], dtype=jnp.int32)
    feats = jax.random.normal(k_feats, (B, num_feats), dtype=jnp.float32)

    logits = xlnet_with_feats_forward(params, input_ids, attention_mask, feats)
    logits = jax.block_until_ready(logits)
    assert logits.shape == (B, num_labels)
    print("KERNEL_OK")
</pallas_src>

<mosaic_0001>
module attributes {stable_mosaic.version = 11 : i64} {
  func.func @_fused_forward_kernel(%arg0: memref<16x32xf32, #tpu.memory_space<vmem>>, %arg1: memref<2x8xf32, #tpu.memory_space<vmem>>, %arg2: memref<2x4xf32, #tpu.memory_space<vmem>>, %arg3: memref<2x32x96xf32, #tpu.memory_space<vmem>>, %arg4: memref<2x32x32xf32, #tpu.memory_space<vmem>>, %arg5: memref<2x32x64xf32, #tpu.memory_space<vmem>>, %arg6: memref<2x64x32xf32, #tpu.memory_space<vmem>>, %arg7: memref<2x8x96xf32, #tpu.memory_space<vmem>>, %arg8: memref<4x64xf32, #tpu.memory_space<vmem>>, %arg9: memref<1x64xf32, #tpu.memory_space<vmem>>, %arg10: memref<32x3xf32, #tpu.memory_space<vmem>>, %arg11: memref<64x3xf32, #tpu.memory_space<vmem>>, %arg12: memref<1x3xf32, #tpu.memory_space<vmem>>, %arg13: memref<2x3xf32, #tpu.memory_space<vmem>>) attributes {dimension_semantics = [], scalar_prefetch = 0 : i64, scratch_operands = 0 : i64, tpu.core_type = #tpu.core_type<tc>} {
    %c0 = arith.constant 0 : index
    %c0_0 = arith.constant 0 : index
    %0 = vector.load %arg0[%c0, %c0_0] : memref<16x32xf32, #tpu.memory_space<vmem>>, vector<16x32xf32>
    %c0_1 = arith.constant 0 : index
    %c0_2 = arith.constant 0 : index
    %1 = vector.load %arg1[%c0_1, %c0_2] : memref<2x8xf32, #tpu.memory_space<vmem>>, vector<2x8xf32>
    %cst = arith.constant 1.000000e+00 : f32
    %2 = vector.broadcast %cst : f32 to vector<2x8xf32>
    %3 = arith.subf %1, %2 : vector<2x8xf32>
    %cst_3 = arith.constant 1.000000e+09 : f32
    %4 = vector.broadcast %cst_3 : f32 to vector<2x8xf32>
    %5 = arith.mulf %3, %4 : vector<2x8xf32>
    %c0_4 = arith.constant 0 : index
    %c0_5 = arith.constant 0 : index
    %c0_6 = arith.constant 0 : index
    %6 = vector.load %arg3[%c0_4, %c0_5, %c0_6] : memref<2x32x96xf32, #tpu.memory_space<vmem>>, vector<1x32x96xf32>
    %7 = vector.shape_cast %6 : vector<1x32x96xf32> to vector<32x96xf32>
    %c0_7 = arith.constant 0 : index
    %c0_8 = arith.constant 0 : index
    %c0_9 = arith.constant 0 : index
    %8 = vector.load %arg4[%c0_7, %c0_8, %c0_9] : memref<2x32x32xf32, #tpu.memory_space<vmem>>, vector<1x32x32xf32>
    %9 = vector.shape_cast %8 : vector<1x32x32xf32> to vector<32x32xf32>
    %c0_10 = arith.constant 0 : index
    %c0_11 = arith.constant 0 : index
    %c0_12 = arith.constant 0 : index
    %10 = vector.load %arg5[%c0_10, %c0_11, %c0_12] : memref<2x32x64xf32, #tpu.memory_space<vmem>>, vector<1x32x64xf32>
    %11 = vector.shape_cast %10 : vector<1x32x64xf32> to vector<32x64xf32>
    %c0_13 = arith.constant 0 : index
    %c0_14 = arith.constant 0 : index
    %c0_15 = arith.constant 0 : index
    %12 = vector.load %arg6[%c0_13, %c0_14, %c0_15] : memref<2x64x32xf32, #tpu.memory_space<vmem>>, vector<1x64x32xf32>
    %13 = vector.shape_cast %12 : vector<1x64x32xf32> to vector<64x32xf32>
    %c0_16 = arith.constant 0 : index
    %c0_17 = arith.constant 0 : index
    %c0_18 = arith.constant 0 : index
    %14 = vector.load %arg7[%c0_16, %c0_17, %c0_18] : memref<2x8x96xf32, #tpu.memory_space<vmem>>, vector<1x8x96xf32>
    %15 = vector.shape_cast %14 : vector<1x8x96xf32> to vector<8x96xf32>
    %16 = vector.extract_strided_slice %15 {offsets = [0, 0], sizes = [1, 96], strides = [1, 1]} : vector<8x96xf32> to vector<1x96xf32>
    %17 = vector.extract_strided_slice %15 {offsets = [1, 0], sizes = [1, 32], strides = [1, 1]} : vector<8x96xf32> to vector<1x32xf32>
    %18 = vector.extract_strided_slice %15 {offsets = [2, 0], sizes = [1, 32], strides = [1, 1]} : vector<8x96xf32> to vector<1x32xf32>
    %19 = vector.extract_strided_slice %15 {offsets = [3, 0], sizes = [1, 32], strides = [1, 1]} : vector<8x96xf32> to vector<1x32xf32>
    %20 = vector.extract_strided_slice %15 {offsets = [4, 0], sizes = [1, 64], strides = [1, 1]} : vector<8x96xf32> to vector<1x64xf32>
    %21 = vector.extract_strided_slice %15 {offsets = [5, 0], sizes = [1, 32], strides = [1, 1]} : vector<8x96xf32> to vector<1x32xf32>
    %22 = vector.extract_strided_slice %15 {offsets = [6, 0], sizes = [1, 32], strides = [1, 1]} : vector<8x96xf32> to vector<1x32xf32>
    %23 = vector.extract_strided_slice %15 {offsets = [7, 0], sizes = [1, 32], strides = [1, 1]} : vector<8x96xf32> to vector<1x32xf32>
    %cst_19 = arith.constant dense<0.000000e+00> : vector<16x96xf32>
    %24 = tpu.matmul %0, %7, %cst_19 {dimension_numbers = #tpu.dot_dimension_numbers<[1], [0], [0], [1], [0, 0, 1, 1], [], []>} : vector<16x32xf32>, vector<32x96xf32>, vector<16x96xf32> -> vector<16x96xf32>
    %25 = vector.broadcast %16 : vector<1x96xf32> to vector<16x96xf32>
    %26 = arith.addf %24, %25 : vector<16x96xf32>
    %27 = vector.extract_strided_slice %5 {offsets = [0, 0], sizes = [1, 8], strides = [1, 1]} : vector<2x8xf32> to vector<1x8xf32>
    %cst_20 = arith.constant 0.000000e+00 : f32
    %28 = vector.broadcast %cst_20 : f32 to vector<8x32xf32>
    %29 = vector.extract_strided_slice %26 {offsets = [0, 0], sizes = [8, 16], strides = [1, 1]} : vector<16x96xf32> to vector<8x16xf32>
    %30 = vector.extract_strided_slice %26 {offsets = [0, 32], sizes = [8, 16], strides = [1, 1]} : vector<16x96xf32> to vector<8x16xf32>
    %31 = vector.extract_strided_slice %26 {offsets = [0, 64], sizes = [8, 16], strides = [1, 1]} : vector<16x96xf32> to vector<8x16xf32>
    %32 = tpu.transpose %30, [1, 0] : vector<8x16xf32> -> vector<16x8xf32>
    %cst_21 = arith.constant dense<0.000000e+00> : vector<8x8xf32>
    %33 = tpu.matmul %29, %32, %cst_21 {dimension_numbers = #tpu.dot_dimension_numbers<[1], [0], [0], [1], [0, 0, 1, 1], [], []>} : vector<8x16xf32>, vector<16x8xf32>, vector<8x8xf32> -> vector<8x8xf32>
    %cst_22 = arith.constant 2.500000e-01 : f32
    %34 = vector.broadcast %cst_22 : f32 to vector<8x8xf32>
    %35 = arith.mulf %33, %34 : vector<8x8xf32>
    %36 = vector.broadcast %27 : vector<1x8xf32> to vector<8x8xf32>
    %37 = arith.addf %35, %36 : vector<8x8xf32>
    %cst_23 = arith.constant dense<0xFF800000> : vector<8xf32>
    %38 = vector.multi_reduction <maximumf>, %37, %cst_23 [1] : vector<8x8xf32> to vector<8xf32>
    %39 = vector.shape_cast %38 : vector<8xf32> to vector<8x1xf32>
    %40 = vector.broadcast %39 : vector<8x1xf32> to vector<8x8xf32>
    %41 = arith.subf %37, %40 : vector<8x8xf32>
    %42 = math.exp %41 : vector<8x8xf32>
    %cst_24 = arith.constant dense<0.000000e+00> : vector<8xf32>
    %43 = vector.multi_reduction <add>, %42, %cst_24 [1] : vector<8x8xf32> to vector<8xf32>
    %44 = vector.shape_cast %43 : vector<8xf32> to vector<8x1xf32>
    %45 = tpu.reciprocal %44 {approx = true} : vector<8x1xf32> -> vector<8x1xf32>
    %46 = vector.broadcast %45 : vector<8x1xf32> to vector<8x8xf32>
    %47 = arith.mulf %42, %46 : vector<8x8xf32>
    %cst_25 = arith.constant dense<0.000000e+00> : vector<8x16xf32>
    %48 = tpu.matmul %47, %31, %cst_25 {dimension_numbers = #tpu.dot_dimension_numbers<[1], [0], [0], [1], [0, 0, 1, 1], [], []>} : vector<8x8xf32>, vector<8x16xf32>, vector<8x16xf32> -> vector<8x16xf32>
    %49 = vector.extract_strided_slice %9 {offsets = [0, 0], sizes = [16, 32], strides = [1, 1]} : vector<32x32xf32> to vector<16x32xf32>
    %cst_26 = arith.constant dense<0.000000e+00> : vector<8x32xf32>
    %50 = tpu.matmul %48, %49, %cst_26 {dimension_numbers = #tpu.dot_dimension_numbers<[1], [0], [0], [1], [0, 0, 1, 1], [], []>} : vector<8x16xf32>, vector<16x32xf32>, vector<8x32xf32> -> vector<8x32xf32>
    %51 = arith.addf %28, %50 : vector<8x32xf32>
    %52 = vector.extract_strided_slice %26 {offsets = [0, 16], sizes = [8, 16], strides = [1, 1]} : vector<16x96xf32> to vector<8x16xf32>
    %53 = vector.extract_strided_slice %26 {offsets = [0, 48], sizes = [8, 16], strides = [1, 1]} : vector<16x96xf32> to vector<8x16xf32>
    %54 = vector.extract_strided_slice %26 {offsets = [0, 80], sizes = [8, 16], strides = [1, 1]} : vector<16x96xf32> to vector<8x16xf32>
    %55 = tpu.transpose %53, [1, 0] : vector<8x16xf32> -> vector<16x8xf32>
    %cst_27 = arith.constant dense<0.000000e+00> : vector<8x8xf32>
    %56 = tpu.matmul %52, %55, %cst_27 {dimension_numbers = #tpu.dot_dimension_numbers<[1], [0], [0], [1], [0, 0, 1, 1], [], []>} : vector<8x16xf32>, vector<16x8xf32>, vector<8x8xf32> -> vector<8x8xf32>
    %cst_28 = arith.constant 2.500000e-01 : f32
    %57 = vector.broadcast %cst_28 : f32 to vector<8x8xf32>
    %58 = arith.mulf %56, %57 : vector<8x8xf32>
    %59 = vector.broadcast %27 : vector<1x8xf32> to vector<8x8xf32>
    %60 = arith.addf %58, %59 : vector<8x8xf32>
    %cst_29 = arith.constant dense<0xFF800000> : vector<8xf32>
    %61 = vector.multi_reduction <maximumf>, %60, %cst_29 [1] : vector<8x8xf32> to vector<8xf32>
    %62 = vector.shape_cast %61 : vector<8xf32> to vector<8x1xf32>
    %63 = vector.broadcast %62 : vector<8x1xf32> to vector<8x8xf32>
    %64 = arith.subf %60, %63 : vector<8x8xf32>
    %65 = math.exp %64 : vector<8x8xf32>
    %cst_30 = arith.constant dense<0.000000e+00> : vector<8xf32>
    %66 = vector.multi_reduction <add>, %65, %cst_30 [1] : vector<8x8xf32> to vector<8xf32>
    %67 = vector.shape_cast %66 : vector<8xf32> to vector<8x1xf32>
    %68 = tpu.reciprocal %67 {approx = true} : vector<8x1xf32> -> vector<8x1xf32>
    %69 = vector.broadcast %68 : vector<8x1xf32> to vector<8x8xf32>
    %70 = arith.mulf %65, %69 : vector<8x8xf32>
    %cst_31 = arith.constant dense<0.000000e+00> : vector<8x16xf32>
    %71 = tpu.matmul %70, %54, %cst_31 {dimension_numbers = #tpu.dot_dimension_numbers<[1], [0], [0], [1], [0, 0, 1, 1], [], []>} : vector<8x8xf32>, vector<8x16xf32>, vector<8x16xf32> -> vector<8x16xf32>
    %72 = vector.extract_strided_slice %9 {offsets = [16, 0], sizes = [16, 32], strides = [1, 1]} : vector<32x32xf32> to vector<16x32xf32>
    %cst_32 = arith.constant dense<0.000000e+00> : vector<8x32xf32>
    %73 = tpu.matmul %71, %72, %cst_32 {dimension_numbers = #tpu.dot_dimension_numbers<[1], [0], [0], [1], [0, 0, 1, 1], [], []>} : vector<8x16xf32>, vector<16x32xf32>, vector<8x32xf32> -> vector<8x32xf32>
    %74 = arith.addf %51, %73 : vector<8x32xf32>
    %75 = vector.extract_strided_slice %5 {offsets = [1, 0], sizes = [1, 8], strides = [1, 1]} : vector<2x8xf32> to vector<1x8xf32>
    %cst_33 = arith.constant 0.000000e+00 : f32
    %76 = vector.broadcast %cst_33 : f32 to vector<8x32xf32>
    %77 = vector.extract_strided_slice %26 {offsets = [8, 0], sizes = [8, 16], strides = [1, 1]} : vector<16x96xf32> to vector<8x16xf32>
    %78 = vector.extract_strided_slice %26 {offsets = [8, 32], sizes = [8, 16], strides = [1, 1]} : vector<16x96xf32> to vector<8x16xf32>
    %79 = vector.extract_strided_slice %26 {offsets = [8, 64], sizes = [8, 16], strides = [1, 1]} : vector<16x96xf32> to vector<8x16xf32>
    %80 = tpu.transpose %78, [1, 0] : vector<8x16xf32> -> vector<16x8xf32>
    %cst_34 = arith.constant dense<0.000000e+00> : vector<8x8xf32>
    %81 = tpu.matmul %77, %80, %cst_34 {dimension_numbers = #tpu.dot_dimension_numbers<[1], [0], [0], [1], [0, 0, 1, 1], [], []>} : vector<8x16xf32>, vector<16x8xf32>, vector<8x8xf32> -> vector<8x8xf32>
    %cst_35 = arith.constant 2.500000e-01 : f32
    %82 = vector.broadcast %cst_35 : f32 to vector<8x8xf32>
    %83 = arith.mulf %81, %82 : vector<8x8xf32>
    %84 = vector.broadcast %75 : vector<1x8xf32> to vector<8x8xf32>
    %85 = arith.addf %83, %84 : vector<8x8xf32>
    %cst_36 = arith.constant dense<0xFF800000> : vector<8xf32>
    %86 = vector.multi_reduction <maximumf>, %85, %cst_36 [1] : vector<8x8xf32> to vector<8xf32>
    %87 = vector.shape_cast %86 : vector<8xf32> to vector<8x1xf32>
    %88 = vector.broadcast %87 : vector<8x1xf32> to vector<8x8xf32>
    %89 = arith.subf %85, %88 : vector<8x8xf32>
    %90 = math.exp %89 : vector<8x8xf32>
    %cst_37 = arith.constant dense<0.000000e+00> : vector<8xf32>
    %91 = vector.multi_reduction <add>, %90, %cst_37 [1] : vector<8x8xf32> to vector<8xf32>
    %92 = vector.shape_cast %91 : vector<8xf32> to vector<8x1xf32>
    %93 = tpu.reciprocal %92 {approx = true} : vector<8x1xf32> -> vector<8x1xf32>
    %94 = vector.broadcast %93 : vector<8x1xf32> to vector<8x8xf32>
    %95 = arith.mulf %90, %94 : vector<8x8xf32>
    %cst_38 = arith.constant dense<0.000000e+00> : vector<8x16xf32>
    %96 = tpu.matmul %95, %79, %cst_38 {dimension_numbers = #tpu.dot_dimension_numbers<[1], [0], [0], [1], [0, 0, 1, 1], [], []>} : vector<8x8xf32>, vector<8x16xf32>, vector<8x16xf32> -> vector<8x16xf32>
    %97 = vector.extract_strided_slice %9 {offsets = [0, 0], sizes = [16, 32], strides = [1, 1]} : vector<32x32xf32> to vector<16x32xf32>
    %cst_39 = arith.constant dense<0.000000e+00> : vector<8x32xf32>
    %98 = tpu.matmul %96, %97, %cst_39 {dimension_numbers = #tpu.dot_dimension_numbers<[1], [0], [0], [1], [0, 0, 1, 1], [], []>} : vector<8x16xf32>, vector<16x32xf32>, vector<8x32xf32> -> vector<8x32xf32>
    %99 = arith.addf %76, %98 : vector<8x32xf32>
    %100 = vector.extract_strided_slice %26 {offsets = [8, 16], sizes = [8, 16], strides = [1, 1]} : vector<16x96xf32> to vector<8x16xf32>
    %101 = vector.extract_strided_slice %26 {offsets = [8, 48], sizes = [8, 16], strides = [1, 1]} : vector<16x96xf32> to vector<8x16xf32>
    %102 = vector.extract_strided_slice %26 {offsets = [8, 80], sizes = [8, 16], strides = [1, 1]} : vector<16x96xf32> to vector<8x16xf32>
    %103 = tpu.transpose %101, [1, 0] : vector<8x16xf32> -> vector<16x8xf32>
    %cst_40 = arith.constant dense<0.000000e+00> : vector<8x8xf32>
    %104 = tpu.matmul %100, %103, %cst_40 {dimension_numbers = #tpu.dot_dimension_numbers<[1], [0], [0], [1], [0, 0, 1, 1], [], []>} : vector<8x16xf32>, vector<16x8xf32>, vector<8x8xf32> -> vector<8x8xf32>
    %cst_41 = arith.constant 2.500000e-01 : f32
    %105 = vector.broadcast %cst_41 : f32 to vector<8x8xf32>
    %106 = arith.mulf %104, %105 : vector<8x8xf32>
    %107 = vector.broadcast %75 : vector<1x8xf32> to vector<8x8xf32>
    %108 = arith.addf %106, %107 : vector<8x8xf32>
    %cst_42 = arith.constant dense<0xFF800000> : vector<8xf32>
    %109 = vector.multi_reduction <maximumf>, %108, %cst_42 [1] : vector<8x8xf32> to vector<8xf32>
    %110 = vector.shape_cast %109 : vector<8xf32> to vector<8x1xf32>
    %111 = vector.broadcast %110 : vector<8x1xf32> to vector<8x8xf32>
    %112 = arith.subf %108, %111 : vector<8x8xf32>
    %113 = math.exp %112 : vector<8x8xf32>
    %cst_43 = arith.constant dense<0.000000e+00> : vector<8xf32>
    %114 = vector.multi_reduction <add>, %113, %cst_43 [1] : vector<8x8xf32> to vector<8xf32>
    %115 = vector.shape_cast %114 : vector<8xf32> to vector<8x1xf32>
    %116 = tpu.reciprocal %115 {approx = true} : vector<8x1xf32> -> vector<8x1xf32>
    %117 = vector.broadcast %116 : vector<8x1xf32> to vector<8x8xf32>
    %118 = arith.mulf %113, %117 : vector<8x8xf32>
    %cst_44 = arith.constant dense<0.000000e+00> : vector<8x16xf32>
    %119 = tpu.matmul %118, %102, %cst_44 {dimension_numbers = #tpu.dot_dimension_numbers<[1], [0], [0], [1], [0, 0, 1, 1], [], []>} : vector<8x8xf32>, vector<8x16xf32>, vector<8x16xf32> -> vector<8x16xf32>
    %120 = vector.extract_strided_slice %9 {offsets = [16, 0], sizes = [16, 32], strides = [1, 1]} : vector<32x32xf32> to vector<16x32xf32>
    %cst_45 = arith.constant dense<0.000000e+00> : vector<8x32xf32>
    %121 = tpu.matmul %119, %120, %cst_45 {dimension_numbers = #tpu.dot_dimension_numbers<[1], [0], [0], [1], [0, 0, 1, 1], [], []>} : vector<8x16xf32>, vector<16x32xf32>, vector<8x32xf32> -> vector<8x32xf32>
    %122 = arith.addf %99, %121 : vector<8x32xf32>
    %123 = tpu.concatenate %74, %122 in 0 : vector<8x32xf32>, vector<8x32xf32> -> vector<16x32xf32>
    %124 = vector.broadcast %17 : vector<1x32xf32> to vector<16x32xf32>
    %125 = arith.addf %123, %124 : vector<16x32xf32>
    %126 = arith.addf %0, %125 : vector<16x32xf32>
    %cst_46 = arith.constant dense<0.000000e+00> : vector<16xf32>
    %127 = vector.multi_reduction <add>, %126, %cst_46 [1] : vector<16x32xf32> to vector<16xf32>
    %128 = vector.shape_cast %127 : vector<16xf32> to vector<16x1xf32>
    %cst_47 = arith.constant 3.200000e+01 : f32
    %129 = vector.broadcast %cst_47 : f32 to vector<16x1xf32>
    %130 = arith.divf %128, %129 : vector<16x1xf32>
    %131 = vector.broadcast %130 : vector<16x1xf32> to vector<16x32xf32>
    %132 = arith.subf %126, %131 : vector<16x32xf32>
    %133 = arith.mulf %132, %132 : vector<16x32xf32>
    %cst_48 = arith.constant dense<0.000000e+00> : vector<16xf32>
    %134 = vector.multi_reduction <add>, %133, %cst_48 [1] : vector<16x32xf32> to vector<16xf32>
    %135 = vector.shape_cast %134 : vector<16xf32> to vector<16x1xf32>
    %cst_49 = arith.constant 3.200000e+01 : f32
    %136 = vector.broadcast %cst_49 : f32 to vector<16x1xf32>
    %137 = arith.divf %135, %136 : vector<16x1xf32>
    %138 = vector.broadcast %130 : vector<16x1xf32> to vector<16x32xf32>
    %139 = arith.subf %126, %138 : vector<16x32xf32>
    %cst_50 = arith.constant 9.99999996E-13 : f32
    %140 = vector.broadcast %cst_50 : f32 to vector<16x1xf32>
    %141 = arith.addf %137, %140 : vector<16x1xf32>
    %142 = math.rsqrt %141 : vector<16x1xf32>
    %143 = vector.broadcast %142 : vector<16x1xf32> to vector<16x32xf32>
    %144 = arith.mulf %139, %143 : vector<16x32xf32>
    %145 = vector.broadcast %18 : vector<1x32xf32> to vector<16x32xf32>
    %146 = arith.mulf %144, %145 : vector<16x32xf32>
    %147 = vector.broadcast %19 : vector<1x32xf32> to vector<16x32xf32>
    %148 = arith.addf %146, %147 : vector<16x32xf32>
    %cst_51 = arith.constant dense<0.000000e+00> : vector<16x64xf32>
    %149 = tpu.matmul %148, %11, %cst_51 {dimension_numbers = #tpu.dot_dimension_numbers<[1], [0], [0], [1], [0, 0, 1, 1], [], []>} : vector<16x32xf32>, vector<32x64xf32>, vector<16x64xf32> -> vector<16x64xf32>
    %150 = vector.broadcast %20 : vector<1x64xf32> to vector<16x64xf32>
    %151 = arith.addf %149, %150 : vector<16x64xf32>
    %152 = arith.mulf %151, %151 : vector<16x64xf32>
    %153 = arith.mulf %151, %152 : vector<16x64xf32>
    %cst_52 = arith.constant 4.471500e-02 : f32
    %154 = vector.broadcast %cst_52 : f32 to vector<16x64xf32>
    %155 = arith.mulf %154, %153 : vector<16x64xf32>
    %156 = arith.addf %151, %155 : vector<16x64xf32>
    %cst_53 = arith.constant 0.797884583 : f32
    %157 = vector.broadcast %cst_53 : f32 to vector<16x64xf32>
    %158 = arith.mulf %157, %156 : vector<16x64xf32>
    %159 = math.tanh %158 : vector<16x64xf32>
    %cst_54 = arith.constant 1.000000e+00 : f32
    %160 = vector.broadcast %cst_54 : f32 to vector<16x64xf32>
    %161 = arith.addf %160, %159 : vector<16x64xf32>
    %cst_55 = arith.constant 5.000000e-01 : f32
    %162 = vector.broadcast %cst_55 : f32 to vector<16x64xf32>
    %163 = arith.mulf %162, %161 : vector<16x64xf32>
    %164 = arith.mulf %151, %163 : vector<16x64xf32>
    %cst_56 = arith.constant dense<0.000000e+00> : vector<16x32xf32>
    %165 = tpu.matmul %164, %13, %cst_56 {dimension_numbers = #tpu.dot_dimension_numbers<[1], [0], [0], [1], [0, 0, 1, 1], [], []>} : vector<16x64xf32>, vector<64x32xf32>, vector<16x32xf32> -> vector<16x32xf32>
    %166 = vector.broadcast %21 : vector<1x32xf32> to vector<16x32xf32>
    %167 = arith.addf %165, %166 : vector<16x32xf32>
    %168 = arith.addf %148, %167 : vector<16x32xf32>
    %cst_57 = arith.constant dense<0.000000e+00> : vector<16xf32>
    %169 = vector.multi_reduction <add>, %168, %cst_57 [1] : vector<16x32xf32> to vector<16xf32>
    %170 = vector.shape_cast %169 : vector<16xf32> to vector<16x1xf32>
    %cst_58 = arith.constant 3.200000e+01 : f32
    %171 = vector.broadcast %cst_58 : f32 to vector<16x1xf32>
    %172 = arith.divf %170, %171 : vector<16x1xf32>
    %173 = vector.broadcast %172 : vector<16x1xf32> to vector<16x32xf32>
    %174 = arith.subf %168, %173 : vector<16x32xf32>
    %175 = arith.mulf %174, %174 : vector<16x32xf32>
    %cst_59 = arith.constant dense<0.000000e+00> : vector<16xf32>
    %176 = vector.multi_reduction <add>, %175, %cst_59 [1] : vector<16x32xf32> to vector<16xf32>
    %177 = vector.shape_cast %176 : vector<16xf32> to vector<16x1xf32>
    %cst_60 = arith.constant 3.200000e+01 : f32
    %178 = vector.broadcast %cst_60 : f32 to vector<16x1xf32>
    %179 = arith.divf %177, %178 : vector<16x1xf32>
    %180 = vector.broadcast %172 : vector<16x1xf32> to vector<16x32xf32>
    %181 = arith.subf %168, %180 : vector<16x32xf32>
    %cst_61 = arith.constant 9.99999996E-13 : f32
    %182 = vector.broadcast %cst_61 : f32 to vector<16x1xf32>
    %183 = arith.addf %179, %182 : vector<16x1xf32>
    %184 = math.rsqrt %183 : vector<16x1xf32>
    %185 = vector.broadcast %184 : vector<16x1xf32> to vector<16x32xf32>
    %186 = arith.mulf %181, %185 : vector<16x32xf32>
    %187 = vector.broadcast %22 : vector<1x32xf32> to vector<16x32xf32>
    %188 = arith.mulf %186, %187 : vector<16x32xf32>
    %189 = vector.broadcast %23 : vector<1x32xf32> to vector<16x32xf32>
    %190 = arith.addf %188, %189 : vector<16x32xf32>
    %c1 = arith.constant 1 : index
    %c0_62 = arith.constant 0 : index
    %c0_63 = arith.constant 0 : index
    %191 = vector.load %arg3[%c1, %c0_62, %c0_63] : memref<2x32x96xf32, #tpu.memory_space<vmem>>, vector<1x32x96xf32>
    %192 = vector.shape_cast %191 : vector<1x32x96xf32> to vector<32x96xf32>
    %c1_64 = arith.constant 1 : index
    %c0_65 = arith.constant 0 : index
    %c0_66 = arith.constant 0 : index
    %193 = vector.load %arg4[%c1_64, %c0_65, %c0_66] : memref<2x32x32xf32, #tpu.memory_space<vmem>>, vector<1x32x32xf32>
    %194 = vector.shape_cast %193 : vector<1x32x32xf32> to vector<32x32xf32>
    %c1_67 = arith.constant 1 : index
    %c0_68 = arith.constant 0 : index
    %c0_69 = arith.constant 0 : index
    %195 = vector.load %arg5[%c1_67, %c0_68, %c0_69] : memref<2x32x64xf32, #tpu.memory_space<vmem>>, vector<1x32x64xf32>
    %196 = vector.shape_cast %195 : vector<1x32x64xf32> to vector<32x64xf32>
    %c1_70 = arith.constant 1 : index
    %c0_71 = arith.constant 0 : index
    %c0_72 = arith.constant 0 : index
    %197 = vector.load %arg6[%c1_70, %c0_71, %c0_72] : memref<2x64x32xf32, #tpu.memory_space<vmem>>, vector<1x64x32xf32>
    %198 = vector.shape_cast %197 : vector<1x64x32xf32> to vector<64x32xf32>
    %c1_73 = arith.constant 1 : index
    %c0_74 = arith.constant 0 : index
    %c0_75 = arith.constant 0 : index
    %199 = vector.load %arg7[%c1_73, %c0_74, %c0_75] : memref<2x8x96xf32, #tpu.memory_space<vmem>>, vector<1x8x96xf32>
    %200 = vector.shape_cast %199 : vector<1x8x96xf32> to vector<8x96xf32>
    %201 = vector.extract_strided_slice %200 {offsets = [0, 0], sizes = [1, 96], strides = [1, 1]} : vector<8x96xf32> to vector<1x96xf32>
    %202 = vector.extract_strided_slice %200 {offsets = [1, 0], sizes = [1, 32], strides = [1, 1]} : vector<8x96xf32> to vector<1x32xf32>
    %203 = vector.extract_strided_slice %200 {offsets = [2, 0], sizes = [1, 32], strides = [1, 1]} : vector<8x96xf32> to vector<1x32xf32>
    %204 = vector.extract_strided_slice %200 {offsets = [3, 0], sizes = [1, 32], strides = [1, 1]} : vector<8x96xf32> to vector<1x32xf32>
    %205 = vector.extract_strided_slice %200 {offsets = [4, 0], sizes = [1, 64], strides = [1, 1]} : vector<8x96xf32> to vector<1x64xf32>
    %206 = vector.extract_strided_slice %200 {offsets = [5, 0], sizes = [1, 32], strides = [1, 1]} : vector<8x96xf32> to vector<1x32xf32>
    %207 = vector.extract_strided_slice %200 {offsets = [6, 0], sizes = [1, 32], strides = [1, 1]} : vector<8x96xf32> to vector<1x32xf32>
    %208 = vector.extract_strided_slice %200 {offsets = [7, 0], sizes = [1, 32], strides = [1, 1]} : vector<8x96xf32> to vector<1x32xf32>
    %cst_76 = arith.constant dense<0.000000e+00> : vector<16x96xf32>
    %209 = tpu.matmul %190, %192, %cst_76 {dimension_numbers = #tpu.dot_dimension_numbers<[1], [0], [0], [1], [0, 0, 1, 1], [], []>} : vector<16x32xf32>, vector<32x96xf32>, vector<16x96xf32> -> vector<16x96xf32>
    %210 = vector.broadcast %201 : vector<1x96xf32> to vector<16x96xf32>
    %211 = arith.addf %209, %210 : vector<16x96xf32>
    %212 = vector.extract_strided_slice %5 {offsets = [0, 0], sizes = [1, 8], strides = [1, 1]} : vector<2x8xf32> to vector<1x8xf32>
    %cst_77 = arith.constant 0.000000e+00 : f32
    %213 = vector.broadcast %cst_77 : f32 to vector<8x32xf32>
    %214 = vector.extract_strided_slice %211 {offsets = [0, 0], sizes = [8, 16], strides = [1, 1]} : vector<16x96xf32> to vector<8x16xf32>
    %215 = vector.extract_strided_slice %211 {offsets = [0, 32], sizes = [8, 16], strides = [1, 1]} : vector<16x96xf32> to vector<8x16xf32>
    %216 = vector.extract_strided_slice %211 {offsets = [0, 64], sizes = [8, 16], strides = [1, 1]} : vector<16x96xf32> to vector<8x16xf32>
    %217 = tpu.transpose %215, [1, 0] : vector<8x16xf32> -> vector<16x8xf32>
    %cst_78 = arith.constant dense<0.000000e+00> : vector<8x8xf32>
    %218 = tpu.matmul %214, %217, %cst_78 {dimension_numbers = #tpu.dot_dimension_numbers<[1], [0], [0], [1], [0, 0, 1, 1], [], []>} : vector<8x16xf32>, vector<16x8xf32>, vector<8x8xf32> -> vector<8x8xf32>
    %cst_79 = arith.constant 2.500000e-01 : f32
    %219 = vector.broadcast %cst_79 : f32 to vector<8x8xf32>
    %220 = arith.mulf %218, %219 : vector<8x8xf32>
    %221 = vector.broadcast %212 : vector<1x8xf32> to vector<8x8xf32>
    %222 = arith.addf %220, %221 : vector<8x8xf32>
    %cst_80 = arith.constant dense<0xFF800000> : vector<8xf32>
    %223 = vector.multi_reduction <maximumf>, %222, %cst_80 [1] : vector<8x8xf32> to vector<8xf32>
    %224 = vector.shape_cast %223 : vector<8xf32> to vector<8x1xf32>
    %225 = vector.broadcast %224 : vector<8x1xf32> to vector<8x8xf32>
    %226 = arith.subf %222, %225 : vector<8x8xf32>
    %227 = math.exp %226 : vector<8x8xf32>
    %cst_81 = arith.constant dense<0.000000e+00> : vector<8xf32>
    %228 = vector.multi_reduction <add>, %227, %cst_81 [1] : vector<8x8xf32> to vector<8xf32>
    %229 = vector.shape_cast %228 : vector<8xf32> to vector<8x1xf32>
    %230 = tpu.reciprocal %229 {approx = true} : vector<8x1xf32> -> vector<8x1xf32>
    %231 = vector.broadcast %230 : vector<8x1xf32> to vector<8x8xf32>
    %232 = arith.mulf %227, %231 : vector<8x8xf32>
    %cst_82 = arith.constant dense<0.000000e+00> : vector<8x16xf32>
    %233 = tpu.matmul %232, %216, %cst_82 {dimension_numbers = #tpu.dot_dimension_numbers<[1], [0], [0], [1], [0, 0, 1, 1], [], []>} : vector<8x8xf32>, vector<8x16xf32>, vector<8x16xf32> -> vector<8x16xf32>
    %234 = vector.extract_strided_slice %194 {offsets = [0, 0], sizes = [16, 32], strides = [1, 1]} : vector<32x32xf32> to vector<16x32xf32>
    %cst_83 = arith.constant dense<0.000000e+00> : vector<8x32xf32>
    %235 = tpu.matmul %233, %234, %cst_83 {dimension_numbers = #tpu.dot_dimension_numbers<[1], [0], [0], [1], [0, 0, 1, 1], [], []>} : vector<8x16xf32>, vector<16x32xf32>, vector<8x32xf32> -> vector<8x32xf32>
    %236 = arith.addf %213, %235 : vector<8x32xf32>
    %237 = vector.extract_strided_slice %211 {offsets = [0, 16], sizes = [8, 16], strides = [1, 1]} : vector<16x96xf32> to vector<8x16xf32>
    %238 = vector.extract_strided_slice %211 {offsets = [0, 48], sizes = [8, 16], strides = [1, 1]} : vector<16x96xf32> to vector<8x16xf32>
    %239 = vector.extract_strided_slice %211 {offsets = [0, 80], sizes = [8, 16], strides = [1, 1]} : vector<16x96xf32> to vector<8x16xf32>
    %240 = tpu.transpose %238, [1, 0] : vector<8x16xf32> -> vector<16x8xf32>
    %cst_84 = arith.constant dense<0.000000e+00> : vector<8x8xf32>
    %241 = tpu.matmul %237, %240, %cst_84 {dimension_numbers = #tpu.dot_dimension_numbers<[1], [0], [0], [1], [0, 0, 1, 1], [], []>} : vector<8x16xf32>, vector<16x8xf32>, vector<8x8xf32> -> vector<8x8xf32>
    %cst_85 = arith.constant 2.500000e-01 : f32
    %242 = vector.broadcast %cst_85 : f32 to vector<8x8xf32>
    %243 = arith.mulf %241, %242 : vector<8x8xf32>
    %244 = vector.broadcast %212 : vector<1x8xf32> to vector<8x8xf32>
    %245 = arith.addf %243, %244 : vector<8x8xf32>
    %cst_86 = arith.constant dense<0xFF800000> : vector<8xf32>
    %246 = vector.multi_reduction <maximumf>, %245, %cst_86 [1] : vector<8x8xf32> to vector<8xf32>
    %247 = vector.shape_cast %246 : vector<8xf32> to vector<8x1xf32>
    %248 = vector.broadcast %247 : vector<8x1xf32> to vector<8x8xf32>
    %249 = arith.subf %245, %248 : vector<8x8xf32>
    %250 = math.exp %249 : vector<8x8xf32>
    %cst_87 = arith.constant dense<0.000000e+00> : vector<8xf32>
    %251 = vector.multi_reduction <add>, %250, %cst_87 [1] : vector<8x8xf32> to vector<8xf32>
    %252 = vector.shape_cast %251 : vector<8xf32> to vector<8x1xf32>
    %253 = tpu.reciprocal %252 {approx = true} : vector<8x1xf32> -> vector<8x1xf32>
    %254 = vector.broadcast %253 : vector<8x1xf32> to vector<8x8xf32>
    %255 = arith.mulf %250, %254 : vector<8x8xf32>
    %cst_88 = arith.constant dense<0.000000e+00> : vector<8x16xf32>
    %256 = tpu.matmul %255, %239, %cst_88 {dimension_numbers = #tpu.dot_dimension_numbers<[1], [0], [0], [1], [0, 0, 1, 1], [], []>} : vector<8x8xf32>, vector<8x16xf32>, vector<8x16xf32> -> vector<8x16xf32>
    %257 = vector.extract_strided_slice %194 {offsets = [16, 0], sizes = [16, 32], strides = [1, 1]} : vector<32x32xf32> to vector<16x32xf32>
    %cst_89 = arith.constant dense<0.000000e+00> : vector<8x32xf32>
    %258 = tpu.matmul %256, %257, %cst_89 {dimension_numbers = #tpu.dot_dimension_numbers<[1], [0], [0], [1], [0, 0, 1, 1], [], []>} : vector<8x16xf32>, vector<16x32xf32>, vector<8x32xf32> -> vector<8x32xf32>
    %259 = arith.addf %236, %258 : vector<8x32xf32>
    %260 = vector.extract_strided_slice %5 {offsets = [1, 0], sizes = [1, 8], strides = [1, 1]} : vector<2x8xf32> to vector<1x8xf32>
    %cst_90 = arith.constant 0.000000e+00 : f32
    %261 = vector.broadcast %cst_90 : f32 to vector<8x32xf32>
    %262 = vector.extract_strided_slice %211 {offsets = [8, 0], sizes = [8, 16], strides = [1, 1]} : vector<16x96xf32> to vector<8x16xf32>
    %263 = vector.extract_strided_slice %211 {offsets = [8, 32], sizes = [8, 16], strides = [1, 1]} : vector<16x96xf32> to vector<8x16xf32>
    %264 = vector.extract_strided_slice %211 {offsets = [8, 64], sizes = [8, 16], strides = [1, 1]} : vector<16x96xf32> to vector<8x16xf32>
    %265 = tpu.transpose %263, [1, 0] : vector<8x16xf32> -> vector<16x8xf32>
    %cst_91 = arith.constant dense<0.000000e+00> : vector<8x8xf32>
    %266 = tpu.matmul %262, %265, %cst_91 {dimension_numbers = #tpu.dot_dimension_numbers<[1], [0], [0], [1], [0, 0, 1, 1], [], []>} : vector<8x16xf32>, vector<16x8xf32>, vector<8x8xf32> -> vector<8x8xf32>
    %cst_92 = arith.constant 2.500000e-01 : f32
    %267 = vector.broadcast %cst_92 : f32 to vector<8x8xf32>
    %268 = arith.mulf %266, %267 : vector<8x8xf32>
    %269 = vector.broadcast %260 : vector<1x8xf32> to vector<8x8xf32>
    %270 = arith.addf %268, %269 : vector<8x8xf32>
    %cst_93 = arith.constant dense<0xFF800000> : vector<8xf32>
    %271 = vector.multi_reduction <maximumf>, %270, %cst_93 [1] : vector<8x8xf32> to vector<8xf32>
    %272 = vector.shape_cast %271 : vector<8xf32> to vector<8x1xf32>
    %273 = vector.broadcast %272 : vector<8x1xf32> to vector<8x8xf32>
    %274 = arith.subf %270, %273 : vector<8x8xf32>
    %275 = math.exp %274 : vector<8x8xf32>
    %cst_94 = arith.constant dense<0.000000e+00> : vector<8xf32>
    %276 = vector.multi_reduction <add>, %275, %cst_94 [1] : vector<8x8xf32> to vector<8xf32>
    %277 = vector.shape_cast %276 : vector<8xf32> to vector<8x1xf32>
    %278 = tpu.reciprocal %277 {approx = true} : vector<8x1xf32> -> vector<8x1xf32>
    %279 = vector.broadcast %278 : vector<8x1xf32> to vector<8x8xf32>
    %280 = arith.mulf %275, %279 : vector<8x8xf32>
    %cst_95 = arith.constant dense<0.000000e+00> : vector<8x16xf32>
    %281 = tpu.matmul %280, %264, %cst_95 {dimension_numbers = #tpu.dot_dimension_numbers<[1], [0], [0], [1], [0, 0, 1, 1], [], []>} : vector<8x8xf32>, vector<8x16xf32>, vector<8x16xf32> -> vector<8x16xf32>
    %282 = vector.extract_strided_slice %194 {offsets = [0, 0], sizes = [16, 32], strides = [1, 1]} : vector<32x32xf32> to vector<16x32xf32>
    %cst_96 = arith.constant dense<0.000000e+00> : vector<8x32xf32>
    %283 = tpu.matmul %281, %282, %cst_96 {dimension_numbers = #tpu.dot_dimension_numbers<[1], [0], [0], [1], [0, 0, 1, 1], [], []>} : vector<8x16xf32>, vector<16x32xf32>, vector<8x32xf32> -> vector<8x32xf32>
    %284 = arith.addf %261, %283 : vector<8x32xf32>
    %285 = vector.extract_strided_slice %211 {offsets = [8, 16], sizes = [8, 16], strides = [1, 1]} : vector<16x96xf32> to vector<8x16xf32>
    %286 = vector.extract_strided_slice %211 {offsets = [8, 48], sizes = [8, 16], strides = [1, 1]} : vector<16x96xf32> to vector<8x16xf32>
    %287 = vector.extract_strided_slice %211 {offsets = [8, 80], sizes = [8, 16], strides = [1, 1]} : vector<16x96xf32> to vector<8x16xf32>
    %288 = tpu.transpose %286, [1, 0] : vector<8x16xf32> -> vector<16x8xf32>
    %cst_97 = arith.constant dense<0.000000e+00> : vector<8x8xf32>
    %289 = tpu.matmul %285, %288, %cst_97 {dimension_numbers = #tpu.dot_dimension_numbers<[1], [0], [0], [1], [0, 0, 1, 1], [], []>} : vector<8x16xf32>, vector<16x8xf32>, vector<8x8xf32> -> vector<8x8xf32>
    %cst_98 = arith.constant 2.500000e-01 : f32
    %290 = vector.broadcast %cst_98 : f32 to vector<8x8xf32>
    %291 = arith.mulf %289, %290 : vector<8x8xf32>
    %292 = vector.broadcast %260 : vector<1x8xf32> to vector<8x8xf32>
    %293 = arith.addf %291, %292 : vector<8x8xf32>
    %cst_99 = arith.constant dense<0xFF800000> : vector<8xf32>
    %294 = vector.multi_reduction <maximumf>, %293, %cst_99 [1] : vector<8x8xf32> to vector<8xf32>
    %295 = vector.shape_cast %294 : vector<8xf32> to vector<8x1xf32>
    %296 = vector.broadcast %295 : vector<8x1xf32> to vector<8x8xf32>
    %297 = arith.subf %293, %296 : vector<8x8xf32>
    %298 = math.exp %297 : vector<8x8xf32>
    %cst_100 = arith.constant dense<0.000000e+00> : vector<8xf32>
    %299 = vector.multi_reduction <add>, %298, %cst_100 [1] : vector<8x8xf32> to vector<8xf32>
    %300 = vector.shape_cast %299 : vector<8xf32> to vector<8x1xf32>
    %301 = tpu.reciprocal %300 {approx = true} : vector<8x1xf32> -> vector<8x1xf32>
    %302 = vector.broadcast %301 : vector<8x1xf32> to vector<8x8xf32>
    %303 = arith.mulf %298, %302 : vector<8x8xf32>
    %cst_101 = arith.constant dense<0.000000e+00> : vector<8x16xf32>
    %304 = tpu.matmul %303, %287, %cst_101 {dimension_numbers = #tpu.dot_dimension_numbers<[1], [0], [0], [1], [0, 0, 1, 1], [], []>} : vector<8x8xf32>, vector<8x16xf32>, vector<8x16xf32> -> vector<8x16xf32>
    %305 = vector.extract_strided_slice %194 {offsets = [16, 0], sizes = [16, 32], strides = [1, 1]} : vector<32x32xf32> to vector<16x32xf32>
    %cst_102 = arith.constant dense<0.000000e+00> : vector<8x32xf32>
    %306 = tpu.matmul %304, %305, %cst_102 {dimension_numbers = #tpu.dot_dimension_numbers<[1], [0], [0], [1], [0, 0, 1, 1], [], []>} : vector<8x16xf32>, vector<16x32xf32>, vector<8x32xf32> -> vector<8x32xf32>
    %307 = arith.addf %284, %306 : vector<8x32xf32>
    %308 = tpu.concatenate %259, %307 in 0 : vector<8x32xf32>, vector<8x32xf32> -> vector<16x32xf32>
    %309 = vector.broadcast %202 : vector<1x32xf32> to vector<16x32xf32>
    %310 = arith.addf %308, %309 : vector<16x32xf32>
    %311 = arith.addf %190, %310 : vector<16x32xf32>
    %cst_103 = arith.constant dense<0.000000e+00> : vector<16xf32>
    %312 = vector.multi_reduction <add>, %311, %cst_103 [1] : vector<16x32xf32> to vector<16xf32>
    %313 = vector.shape_cast %312 : vector<16xf32> to vector<16x1xf32>
    %cst_104 = arith.constant 3.200000e+01 : f32
    %314 = vector.broadcast %cst_104 : f32 to vector<16x1xf32>
    %315 = arith.divf %313, %314 : vector<16x1xf32>
    %316 = vector.broadcast %315 : vector<16x1xf32> to vector<16x32xf32>
    %317 = arith.subf %311, %316 : vector<16x32xf32>
    %318 = arith.mulf %317, %317 : vector<16x32xf32>
    %cst_105 = arith.constant dense<0.000000e+00> : vector<16xf32>
    %319 = vector.multi_reduction <add>, %318, %cst_105 [1] : vector<16x32xf32> to vector<16xf32>
    %320 = vector.shape_cast %319 : vector<16xf32> to vector<16x1xf32>
    %cst_106 = arith.constant 3.200000e+01 : f32
    %321 = vector.broadcast %cst_106 : f32 to vector<16x1xf32>
    %322 = arith.divf %320, %321 : vector<16x1xf32>
    %323 = vector.broadcast %315 : vector<16x1xf32> to vector<16x32xf32>
    %324 = arith.subf %311, %323 : vector<16x32xf32>
    %cst_107 = arith.constant 9.99999996E-13 : f32
    %325 = vector.broadcast %cst_107 : f32 to vector<16x1xf32>
    %326 = arith.addf %322, %325 : vector<16x1xf32>
    %327 = math.rsqrt %326 : vector<16x1xf32>
    %328 = vector.broadcast %327 : vector<16x1xf32> to vector<16x32xf32>
    %329 = arith.mulf %324, %328 : vector<16x32xf32>
    %330 = vector.broadcast %203 : vector<1x32xf32> to vector<16x32xf32>
    %331 = arith.mulf %329, %330 : vector<16x32xf32>
    %332 = vector.broadcast %204 : vector<1x32xf32> to vector<16x32xf32>
    %333 = arith.addf %331, %332 : vector<16x32xf32>
    %cst_108 = arith.constant dense<0.000000e+00> : vector<16x64xf32>
    %334 = tpu.matmul %333, %196, %cst_108 {dimension_numbers = #tpu.dot_dimension_numbers<[1], [0], [0], [1], [0, 0, 1, 1], [], []>} : vector<16x32xf32>, vector<32x64xf32>, vector<16x64xf32> -> vector<16x64xf32>
    %335 = vector.broadcast %205 : vector<1x64xf32> to vector<16x64xf32>
    %336 = arith.addf %334, %335 : vector<16x64xf32>
    %337 = arith.mulf %336, %336 : vector<16x64xf32>
    %338 = arith.mulf %336, %337 : vector<16x64xf32>
    %cst_109 = arith.constant 4.471500e-02 : f32
    %339 = vector.broadcast %cst_109 : f32 to vector<16x64xf32>
    %340 = arith.mulf %339, %338 : vector<16x64xf32>
    %341 = arith.addf %336, %340 : vector<16x64xf32>
    %cst_110 = arith.constant 0.797884583 : f32
    %342 = vector.broadcast %cst_110 : f32 to vector<16x64xf32>
    %343 = arith.mulf %342, %341 : vector<16x64xf32>
    %344 = math.tanh %343 : vector<16x64xf32>
    %cst_111 = arith.constant 1.000000e+00 : f32
    %345 = vector.broadcast %cst_111 : f32 to vector<16x64xf32>
    %346 = arith.addf %345, %344 : vector<16x64xf32>
    %cst_112 = arith.constant 5.000000e-01 : f32
    %347 = vector.broadcast %cst_112 : f32 to vector<16x64xf32>
    %348 = arith.mulf %347, %346 : vector<16x64xf32>
    %349 = arith.mulf %336, %348 : vector<16x64xf32>
    %cst_113 = arith.constant dense<0.000000e+00> : vector<16x32xf32>
    %350 = tpu.matmul %349, %198, %cst_113 {dimension_numbers = #tpu.dot_dimension_numbers<[1], [0], [0], [1], [0, 0, 1, 1], [], []>} : vector<16x64xf32>, vector<64x32xf32>, vector<16x32xf32> -> vector<16x32xf32>
    %351 = vector.broadcast %206 : vector<1x32xf32> to vector<16x32xf32>
    %352 = arith.addf %350, %351 : vector<16x32xf32>
    %353 = arith.addf %333, %352 : vector<16x32xf32>
    %cst_114 = arith.constant dense<0.000000e+00> : vector<16xf32>
    %354 = vector.multi_reduction <add>, %353, %cst_114 [1] : vector<16x32xf32> to vector<16xf32>
    %355 = vector.shape_cast %354 : vector<16xf32> to vector<16x1xf32>
    %cst_115 = arith.constant 3.200000e+01 : f32
    %356 = vector.broadcast %cst_115 : f32 to vector<16x1xf32>
    %357 = arith.divf %355, %356 : vector<16x1xf32>
    %358 = vector.broadcast %357 : vector<16x1xf32> to vector<16x32xf32>
    %359 = arith.subf %353, %358 : vector<16x32xf32>
    %360 = arith.mulf %359, %359 : vector<16x32xf32>
    %cst_116 = arith.constant dense<0.000000e+00> : vector<16xf32>
    %361 = vector.multi_reduction <add>, %360, %cst_116 [1] : vector<16x32xf32> to vector<16xf32>
    %362 = vector.shape_cast %361 : vector<16xf32> to vector<16x1xf32>
    %cst_117 = arith.constant 3.200000e+01 : f32
    %363 = vector.broadcast %cst_117 : f32 to vector<16x1xf32>
    %364 = arith.divf %362, %363 : vector<16x1xf32>
    %365 = vector.broadcast %357 : vector<16x1xf32> to vector<16x32xf32>
    %366 = arith.subf %353, %365 : vector<16x32xf32>
    %cst_118 = arith.constant 9.99999996E-13 : f32
    %367 = vector.broadcast %cst_118 : f32 to vector<16x1xf32>
    %368 = arith.addf %364, %367 : vector<16x1xf32>
    %369 = math.rsqrt %368 : vector<16x1xf32>
    %370 = vector.broadcast %369 : vector<16x1xf32> to vector<16x32xf32>
    %371 = arith.mulf %366, %370 : vector<16x32xf32>
    %372 = vector.broadcast %207 : vector<1x32xf32> to vector<16x32xf32>
    %373 = arith.mulf %371, %372 : vector<16x32xf32>
    %374 = vector.broadcast %208 : vector<1x32xf32> to vector<16x32xf32>
    %375 = arith.addf %373, %374 : vector<16x32xf32>
    %376 = vector.extract_strided_slice %375 {offsets = [0, 0], sizes = [1, 32], strides = [1, 1]} : vector<16x32xf32> to vector<1x32xf32>
    %377 = vector.extract_strided_slice %375 {offsets = [8, 0], sizes = [1, 32], strides = [1, 1]} : vector<16x32xf32> to vector<1x32xf32>
    %378 = tpu.concatenate %376, %377 in 0 : vector<1x32xf32>, vector<1x32xf32> -> vector<2x32xf32>
    %c0_119 = arith.constant 0 : index
    %c0_120 = arith.constant 0 : index
    %379 = vector.load %arg2[%c0_119, %c0_120] : memref<2x4xf32, #tpu.memory_space<vmem>>, vector<2x4xf32>
    %c0_121 = arith.constant 0 : index
    %c0_122 = arith.constant 0 : index
    %380 = vector.load %arg8[%c0_121, %c0_122] : memref<4x64xf32, #tpu.memory_space<vmem>>, vector<4x64xf32>
    %cst_123 = arith.constant dense<0.000000e+00> : vector<2x64xf32>
    %381 = tpu.matmul %379, %380, %cst_123 {dimension_numbers = #tpu.dot_dimension_numbers<[1], [0], [0], [1], [0, 0, 1, 1], [], []>} : vector<2x4xf32>, vector<4x64xf32>, vector<2x64xf32> -> vector<2x64xf32>
    %c0_124 = arith.constant 0 : index
    %c0_125 = arith.constant 0 : index
    %382 = vector.load %arg9[%c0_124, %c0_125] : memref<1x64xf32, #tpu.memory_space<vmem>>, vector<1x64xf32>
    %383 = vector.broadcast %382 : vector<1x64xf32> to vector<2x64xf32>
    %384 = arith.addf %381, %383 : vector<2x64xf32>
    %c0_126 = arith.constant 0 : index
    %c0_127 = arith.constant 0 : index
    %385 = vector.load %arg10[%c0_126, %c0_127] : memref<32x3xf32, #tpu.memory_space<vmem>>, vector<32x3xf32>
    %cst_128 = arith.constant dense<0.000000e+00> : vector<2x3xf32>
    %386 = tpu.matmul %378, %385, %cst_128 {dimension_numbers = #tpu.dot_dimension_numbers<[1], [0], [0], [1], [0, 0, 1, 1], [], []>} : vector<2x32xf32>, vector<32x3xf32>, vector<2x3xf32> -> vector<2x3xf32>
    %c0_129 = arith.constant 0 : index
    %c0_130 = arith.constant 0 : index
    %387 = vector.load %arg11[%c0_129, %c0_130] : memref<64x3xf32, #tpu.memory_space<vmem>>, vector<64x3xf32>
    %cst_131 = arith.constant dense<0.000000e+00> : vector<2x3xf32>
    %388 = tpu.matmul %384, %387, %cst_131 {dimension_numbers = #tpu.dot_dimension_numbers<[1], [0], [0], [1], [0, 0, 1, 1], [], []>} : vector<2x64xf32>, vector<64x3xf32>, vector<2x3xf32> -> vector<2x3xf32>
    %389 = arith.addf %386, %388 : vector<2x3xf32>
    %c0_132 = arith.constant 0 : index
    %c0_133 = arith.constant 0 : index
    %390 = vector.load %arg12[%c0_132, %c0_133] : memref<1x3xf32, #tpu.memory_space<vmem>>, vector<1x3xf32>
    %391 = vector.broadcast %390 : vector<1x3xf32> to vector<2x3xf32>
    %392 = arith.addf %389, %391 : vector<2x3xf32>
    %c0_134 = arith.constant 0 : index
    %c0_135 = arith.constant 0 : index
    %393 = vector.load %arg13[%c0_134, %c0_135] : memref<2x3xf32, #tpu.memory_space<vmem>>, vector<2x3xf32>
    tpu.vector_store %arg13[%c0_134, %c0_135], %392 {strides = array<i32>} : memref<2x3xf32, #tpu.memory_space<vmem>>, vector<2x3xf32>,
    return
  }
}

</mosaic_0001>

<llo_original>
// kernel: tpu_custom_call.1
$region0: #{tpu_custom_call.1}
  #allocation0 [shape = 'u32[]', space=smem, size = 0x4, offset = 0x4, fixed_abs, tag = 'smem constant byte address 0x4 - core index']
  #allocation1 [shape = 'u32[144,128]{1,0:T(1,128)}', space=vmem, size = 0x12000, scoped, tag = 'internal scratch']
  %s0 = inlined_call_operand.vmem [shape: f32[16,32], index: 0, kind: input, shape index: {}]
  %s1 = inlined_call_operand.vmem [shape: f32[2,8], index: 1, kind: input, shape index: {}]
  %s2 = inlined_call_operand.vmem [shape: f32[2,4], index: 2, kind: input, shape index: {}]
  %s3 = inlined_call_operand.vmem [shape: f32[2,32,96], index: 3, kind: input, shape index: {}]
  %s4 = inlined_call_operand.vmem [shape: f32[2,32,32], index: 4, kind: input, shape index: {}]
  %s5 = inlined_call_operand.vmem [shape: f32[2,32,64], index: 5, kind: input, shape index: {}]
  %s6 = inlined_call_operand.vmem [shape: f32[2,64,32], index: 6, kind: input, shape index: {}]
  %s7 = inlined_call_operand.vmem [shape: f32[2,8,96], index: 7, kind: input, shape index: {}]
  %s8 = inlined_call_operand.vmem [shape: f32[4,64], index: 8, kind: input, shape index: {}]
  %s9 = inlined_call_operand.vmem [shape: f32[1,64], index: 9, kind: input, shape index: {}]
  %s10 = inlined_call_operand.vmem [shape: f32[32,3], index: 10, kind: input, shape index: {}]
  %s11 = inlined_call_operand.vmem [shape: f32[64,3], index: 11, kind: input, shape index: {}]
  %s12 = inlined_call_operand.vmem [shape: f32[1,3], index: 12, kind: input, shape index: {}]
  %s13 = inlined_call_operand.hbm [shape: f32[2,3], index: 13, kind: output, shape index: {}]
  %s14 = sld [smem:[#allocation0]]
  $region62: #{tpu_custom_call.1} parent=0
    _
  %s16 = ssub.s32 1, %s14
  %s17 = scalar_select 0, %s16, %s14
  $region1: #{tpu_custom_call.1} parent=0
    #allocation2 [shape = 'u8[1024]{0}', space=vmem, size = 0x400, scoped, tag = 'output window, operand 0, single buffered']
    #allocation3 [shape = 's32[1]{0}', space=sflag, size = 0x4, scoped, tag = 'scoped memory for tpu_custom_call.1']
    %18 = vsyncpa [#allocation3], 0
    // Predicated region
    $region2: #{tpu_custom_call.1} parent=1 // pred_check
      _
    $region3: #{tpu_custom_call.1} parent=1 // pred_check_branch
      %20 = sbr.rel (0) target = $region5
    $region4: #{tpu_custom_call.1} parent=1 // pred_region
      _
    $region5: #{tpu_custom_call.1} parent=1 // pred_fallthru
      _
    // Predicated region
    $region6: #{tpu_custom_call.1} parent=1 // pred_check
      _
    $region7: #{tpu_custom_call.1} parent=1 // pred_check_branch
      %22 = sbr.rel (0) target = $region9
    $region8: #{tpu_custom_call.1} parent=1 // pred_region
      _
    $region9: #{tpu_custom_call.1} parent=1 // pred_fallthru
      _
    // Predicated region
    $region10: #{tpu_custom_call.1} parent=1 // pred_check
      _
    $region11: #{tpu_custom_call.1} parent=1 // pred_check_branch
      %24 = sbr.rel (0) target = $region13
    $region12: #{tpu_custom_call.1} parent=1 // pred_region
      _
    $region13: #{tpu_custom_call.1} parent=1 // pred_fallthru
      _
    // Predicated region
    $region14: #{tpu_custom_call.1} parent=1 // pred_check
      _
    $region15: #{tpu_custom_call.1} parent=1 // pred_check_branch
      %26 = sbr.rel (0) target = $region17
    $region16: #{tpu_custom_call.1} parent=1 // pred_region
      _
    $region17: #{tpu_custom_call.1} parent=1 // pred_fallthru
      _
    // Predicated region
    $region18: #{tpu_custom_call.1} parent=1 // pred_check
      _
    $region19: #{tpu_custom_call.1} parent=1 // pred_check_branch
      %28 = sbr.rel (0) target = $region21
    $region20: #{tpu_custom_call.1} parent=1 // pred_region
      _
    $region21: #{tpu_custom_call.1} parent=1 // pred_fallthru
      _
    // Predicated region
    $region22: #{tpu_custom_call.1} parent=1 // pred_check
      _
    $region23: #{tpu_custom_call.1} parent=1 // pred_check_branch
      %30 = sbr.rel (0) target = $region25
    $region24: #{tpu_custom_call.1} parent=1 // pred_region
      _
    $region25: #{tpu_custom_call.1} parent=1 // pred_fallthru
      _
    // Predicated region
    $region26: #{tpu_custom_call.1} parent=1 // pred_check
      _
    $region27: #{tpu_custom_call.1} parent=1 // pred_check_branch
      %32 = sbr.rel (0) target = $region29
    $region28: #{tpu_custom_call.1} parent=1 // pred_region
      _
    $region29: #{tpu_custom_call.1} parent=1 // pred_fallthru
      _
    // Predicated region
    $region30: #{tpu_custom_call.1} parent=1 // pred_check
      _
    $region31: #{tpu_custom_call.1} parent=1 // pred_check_branch
      %34 = sbr.rel (0) target = $region33
    $region32: #{tpu_custom_call.1} parent=1 // pred_region
      _
    $region33: #{tpu_custom_call.1} parent=1 // pred_fallthru
      _
    // Predicated region
    $region34: #{tpu_custom_call.1} parent=1 // pred_check
      _
    $region35: #{tpu_custom_call.1} parent=1 // pred_check_branch
      %36 = sbr.rel (0) target = $region37
    $region36: #{tpu_custom_call.1} parent=1 // pred_region
      _
    $region37: #{tpu_custom_call.1} parent=1 // pred_fallthru
      _
    // Predicated region
    $region38: #{tpu_custom_call.1} parent=1 // pred_check
      _
    $region39: #{tpu_custom_call.1} parent=1 // pred_check_branch
      %38 = sbr.rel (0) target = $region41
    $region40: #{tpu_custom_call.1} parent=1 // pred_region
      _
    $region41: #{tpu_custom_call.1} parent=1 // pred_fallthru
      _
    // Predicated region
    $region42: #{tpu_custom_call.1} parent=1 // pred_check
      _
    $region43: #{tpu_custom_call.1} parent=1 // pred_check_branch
      %40 = sbr.rel (0) target = $region45
    $region44: #{tpu_custom_call.1} parent=1 // pred_region
      _
    $region45: #{tpu_custom_call.1} parent=1 // pred_fallthru
      _
    // Predicated region
    $region46: #{tpu_custom_call.1} parent=1 // pred_check
      _
    $region47: #{tpu_custom_call.1} parent=1 // pred_check_branch
      %42 = sbr.rel (0) target = $region49
    $region48: #{tpu_custom_call.1} parent=1 // pred_region
      _
    $region49: #{tpu_custom_call.1} parent=1 // pred_fallthru
      _
    // Predicated region
    $region50: #{tpu_custom_call.1} parent=1 // pred_check
      _
    $region51: #{tpu_custom_call.1} parent=1 // pred_check_branch
      %44 = sbr.rel (0) target = $region53
    $region52: #{tpu_custom_call.1} parent=1 // pred_region
      _
    $region53: #{tpu_custom_call.1} parent=1 // pred_fallthru
      _
    %v45 = vld [vmem:[%s0] sm:$0xff]
    %v46 = vld [vmem:[%s0 + $0x8] sm:$0xff]
    %v47 = vld [vmem:[%s1] sm:$0x3]
    %v48 = vsub.f32 %v47, 1.0
    %v49 = vmul.f32 %v48, 1e+09
    %v50 = vld [vmem:[%s3] sm:$0xff]
    %v51 = vld [vmem:[%s3 + $0x8] sm:$0xff]
    %v52 = vld [vmem:[%s3 + $0x10] sm:$0xff]
    %v53 = vld [vmem:[%s3 + $0x18] sm:$0xff]
    %v54 = vld [vmem:[%s4] sm:$0xff]
    %v55 = vld [vmem:[%s4 + $0x8] sm:$0xff]
    %v56 = vld [vmem:[%s4 + $0x10] sm:$0xff]
    %v57 = vld [vmem:[%s4 + $0x18] sm:$0xff]
    %v58 = vld [vmem:[%s5] sm:$0xff]
    %v59 = vld [vmem:[%s5 + $0x8] sm:$0xff]
    %v60 = vld [vmem:[%s5 + $0x10] sm:$0xff]
    %v61 = vld [vmem:[%s5 + $0x18] sm:$0xff]
    %v62 = vld [vmem:[%s6] sm:$0xff]
    %v63 = vld [vmem:[%s6 + $0x8] sm:$0xff]
    %v64 = vld [vmem:[%s6 + $0x10] sm:$0xff]
    %v65 = vld [vmem:[%s6 + $0x18] sm:$0xff]
    %v66 = vld [vmem:[%s6 + $0x20] sm:$0xff]
    %v67 = vld [vmem:[%s6 + $0x28] sm:$0xff]
    %v68 = vld [vmem:[%s6 + $0x30] sm:$0xff]
    %v69 = vld [vmem:[%s6 + $0x38] sm:$0xff]
    %v70 = vld [vmem:[%s7] sm:$0xff]
    %v71 = vlaneseq
    %v72 = vshrl.u32 %v71, 7
    %v73 = vsub.s32 0, %v72
    %v74 = vrot.slane %v70, %v73
    %vm75 = vcmask 261120
    %v77 = vsel %vm75, %v45, 0
    %v80 = vsel %vm75, %v46, 0
    %82 = vmatprep.subr.mxu0 0.0
    %83 = vmatpush1.msra.mxu0 %v50
    %84 = vmatprep.subr.mxu0 0.0
    %85 = vmatpush1.msra.mxu0 %v51
    %86 = vmatprep.subr.mxu0 0.0
    %87 = vmatpush1.msra.mxu0 %v52
    %88 = vmatprep.subr.mxu0 0.0
    %89 = vmatpush1.msra.mxu0 %v53
    %90 = vmatprep.subr.mxu0 0.0
    %91 = vmatpush1.msra.mxu0 0.0
    %92 = vmatprep.subr.mxu0 0.0
    %93 = vmatpush1.msra.mxu0 0.0
    %94 = vmatprep.subr.mxu0 0.0
    %95 = vmatpush1.msra.mxu0 0.0
    %96 = vmatprep.subr.mxu0 0.0
    %97 = vmatpush1.msra.mxu0 0.0
    %98 = vmatprep.subr.mxu0 0.0
    %99 = vmatpush1.msra.mxu0 0.0
    %100 = vmatprep.subr.mxu0 0.0
    %101 = vmatpush1.msra.mxu0 0.0
    %102 = vmatprep.subr.mxu0 0.0
    %103 = vmatpush1.msra.mxu0 0.0
    %104 = vmatprep.subr.mxu0 0.0
    %105 = vmatpush1.msra.mxu0 0.0
    %106 = vmatprep.subr.mxu0 0.0
    %107 = vmatpush1.msra.mxu0 0.0
    %108 = vmatprep.subr.mxu0 0.0
    %109 = vmatpush1.msra.mxu0 0.0
    %110 = vmatprep.subr.mxu0 0.0
    %111 = vmatpush1.msra.mxu0 0.0
    %112 = vmatprep.subr.mxu0 0.0
    %113 = vmatpush1.msra.mxu0 0.0
    %114 = vmatprep.subr.mxu0 0.0
    %115 = vmatpush1.msra.mxu0 0.0
    %116 = vmatprep.subr.mxu0 0.0
    %117 = vmatpush1.msra.mxu0 0.0
    %118 = vmatprep.subr.mxu0 0.0
    %119 = vmatpush1.msra.mxu0 0.0
    %120 = vmatprep.subr.mxu0 0.0
    %121 = vmatpush1.msra.mxu0 0.0
    %122 = vmatprep.subr.mxu0 0.0
    %123 = vmatpush1.msra.mxu0 0.0
    %124 = vmatprep.subr.mxu0 0.0
    %125 = vmatpush1.msra.mxu0 0.0
    %126 = vmatprep.subr.mxu0 0.0
    %127 = vmatpush1.msra.mxu0 0.0
    %128 = vmatprep.subr.mxu0 0.0
    %129 = vmatpush1.msra.mxu0 0.0
    %130 = vmatprep.subr.mxu0 0.0
    %131 = vmatpush1.msra.mxu0 0.0
    %132 = vmatprep.subr.mxu0 0.0
    %133 = vmatpush1.msra.mxu0 0.0
    %134 = vmatprep.subr.mxu0 0.0
    %135 = vmatpush1.msra.mxu0 0.0
    %136 = vmatprep.subr.mxu0 0.0
    %137 = vmatpush1.msra.mxu0 0.0
    %138 = vmatprep.subr.mxu0 0.0
    %139 = vmatpush1.msra.mxu0 0.0
    %140 = vmatprep.subr.mxu0 0.0
    %141 = vmatpush1.msra.mxu0 0.0
    %142 = vmatprep.subr.mxu0 0.0
    %143 = vmatpush1.msra.mxu0 0.0
    %144 = vmatprep.subr.mxu0 0.0
    %145 = vmatpush1.msra.mxu0 0.0
    %146 = vmatprep.mubr.f32.mxu0 0.0
    %147 = vmatmul.mubr.f32.gmra.mrb[0].mxu0 %v77
    %v148 = vpop.f32.mrb[0].mxu0
    %v149 = vadd.f32 %v74, %v148
    %v150 = vpop.f32.mrb[0].mxu0
    %151 = vmatprep.mubr.f32.mxu0 0.0
    %152 = vmatmul.mubr.f32.gmra.mrb[0].mxu0 %v80
    %v153 = vpop.f32.mrb[0].mxu0
    %v154 = vadd.f32 %v74, %v153
    %v155 = vpop.f32.mrb[0].mxu0
    %156 = vdwg.mxu0
    %158 = vrot.lane.b32.xlu0 %v149, 96
    %v159 = vpop.permute.xlu0 %158
    %vm160 = vcmask 130048
    %v161 = vsel %vm160, %v149, 0
    %v163 = vsel %vm160, %v159, 0
    %165 = vmatprep.subr.mxu0 0.0
    %166 = vmatpush1.xpose.msra.mxu0 %v163
    %167 = vmatprep.subr.mxu0 0.0
    %168 = vmatpush1.xpose.msra.mxu0 0.0
    %169 = vmatprep.subr.mxu0 0.0
    %170 = vmatpush1.xpose.msra.mxu0 0.0
    %171 = vmatprep.subr.mxu0 0.0
    %172 = vmatpush1.xpose.msra.mxu0 0.0
    %173 = vmatprep.subr.mxu0 0.0
    %174 = vmatpush1.xpose.msra.mxu0 0.0
    %175 = vmatprep.subr.mxu0 0.0
    %176 = vmatpush1.xpose.msra.mxu0 0.0
    %177 = vmatprep.subr.mxu0 0.0
    %178 = vmatpush1.xpose.msra.mxu0 0.0
    %179 = vmatprep.subr.mxu0 0.0
    %180 = vmatpush1.xpose.msra.mxu0 0.0
    %181 = vmatprep.subr.mxu0 0.0
    %182 = vmatpush1.xpose.msra.mxu0 0.0
    %183 = vmatprep.subr.mxu0 0.0
    %184 = vmatpush1.xpose.msra.mxu0 0.0
    %185 = vmatprep.subr.mxu0 0.0
    %186 = vmatpush1.xpose.msra.mxu0 0.0
    %187 = vmatprep.subr.mxu0 0.0
    %188 = vmatpush1.xpose.msra.mxu0 0.0
    %189 = vmatprep.subr.mxu0 0.0
    %190 = vmatpush1.xpose.msra.mxu0 0.0
    %191 = vmatprep.subr.mxu0 0.0
    %192 = vmatpush1.xpose.msra.mxu0 0.0
    %193 = vmatprep.subr.mxu0 0.0
    %194 = vmatpush1.xpose.msra.mxu0 0.0
    %195 = vmatprep.subr.mxu0 0.0
    %196 = vmatpush1.xpose.msra.mxu0 0.0
    %197 = vmatprep.subr.mxu0 0.0
    %198 = vmatpush1.xpose.msra.mxu0 0.0
    %199 = vmatprep.subr.mxu0 0.0
    %200 = vmatpush1.xpose.msra.mxu0 0.0
    %201 = vmatprep.subr.mxu0 0.0
    %202 = vmatpush1.xpose.msra.mxu0 0.0
    %203 = vmatprep.subr.mxu0 0.0
    %204 = vmatpush1.xpose.msra.mxu0 0.0
    %205 = vmatprep.subr.mxu0 0.0
    %206 = vmatpush1.xpose.msra.mxu0 0.0
    %207 = vmatprep.subr.mxu0 0.0
    %208 = vmatpush1.xpose.msra.mxu0 0.0
    %209 = vmatprep.subr.mxu0 0.0
    %210 = vmatpush1.xpose.msra.mxu0 0.0
    %211 = vmatprep.subr.mxu0 0.0
    %212 = vmatpush1.xpose.msra.mxu0 0.0
    %213 = vmatprep.subr.mxu0 0.0
    %214 = vmatpush1.xpose.msra.mxu0 0.0
    %215 = vmatprep.subr.mxu0 0.0
    %216 = vmatpush1.xpose.msra.mxu0 0.0
    %217 = vmatprep.subr.mxu0 0.0
    %218 = vmatpush1.xpose.msra.mxu0 0.0
    %219 = vmatprep.subr.mxu0 0.0
    %220 = vmatpush1.xpose.msra.mxu0 0.0
    %221 = vmatprep.subr.mxu0 0.0
    %222 = vmatpush1.xpose.msra.mxu0 0.0
    %223 = vmatprep.subr.mxu0 0.0
    %224 = vmatpush1.xpose.msra.mxu0 0.0
    %225 = vmatprep.subr.mxu0 0.0
    %226 = vmatpush1.xpose.msra.mxu0 0.0
    %227 = vmatprep.subr.mxu0 0.0
    %228 = vmatpush1.xpose.msra.mxu0 0.0
    %229 = vmatprep.mubr.f32.mxu0 0.0
    %230 = vmatmul.mubr.f32.gmra.mrb[0].mxu0 %v161
    %v231 = vpop.f32.mrb[0].mxu0
    %v232 = vadd.f32 0.0, %v231
    %v233 = vpop.f32.mrb[0].mxu0
    %234 = vdwg.mxu0
    %v235 = vmul.f32 %v232, 0.25
    %v236 = vlaneseq
    %v237 = vshrl.u32 %v236, 7
    %v238 = vsub.s32 0, %v237
    %v239 = vrot.slane %v49, %v238
    %v240 = vadd.f32 %v235, %v239
    %vm241 = vcmask 64512
    %v242 = vsel %vm241, %v240, -inf
    %243 = vmax.xlane.f32.xlu0 %v242
    %v244 = vpop.xlane.xlu0 %243
    %v245 = vsub.f32 %v240, %v244
    %v246 = vmul.f32 %v245, 1.442695
    %v247 = vpow.pop %v246
    %v248 = vsel %vm241, %v247, 0.0
    %249 = vadd.xlane.f32.xlu0 %v248
    %v250 = vpop.xlane.xlu0 %249
    %v251 = vrcp.pop %v250
    %v252 = vmul.f32 %v247, %v251
    %253 = vrot.lane.b32.xlu0 %v149, 64
    %v254 = vpop.permute.xlu0 %253
    %v257 = vsel %vm241, %v252, 0
    %259 = vmatprep.subr.mxu0 0.0
    %260 = vmatpush1.msra.mxu0 %v254
    %261 = vmatprep.subr.mxu0 0.0
    %262 = vmatpush1.msra.mxu0 0.0
    %263 = vmatprep.subr.mxu0 0.0
    %264 = vmatpush1.msra.mxu0 0.0
    %265 = vmatprep.subr.mxu0 0.0
    %266 = vmatpush1.msra.mxu0 0.0
    %267 = vmatprep.subr.mxu0 0.0
    %268 = vmatpush1.msra.mxu0 0.0
    %269 = vmatprep.subr.mxu0 0.0
    %270 = vmatpush1.msra.mxu0 0.0
    %271 = vmatprep.subr.mxu0 0.0
    %272 = vmatpush1.msra.mxu0 0.0
    %273 = vmatprep.subr.mxu0 0.0
    %274 = vmatpush1.msra.mxu0 0.0
    %275 = vmatprep.subr.mxu0 0.0
    %276 = vmatpush1.msra.mxu0 0.0
    %277 = vmatprep.subr.mxu0 0.0
    %278 = vmatpush1.msra.mxu0 0.0
    %279 = vmatprep.subr.mxu0 0.0
    %280 = vmatpush1.msra.mxu0 0.0
    %281 = vmatprep.subr.mxu0 0.0
    %282 = vmatpush1.msra.mxu0 0.0
    %283 = vmatprep.subr.mxu0 0.0
    %284 = vmatpush1.msra.mxu0 0.0
    %285 = vmatprep.subr.mxu0 0.0
    %286 = vmatpush1.msra.mxu0 0.0
    %287 = vmatprep.subr.mxu0 0.0
    %288 = vmatpush1.msra.mxu0 0.0
    %289 = vmatprep.subr.mxu0 0.0
    %290 = vmatpush1.msra.mxu0 0.0
    %291 = vmatprep.subr.mxu0 0.0
    %292 = vmatpush1.msra.mxu0 0.0
    %293 = vmatprep.subr.mxu0 0.0
    %294 = vmatpush1.msra.mxu0 0.0
    %295 = vmatprep.subr.mxu0 0.0
    %296 = vmatpush1.msra.mxu0 0.0
    %297 = vmatprep.subr.mxu0 0.0
    %298 = vmatpush1.msra.mxu0 0.0
    %299 = vmatprep.subr.mxu0 0.0
    %300 = vmatpush1.msra.mxu0 0.0
    %301 = vmatprep.subr.mxu0 0.0
    %302 = vmatpush1.msra.mxu0 0.0
    %303 = vmatprep.subr.mxu0 0.0
    %304 = vmatpush1.msra.mxu0 0.0
    %305 = vmatprep.subr.mxu0 0.0
    %306 = vmatpush1.msra.mxu0 0.0
    %307 = vmatprep.subr.mxu0 0.0
    %308 = vmatpush1.msra.mxu0 0.0
    %309 = vmatprep.subr.mxu0 0.0
    %310 = vmatpush1.msra.mxu0 0.0
    %311 = vmatprep.subr.mxu0 0.0
    %312 = vmatpush1.msra.mxu0 0.0
    %313 = vmatprep.subr.mxu0 0.0
    %314 = vmatpush1.msra.mxu0 0.0
    %315 = vmatprep.subr.mxu0 0.0
    %316 = vmatpush1.msra.mxu0 0.0
    %317 = vmatprep.subr.mxu0 0.0
    %318 = vmatpush1.msra.mxu0 0.0
    %319 = vmatprep.subr.mxu0 0.0
    %320 = vmatpush1.msra.mxu0 0.0
    %321 = vmatprep.subr.mxu0 0.0
    %322 = vmatpush1.msra.mxu0 0.0
    %323 = vmatprep.mubr.f32.mxu0 0.0
    %324 = vmatmul.mubr.f32.gmra.mrb[0].mxu0 %v257
    %v325 = vpop.f32.mrb[0].mxu0
    %v326 = vadd.f32 0.0, %v325
    %v327 = vpop.f32.mrb[0].mxu0
    %328 = vdwg.mxu0
    %329 = vrot.lane.b32.xlu0 %v149, 112
    %v330 = vpop.permute.xlu0 %329
    %331 = vrot.lane.b32.xlu0 %v149, 80
    %v332 = vpop.permute.xlu0 %331
    %v333 = vsel %vm160, %v330, 0
    %v335 = vsel %vm160, %v332, 0
    %337 = vmatprep.subr.mxu0 0.0
    %338 = vmatpush1.xpose.msra.mxu0 %v335
    %339 = vmatprep.subr.mxu0 0.0
    %340 = vmatpush1.xpose.msra.mxu0 0.0
    %341 = vmatprep.subr.mxu0 0.0
    %342 = vmatpush1.xpose.msra.mxu0 0.0
    %343 = vmatprep.subr.mxu0 0.0
    %344 = vmatpush1.xpose.msra.mxu0 0.0
    %345 = vmatprep.subr.mxu0 0.0
    %346 = vmatpush1.xpose.msra.mxu0 0.0
    %347 = vmatprep.subr.mxu0 0.0
    %348 = vmatpush1.xpose.msra.mxu0 0.0
    %349 = vmatprep.subr.mxu0 0.0
    %350 = vmatpush1.xpose.msra.mxu0 0.0
    %351 = vmatprep.subr.mxu0 0.0
    %352 = vmatpush1.xpose.msra.mxu0 0.0
    %353 = vmatprep.subr.mxu0 0.0
    %354 = vmatpush1.xpose.msra.mxu0 0.0
    %355 = vmatprep.subr.mxu0 0.0
    %356 = vmatpush1.xpose.msra.mxu0 0.0
    %357 = vmatprep.subr.mxu0 0.0
    %358 = vmatpush1.xpose.msra.mxu0 0.0
    %359 = vmatprep.subr.mxu0 0.0
    %360 = vmatpush1.xpose.msra.mxu0 0.0
    %361 = vmatprep.subr.mxu0 0.0
    %362 = vmatpush1.xpose.msra.mxu0 0.0
    %363 = vmatprep.subr.mxu0 0.0
    %364 = vmatpush1.xpose.msra.mxu0 0.0
    %365 = vmatprep.subr.mxu0 0.0
    %366 = vmatpush1.xpose.msra.mxu0 0.0
    %367 = vmatprep.subr.mxu0 0.0
    %368 = vmatpush1.xpose.msra.mxu0 0.0
    %369 = vmatprep.subr.mxu0 0.0
    %370 = vmatpush1.xpose.msra.mxu0 0.0
    %371 = vmatprep.subr.mxu0 0.0
    %372 = vmatpush1.xpose.msra.mxu0 0.0
    %373 = vmatprep.subr.mxu0 0.0
    %374 = vmatpush1.xpose.msra.mxu0 0.0
    %375 = vmatprep.subr.mxu0 0.0
    %376 = vmatpush1.xpose.msra.mxu0 0.0
    %377 = vmatprep.subr.mxu0 0.0
    %378 = vmatpush1.xpose.msra.mxu0 0.0
    %379 = vmatprep.subr.mxu0 0.0
    %380 = vmatpush1.xpose.msra.mxu0 0.0
    %381 = vmatprep.subr.mxu0 0.0
    %382 = vmatpush1.xpose.msra.mxu0 0.0
    %383 = vmatprep.subr.mxu0 0.0
    %384 = vmatpush1.xpose.msra.mxu0 0.0
    %385 = vmatprep.subr.mxu0 0.0
    %386 = vmatpush1.xpose.msra.mxu0 0.0
    %387 = vmatprep.subr.mxu0 0.0
    %388 = vmatpush1.xpose.msra.mxu0 0.0
    %389 = vmatprep.subr.mxu0 0.0
    %390 = vmatpush1.xpose.msra.mxu0 0.0
    %391 = vmatprep.subr.mxu0 0.0
    %392 = vmatpush1.xpose.msra.mxu0 0.0
    %393 = vmatprep.subr.mxu0 0.0
    %394 = vmatpush1.xpose.msra.mxu0 0.0
    %395 = vmatprep.subr.mxu0 0.0
    %396 = vmatpush1.xpose.msra.mxu0 0.0
    %397 = vmatprep.subr.mxu0 0.0
    %398 = vmatpush1.xpose.msra.mxu0 0.0
    %399 = vmatprep.subr.mxu0 0.0
    %400 = vmatpush1.xpose.msra.mxu0 0.0
    %401 = vmatprep.mubr.f32.mxu0 0.0
    %402 = vmatmul.mubr.f32.gmra.mrb[0].mxu0 %v333
    %v403 = vpop.f32.mrb[0].mxu0
    %v404 = vadd.f32 0.0, %v403
    %v405 = vpop.f32.mrb[0].mxu0
    %406 = vdwg.mxu0
    %v407 = vmul.f32 %v404, 0.25
    %v408 = vadd.f32 %v407, %v239
    %v409 = vsel %vm241, %v408, -inf
    %410 = vmax.xlane.f32.xlu0 %v409
    %v411 = vpop.xlane.xlu0 %410
    %v412 = vsub.f32 %v408, %v411
    %v413 = vmul.f32 %v412, 1.442695
    %v414 = vpow.pop %v413
    %v415 = vsel %vm241, %v414, 0.0
    %416 = vadd.xlane.f32.xlu0 %v415
    %v417 = vpop.xlane.xlu0 %416
    %v418 = vrcp.pop %v417
    %v419 = vmul.f32 %v414, %v418
    %420 = vrot.lane.b32.xlu0 %v149, 48
    %v421 = vpop.permute.xlu0 %420
    %v424 = vsel %vm241, %v419, 0
    %426 = vmatprep.subr.mxu0 0.0
    %427 = vmatpush1.msra.mxu0 %v421
    %428 = vmatprep.subr.mxu0 0.0
    %429 = vmatpush1.msra.mxu0 0.0
    %430 = vmatprep.subr.mxu0 0.0
    %431 = vmatpush1.msra.mxu0 0.0
    %432 = vmatprep.subr.mxu0 0.0
    %433 = vmatpush1.msra.mxu0 0.0
    %434 = vmatprep.subr.mxu0 0.0
    %435 = vmatpush1.msra.mxu0 0.0
    %436 = vmatprep.subr.mxu0 0.0
    %437 = vmatpush1.msra.mxu0 0.0
    %438 = vmatprep.subr.mxu0 0.0
    %439 = vmatpush1.msra.mxu0 0.0
    %440 = vmatprep.subr.mxu0 0.0
    %441 = vmatpush1.msra.mxu0 0.0
    %442 = vmatprep.subr.mxu0 0.0
    %443 = vmatpush1.msra.mxu0 0.0
    %444 = vmatprep.subr.mxu0 0.0
    %445 = vmatpush1.msra.mxu0 0.0
    %446 = vmatprep.subr.mxu0 0.0
    %447 = vmatpush1.msra.mxu0 0.0
    %448 = vmatprep.subr.mxu0 0.0
    %449 = vmatpush1.msra.mxu0 0.0
    %450 = vmatprep.subr.mxu0 0.0
    %451 = vmatpush1.msra.mxu0 0.0
    %452 = vmatprep.subr.mxu0 0.0
    %453 = vmatpush1.msra.mxu0 0.0
    %454 = vmatprep.subr.mxu0 0.0
    %455 = vmatpush1.msra.mxu0 0.0
    %456 = vmatprep.subr.mxu0 0.0
    %457 = vmatpush1.msra.mxu0 0.0
    %458 = vmatprep.subr.mxu0 0.0
    %459 = vmatpush1.msra.mxu0 0.0
    %460 = vmatprep.subr.mxu0 0.0
    %461 = vmatpush1.msra.mxu0 0.0
    %462 = vmatprep.subr.mxu0 0.0
    %463 = vmatpush1.msra.mxu0 0.0
    %464 = vmatprep.subr.mxu0 0.0
    %465 = vmatpush1.msra.mxu0 0.0
    %466 = vmatprep.subr.mxu0 0.0
    %467 = vmatpush1.msra.mxu0 0.0
    %468 = vmatprep.subr.mxu0 0.0
    %469 = vmatpush1.msra.mxu0 0.0
    %470 = vmatprep.subr.mxu0 0.0
    %471 = vmatpush1.msra.mxu0 0.0
    %472 = vmatprep.subr.mxu0 0.0
    %473 = vmatpush1.msra.mxu0 0.0
    %474 = vmatprep.subr.mxu0 0.0
    %475 = vmatpush1.msra.mxu0 0.0
    %476 = vmatprep.subr.mxu0 0.0
    %477 = vmatpush1.msra.mxu0 0.0
    %478 = vmatprep.subr.mxu0 0.0
    %479 = vmatpush1.msra.mxu0 0.0
    %480 = vmatprep.subr.mxu0 0.0
    %481 = vmatpush1.msra.mxu0 0.0
    %482 = vmatprep.subr.mxu0 0.0
    %483 = vmatpush1.msra.mxu0 0.0
    %484 = vmatprep.subr.mxu0 0.0
    %485 = vmatpush1.msra.mxu0 0.0
    %486 = vmatprep.subr.mxu0 0.0
    %487 = vmatpush1.msra.mxu0 0.0
    %488 = vmatprep.subr.mxu0 0.0
    %489 = vmatpush1.msra.mxu0 0.0
    %490 = vmatprep.mubr.f32.mxu0 0.0
    %491 = vmatmul.mubr.f32.gmra.mrb[0].mxu0 %v424
    %v492 = vpop.f32.mrb[0].mxu0
    %v493 = vadd.f32 0.0, %v492
    %v494 = vpop.f32.mrb[0].mxu0
    %495 = vdwg.mxu0
    %v497 = vsel %vm160, %v493, 0
    %499 = vmatprep.subr.mxu0 0.0
    %500 = vmatpush1.msra.mxu0 %v56
    %501 = vmatprep.subr.mxu0 0.0
    %502 = vmatpush1.msra.mxu0 %v57
    %503 = vmatprep.subr.mxu0 0.0
    %504 = vmatpush1.msra.mxu0 0.0
    %505 = vmatprep.subr.mxu0 0.0
    %506 = vmatpush1.msra.mxu0 0.0
    %507 = vmatprep.subr.mxu0 0.0
    %508 = vmatpush1.msra.mxu0 0.0
    %509 = vmatprep.subr.mxu0 0.0
    %510 = vmatpush1.msra.mxu0 0.0
    %511 = vmatprep.subr.mxu0 0.0
    %512 = vmatpush1.msra.mxu0 0.0
    %513 = vmatprep.subr.mxu0 0.0
    %514 = vmatpush1.msra.mxu0 0.0
    %515 = vmatprep.subr.mxu0 0.0
    %516 = vmatpush1.msra.mxu0 0.0
    %517 = vmatprep.subr.mxu0 0.0
    %518 = vmatpush1.msra.mxu0 0.0
    %519 = vmatprep.subr.mxu0 0.0
    %520 = vmatpush1.msra.mxu0 0.0
    %521 = vmatprep.subr.mxu0 0.0
    %522 = vmatpush1.msra.mxu0 0.0
    %523 = vmatprep.subr.mxu0 0.0
    %524 = vmatpush1.msra.mxu0 0.0
    %525 = vmatprep.subr.mxu0 0.0
    %526 = vmatpush1.msra.mxu0 0.0
    %527 = vmatprep.subr.mxu0 0.0
    %528 = vmatpush1.msra.mxu0 0.0
    %529 = vmatprep.subr.mxu0 0.0
    %530 = vmatpush1.msra.mxu0 0.0
    %531 = vmatprep.subr.mxu0 0.0
    %532 = vmatpush1.msra.mxu0 0.0
    %533 = vmatprep.subr.mxu0 0.0
    %534 = vmatpush1.msra.mxu0 0.0
    %535 = vmatprep.subr.mxu0 0.0
    %536 = vmatpush1.msra.mxu0 0.0
    %537 = vmatprep.subr.mxu0 0.0
    %538 = vmatpush1.msra.mxu0 0.0
    %539 = vmatprep.subr.mxu0 0.0
    %540 = vmatpush1.msra.mxu0 0.0
    %541 = vmatprep.subr.mxu0 0.0
    %542 = vmatpush1.msra.mxu0 0.0
    %543 = vmatprep.subr.mxu0 0.0
    %544 = vmatpush1.msra.mxu0 0.0
    %545 = vmatprep.subr.mxu0 0.0
    %546 = vmatpush1.msra.mxu0 0.0
    %547 = vmatprep.subr.mxu0 0.0
    %548 = vmatpush1.msra.mxu0 0.0
    %549 = vmatprep.subr.mxu0 0.0
    %550 = vmatpush1.msra.mxu0 0.0
    %551 = vmatprep.subr.mxu0 0.0
    %552 = vmatpush1.msra.mxu0 0.0
    %553 = vmatprep.subr.mxu0 0.0
    %554 = vmatpush1.msra.mxu0 0.0
    %555 = vmatprep.subr.mxu0 0.0
    %556 = vmatpush1.msra.mxu0 0.0
    %557 = vmatprep.subr.mxu0 0.0
    %558 = vmatpush1.msra.mxu0 0.0
    %559 = vmatprep.subr.mxu0 0.0
    %560 = vmatpush1.msra.mxu0 0.0
    %561 = vmatprep.subr.mxu0 0.0
    %562 = vmatpush1.msra.mxu0 0.0
    %563 = vmatprep.mubr.f32.mxu0 0.0
    %564 = vmatmul.mubr.f32.gmra.mrb[0].mxu0 %v497
    %v565 = vpop.f32.mrb[0].mxu0
    %v566 = vadd.f32 0.0, %v565
    %v567 = vpop.f32.mrb[0].mxu0
    %568 = vdwg.mxu0
    %v570 = vsel %vm160, %v326, 0
    %572 = vmatprep.subr.mxu0 0.0
    %573 = vmatpush1.msra.mxu0 %v54
    %574 = vmatprep.subr.mxu0 0.0
    %575 = vmatpush1.msra.mxu0 %v55
    %576 = vmatprep.subr.mxu0 0.0
    %577 = vmatpush1.msra.mxu0 0.0
    %578 = vmatprep.subr.mxu0 0.0
    %579 = vmatpush1.msra.mxu0 0.0
    %580 = vmatprep.subr.mxu0 0.0
    %581 = vmatpush1.msra.mxu0 0.0
    %582 = vmatprep.subr.mxu0 0.0
    %583 = vmatpush1.msra.mxu0 0.0
    %584 = vmatprep.subr.mxu0 0.0
    %585 = vmatpush1.msra.mxu0 0.0
    %586 = vmatprep.subr.mxu0 0.0
    %587 = vmatpush1.msra.mxu0 0.0
    %588 = vmatprep.subr.mxu0 0.0
    %589 = vmatpush1.msra.mxu0 0.0
    %590 = vmatprep.subr.mxu0 0.0
    %591 = vmatpush1.msra.mxu0 0.0
    %592 = vmatprep.subr.mxu0 0.0
    %593 = vmatpush1.msra.mxu0 0.0
    %594 = vmatprep.subr.mxu0 0.0
    %595 = vmatpush1.msra.mxu0 0.0
    %596 = vmatprep.subr.mxu0 0.0
    %597 = vmatpush1.msra.mxu0 0.0
    %598 = vmatprep.subr.mxu0 0.0
    %599 = vmatpush1.msra.mxu0 0.0
    %600 = vmatprep.subr.mxu0 0.0
    %601 = vmatpush1.msra.mxu0 0.0
    %602 = vmatprep.subr.mxu0 0.0
    %603 = vmatpush1.msra.mxu0 0.0
    %604 = vmatprep.subr.mxu0 0.0
    %605 = vmatpush1.msra.mxu0 0.0
    %606 = vmatprep.subr.mxu0 0.0
    %607 = vmatpush1.msra.mxu0 0.0
    %608 = vmatprep.subr.mxu0 0.0
    %609 = vmatpush1.msra.mxu0 0.0
    %610 = vmatprep.subr.mxu0 0.0
    %611 = vmatpush1.msra.mxu0 0.0
    %612 = vmatprep.subr.mxu0 0.0
    %613 = vmatpush1.msra.mxu0 0.0
    %614 = vmatprep.subr.mxu0 0.0
    %615 = vmatpush1.msra.mxu0 0.0
    %616 = vmatprep.subr.mxu0 0.0
    %617 = vmatpush1.msra.mxu0 0.0
    %618 = vmatprep.subr.mxu0 0.0
    %619 = vmatpush1.msra.mxu0 0.0
    %620 = vmatprep.subr.mxu0 0.0
    %621 = vmatpush1.msra.mxu0 0.0
    %622 = vmatprep.subr.mxu0 0.0
    %623 = vmatpush1.msra.mxu0 0.0
    %624 = vmatprep.subr.mxu0 0.0
    %625 = vmatpush1.msra.mxu0 0.0
    %626 = vmatprep.subr.mxu0 0.0
    %627 = vmatpush1.msra.mxu0 0.0
    %628 = vmatprep.subr.mxu0 0.0
    %629 = vmatpush1.msra.mxu0 0.0
    %630 = vmatprep.subr.mxu0 0.0
    %631 = vmatpush1.msra.mxu0 0.0
    %632 = vmatprep.subr.mxu0 0.0
    %633 = vmatpush1.msra.mxu0 0.0
    %634 = vmatprep.subr.mxu0 0.0
    %635 = vmatpush1.msra.mxu0 0.0
    %636 = vmatprep.mubr.f32.mxu0 0.0
    %637 = vmatmul.mubr.f32.gmra.mrb[0].mxu0 %v570
    %v638 = vpop.f32.mrb[0].mxu0
    %v639 = vadd.f32 %v566, %v638
    %v640 = vpop.f32.mrb[0].mxu0
    %641 = vdwg.mxu0
    %643 = vrot.lane.b32.xlu0 %v154, 96
    %v644 = vpop.permute.xlu0 %643
    %v645 = vsel %vm160, %v154, 0
    %v647 = vsel %vm160, %v644, 0
    %649 = vmatprep.subr.mxu0 0.0
    %650 = vmatpush1.xpose.msra.mxu0 %v647
    %651 = vmatprep.subr.mxu0 0.0
    %652 = vmatpush1.xpose.msra.mxu0 0.0
    %653 = vmatprep.subr.mxu0 0.0
    %654 = vmatpush1.xpose.msra.mxu0 0.0
    %655 = vmatprep.subr.mxu0 0.0
    %656 = vmatpush1.xpose.msra.mxu0 0.0
    %657 = vmatprep.subr.mxu0 0.0
    %658 = vmatpush1.xpose.msra.mxu0 0.0
    %659 = vmatprep.subr.mxu0 0.0
    %660 = vmatpush1.xpose.msra.mxu0 0.0
    %661 = vmatprep.subr.mxu0 0.0
    %662 = vmatpush1.xpose.msra.mxu0 0.0
    %663 = vmatprep.subr.mxu0 0.0
    %664 = vmatpush1.xpose.msra.mxu0 0.0
    %665 = vmatprep.subr.mxu0 0.0
    %666 = vmatpush1.xpose.msra.mxu0 0.0
    %667 = vmatprep.subr.mxu0 0.0
    %668 = vmatpush1.xpose.msra.mxu0 0.0
    %669 = vmatprep.subr.mxu0 0.0
    %670 = vmatpush1.xpose.msra.mxu0 0.0
    %671 = vmatprep.subr.mxu0 0.0
    %672 = vmatpush1.xpose.msra.mxu0 0.0
    %673 = vmatprep.subr.mxu0 0.0
    %674 = vmatpush1.xpose.msra.mxu0 0.0
    %675 = vmatprep.subr.mxu0 0.0
    %676 = vmatpush1.xpose.msra.mxu0 0.0
    %677 = vmatprep.subr.mxu0 0.0
    %678 = vmatpush1.xpose.msra.mxu0 0.0
    %679 = vmatprep.subr.mxu0 0.0
    %680 = vmatpush1.xpose.msra.mxu0 0.0
    %681 = vmatprep.subr.mxu0 0.0
    %682 = vmatpush1.xpose.msra.mxu0 0.0
    %683 = vmatprep.subr.mxu0 0.0
    %684 = vmatpush1.xpose.msra.mxu0 0.0
    %685 = vmatprep.subr.mxu0 0.0
    %686 = vmatpush1.xpose.msra.mxu0 0.0
    %687 = vmatprep.subr.mxu0 0.0
    %688 = vmatpush1.xpose.msra.mxu0 0.0
    %689 = vmatprep.subr.mxu0 0.0
    %690 = vmatpush1.xpose.msra.mxu0 0.0
    %691 = vmatprep.subr.mxu0 0.0
    %692 = vmatpush1.xpose.msra.mxu0 0.0
    %693 = vmatprep.subr.mxu0 0.0
    %694 = vmatpush1.xpose.msra.mxu0 0.0
    %695 = vmatprep.subr.mxu0 0.0
    %696 = vmatpush1.xpose.msra.mxu0 0.0
    %697 = vmatprep.subr.mxu0 0.0
    %698 = vmatpush1.xpose.msra.mxu0 0.0
    %699 = vmatprep.subr.mxu0 0.0
    %700 = vmatpush1.xpose.msra.mxu0 0.0
    %701 = vmatprep.subr.mxu0 0.0
    %702 = vmatpush1.xpose.msra.mxu0 0.0
    %703 = vmatprep.subr.mxu0 0.0
    %704 = vmatpush1.xpose.msra.mxu0 0.0
    %705 = vmatprep.subr.mxu0 0.0
    %706 = vmatpush1.xpose.msra.mxu0 0.0
    %707 = vmatprep.subr.mxu0 0.0
    %708 = vmatpush1.xpose.msra.mxu0 0.0
    %709 = vmatprep.subr.mxu0 0.0
    %710 = vmatpush1.xpose.msra.mxu0 0.0
    %711 = vmatprep.subr.mxu0 0.0
    %712 = vmatpush1.xpose.msra.mxu0 0.0
    %713 = vmatprep.mubr.f32.mxu0 0.0
    %714 = vmatmul.mubr.f32.gmra.mrb[0].mxu0 %v645
    %v715 = vpop.f32.mrb[0].mxu0
    %v716 = vadd.f32 0.0, %v715
    %v717 = vpop.f32.mrb[0].mxu0
    %718 = vdwg.mxu0
    %v719 = vmul.f32 %v716, 0.25
    %v720 = vlaneseq
    %v721 = vshrl.u32 %v720, 7
    %v722 = vsub.s32 1, %v721
    %v723 = vrot.slane %v49, %v722
    %v724 = vadd.f32 %v719, %v723
    %v725 = vsel %vm241, %v724, -inf
    %726 = vmax.xlane.f32.xlu0 %v725
    %v727 = vpop.xlane.xlu0 %726
    %v728 = vsub.f32 %v724, %v727
    %v729 = vmul.f32 %v728, 1.442695
    %v730 = vpow.pop %v729
    %v731 = vsel %vm241, %v730, 0.0
    %732 = vadd.xlane.f32.xlu0 %v731
    %v733 = vpop.xlane.xlu0 %732
    %v734 = vrcp.pop %v733
    %v735 = vmul.f32 %v730, %v734
    %736 = vrot.lane.b32.xlu0 %v154, 64
    %v737 = vpop.permute.xlu0 %736
    %v740 = vsel %vm241, %v735, 0
    %742 = vmatprep.subr.mxu0 0.0
    %743 = vmatpush1.msra.mxu0 %v737
    %744 = vmatprep.subr.mxu0 0.0
    %745 = vmatpush1.msra.mxu0 0.0
    %746 = vmatprep.subr.mxu0 0.0
    %747 = vmatpush1.msra.mxu0 0.0
    %748 = vmatprep.subr.mxu0 0.0
    %749 = vmatpush1.msra.mxu0 0.0
    %750 = vmatprep.subr.mxu0 0.0
    %751 = vmatpush1.msra.mxu0 0.0
    %752 = vmatprep.subr.mxu0 0.0
    %753 = vmatpush1.msra.mxu0 0.0
    %754 = vmatprep.subr.mxu0 0.0
    %755 = vmatpush1.msra.mxu0 0.0
    %756 = vmatprep.subr.mxu0 0.0
    %757 = vmatpush1.msra.mxu0 0.0
    %758 = vmatprep.subr.mxu0 0.0
    %759 = vmatpush1.msra.mxu0 0.0
    %760 = vmatprep.subr.mxu0 0.0
    %761 = vmatpush1.msra.mxu0 0.0
    %762 = vmatprep.subr.mxu0 0.0
    %763 = vmatpush1.msra.mxu0 0.0
    %764 = vmatprep.subr.mxu0 0.0
    %765 = vmatpush1.msra.mxu0 0.0
    %766 = vmatprep.subr.mxu0 0.0
    %767 = vmatpush1.msra.mxu0 0.0
    %768 = vmatprep.subr.mxu0 0.0
    %769 = vmatpush1.msra.mxu0 0.0
    %770 = vmatprep.subr.mxu0 0.0
    %771 = vmatpush1.msra.mxu0 0.0
    %772 = vmatprep.subr.mxu0 0.0
    %773 = vmatpush1.msra.mxu0 0.0
    %774 = vmatprep.subr.mxu0 0.0
    %775 = vmatpush1.msra.mxu0 0.0
    %776 = vmatprep.subr.mxu0 0.0
    %777 = vmatpush1.msra.mxu0 0.0
    %778 = vmatprep.subr.mxu0 0.0
    %779 = vmatpush1.msra.mxu0 0.0
    %780 = vmatprep.subr.mxu0 0.0
    %781 = vmatpush1.msra.mxu0 0.0
    %782 = vmatprep.subr.mxu0 0.0
    %783 = vmatpush1.msra.mxu0 0.0
    %784 = vmatprep.subr.mxu0 0.0
    %785 = vmatpush1.msra.mxu0 0.0
    %786 = vmatprep.subr.mxu0 0.0
    %787 = vmatpush1.msra.mxu0 0.0
    %788 = vmatprep.subr.mxu0 0.0
    %789 = vmatpush1.msra.mxu0 0.0
    %790 = vmatprep.subr.mxu0 0.0
    %791 = vmatpush1.msra.mxu0 0.0
    %792 = vmatprep.subr.mxu0 0.0
    %793 = vmatpush1.msra.mxu0 0.0
    %794 = vmatprep.subr.mxu0 0.0
    %795 = vmatpush1.msra.mxu0 0.0
    %796 = vmatprep.subr.mxu0 0.0
    %797 = vmatpush1.msra.mxu0 0.0
    %798 = vmatprep.subr.mxu0 0.0
    %799 = vmatpush1.msra.mxu0 0.0
    %800 = vmatprep.subr.mxu0 0.0
    %801 = vmatpush1.msra.mxu0 0.0
    %802 = vmatprep.subr.mxu0 0.0
    %803 = vmatpush1.msra.mxu0 0.0
    %804 = vmatprep.subr.mxu0 0.0
    %805 = vmatpush1.msra.mxu0 0.0
    %806 = vmatprep.mubr.f32.mxu0 0.0
    %807 = vmatmul.mubr.f32.gmra.mrb[0].mxu0 %v740
    %v808 = vpop.f32.mrb[0].mxu0
    %v809 = vadd.f32 0.0, %v808
    %v810 = vpop.f32.mrb[0].mxu0
    %811 = vdwg.mxu0
    %812 = vrot.lane.b32.xlu0 %v154, 112
    %v813 = vpop.permute.xlu0 %812
    %814 = vrot.lane.b32.xlu0 %v154, 80
    %v815 = vpop.permute.xlu0 %814
    %v816 = vsel %vm160, %v813, 0
    %v818 = vsel %vm160, %v815, 0
    %820 = vmatprep.subr.mxu0 0.0
    %821 = vmatpush1.xpose.msra.mxu0 %v818
    %822 = vmatprep.subr.mxu0 0.0
    %823 = vmatpush1.xpose.msra.mxu0 0.0
    %824 = vmatprep.subr.mxu0 0.0
    %825 = vmatpush1.xpose.msra.mxu0 0.0
    %826 = vmatprep.subr.mxu0 0.0
    %827 = vmatpush1.xpose.msra.mxu0 0.0
    %828 = vmatprep.subr.mxu0 0.0
    %829 = vmatpush1.xpose.msra.mxu0 0.0
    %830 = vmatprep.subr.mxu0 0.0
    %831 = vmatpush1.xpose.msra.mxu0 0.0
    %832 = vmatprep.subr.mxu0 0.0
    %833 = vmatpush1.xpose.msra.mxu0 0.0
    %834 = vmatprep.subr.mxu0 0.0
    %835 = vmatpush1.xpose.msra.mxu0 0.0
    %836 = vmatprep.subr.mxu0 0.0
    %837 = vmatpush1.xpose.msra.mxu0 0.0
    %838 = vmatprep.subr.mxu0 0.0
    %839 = vmatpush1.xpose.msra.mxu0 0.0
    %840 = vmatprep.subr.mxu0 0.0
    %841 = vmatpush1.xpose.msra.mxu0 0.0
    %842 = vmatprep.subr.mxu0 0.0
    %843 = vmatpush1.xpose.msra.mxu0 0.0
    %844 = vmatprep.subr.mxu0 0.0
    %845 = vmatpush1.xpose.msra.mxu0 0.0
    %846 = vmatprep.subr.mxu0 0.0
    %847 = vmatpush1.xpose.msra.mxu0 0.0
    %848 = vmatprep.subr.mxu0 0.0
    %849 = vmatpush1.xpose.msra.mxu0 0.0
    %850 = vmatprep.subr.mxu0 0.0
    %851 = vmatpush1.xpose.msra.mxu0 0.0
    %852 = vmatprep.subr.mxu0 0.0
    %853 = vmatpush1.xpose.msra.mxu0 0.0
    %854 = vmatprep.subr.mxu0 0.0
    %855 = vmatpush1.xpose.msra.mxu0 0.0
    %856 = vmatprep.subr.mxu0 0.0
    %857 = vmatpush1.xpose.msra.mxu0 0.0
    %858 = vmatprep.subr.mxu0 0.0
    %859 = vmatpush1.xpose.msra.mxu0 0.0
    %860 = vmatprep.subr.mxu0 0.0
    %861 = vmatpush1.xpose.msra.mxu0 0.0
    %862 = vmatprep.subr.mxu0 0.0
    %863 = vmatpush1.xpose.msra.mxu0 0.0
    %864 = vmatprep.subr.mxu0 0.0
    %865 = vmatpush1.xpose.msra.mxu0 0.0
    %866 = vmatprep.subr.mxu0 0.0
    %867 = vmatpush1.xpose.msra.mxu0 0.0
    %868 = vmatprep.subr.mxu0 0.0
    %869 = vmatpush1.xpose.msra.mxu0 0.0
    %870 = vmatprep.subr.mxu0 0.0
    %871 = vmatpush1.xpose.msra.mxu0 0.0
    %872 = vmatprep.subr.mxu0 0.0
    %873 = vmatpush1.xpose.msra.mxu0 0.0
    %874 = vmatprep.subr.mxu0 0.0
    %875 = vmatpush1.xpose.msra.mxu0 0.0
    %876 = vmatprep.subr.mxu0 0.0
    %877 = vmatpush1.xpose.msra.mxu0 0.0
    %878 = vmatprep.subr.mxu0 0.0
    %879 = vmatpush1.xpose.msra.mxu0 0.0
    %880 = vmatprep.subr.mxu0 0.0
    %881 = vmatpush1.xpose.msra.mxu0 0.0
    %882 = vmatprep.subr.mxu0 0.0
    %883 = vmatpush1.xpose.msra.mxu0 0.0
    %884 = vmatprep.mubr.f32.mxu0 0.0
    %885 = vmatmul.mubr.f32.gmra.mrb[0].mxu0 %v816
    %v886 = vpop.f32.mrb[0].mxu0
    %v887 = vadd.f32 0.0, %v886
    %v888 = vpop.f32.mrb[0].mxu0
    %889 = vdwg.mxu0
    %v890 = vmul.f32 %v887, 0.25
    %v891 = vadd.f32 %v890, %v723
    %v892 = vsel %vm241, %v891, -inf
    %893 = vmax.xlane.f32.xlu0 %v892
    %v894 = vpop.xlane.xlu0 %893
    %v895 = vsub.f32 %v891, %v894
    %v896 = vmul.f32 %v895, 1.442695
    %v897 = vpow.pop %v896
    %v898 = vsel %vm241, %v897, 0.0
    %899 = vadd.xlane.f32.xlu0 %v898
    %v900 = vpop.xlane.xlu0 %899
    %v901 = vrcp.pop %v900
    %v902 = vmul.f32 %v897, %v901
    %903 = vrot.lane.b32.xlu0 %v154, 48
    %v904 = vpop.permute.xlu0 %903
    %v907 = vsel %vm241, %v902, 0
    %909 = vmatprep.subr.mxu0 0.0
    %910 = vmatpush1.msra.mxu0 %v904
    %911 = vmatprep.subr.mxu0 0.0
    %912 = vmatpush1.msra.mxu0 0.0
    %913 = vmatprep.subr.mxu0 0.0
    %914 = vmatpush1.msra.mxu0 0.0
    %915 = vmatprep.subr.mxu0 0.0
    %916 = vmatpush1.msra.mxu0 0.0
    %917 = vmatprep.subr.mxu0 0.0
    %918 = vmatpush1.msra.mxu0 0.0
    %919 = vmatprep.subr.mxu0 0.0
    %920 = vmatpush1.msra.mxu0 0.0
    %921 = vmatprep.subr.mxu0 0.0
    %922 = vmatpush1.msra.mxu0 0.0
    %923 = vmatprep.subr.mxu0 0.0
    %924 = vmatpush1.msra.mxu0 0.0
    %925 = vmatprep.subr.mxu0 0.0
    %926 = vmatpush1.msra.mxu0 0.0
    %927 = vmatprep.subr.mxu0 0.0
    %928 = vmatpush1.msra.mxu0 0.0
    %929 = vmatprep.subr.mxu0 0.0
    %930 = vmatpush1.msra.mxu0 0.0
    %931 = vmatprep.subr.mxu0 0.0
    %932 = vmatpush1.msra.mxu0 0.0
    %933 = vmatprep.subr.mxu0 0.0
    %934 = vmatpush1.msra.mxu0 0.0
    %935 = vmatprep.subr.mxu0 0.0
    %936 = vmatpush1.msra.mxu0 0.0
    %937 = vmatprep.subr.mxu0 0.0
    %938 = vmatpush1.msra.mxu0 0.0
    %939 = vmatprep.subr.mxu0 0.0
    %940 = vmatpush1.msra.mxu0 0.0
    %941 = vmatprep.subr.mxu0 0.0
    %942 = vmatpush1.msra.mxu0 0.0
    %943 = vmatprep.subr.mxu0 0.0
    %944 = vmatpush1.msra.mxu0 0.0
    %945 = vmatprep.subr.mxu0 0.0
    %946 = vmatpush1.msra.mxu0 0.0
    %947 = vmatprep.subr.mxu0 0.0
    %948 = vmatpush1.msra.mxu0 0.0
    %949 = vmatprep.subr.mxu0 0.0
    %950 = vmatpush1.msra.mxu0 0.0
    %951 = vmatprep.subr.mxu0 0.0
    %952 = vmatpush1.msra.mxu0 0.0
    %953 = vmatprep.subr.mxu0 0.0
    %954 = vmatpush1.msra.mxu0 0.0
    %955 = vmatprep.subr.mxu0 0.0
    %956 = vmatpush1.msra.mxu0 0.0
    %957 = vmatprep.subr.mxu0 0.0
    %958 = vmatpush1.msra.mxu0 0.0
    %959 = vmatprep.subr.mxu0 0.0
    %960 = vmatpush1.msra.mxu0 0.0
    %961 = vmatprep.subr.mxu0 0.0
    %962 = vmatpush1.msra.mxu0 0.0
    %963 = vmatprep.subr.mxu0 0.0
    %964 = vmatpush1.msra.mxu0 0.0
    %965 = vmatprep.subr.mxu0 0.0
    %966 = vmatpush1.msra.mxu0 0.0
    %967 = vmatprep.subr.mxu0 0.0
    %968 = vmatpush1.msra.mxu0 0.0
    %969 = vmatprep.subr.mxu0 0.0
    %970 = vmatpush1.msra.mxu0 0.0
    %971 = vmatprep.subr.mxu0 0.0
    %972 = vmatpush1.msra.mxu0 0.0
    %973 = vmatprep.mubr.f32.mxu0 0.0
    %974 = vmatmul.mubr.f32.gmra.mrb[0].mxu0 %v907
    %v975 = vpop.f32.mrb[0].mxu0
    %v976 = vadd.f32 0.0, %v975
    %v977 = vpop.f32.mrb[0].mxu0
    %978 = vdwg.mxu0
    %v980 = vsel %vm160, %v976, 0
    %982 = vmatprep.subr.mxu0 0.0
    %983 = vmatpush1.msra.mxu0 %v56
    %984 = vmatprep.subr.mxu0 0.0
    %985 = vmatpush1.msra.mxu0 %v57
    %986 = vmatprep.subr.mxu0 0.0
    %987 = vmatpush1.msra.mxu0 0.0
    %988 = vmatprep.subr.mxu0 0.0
    %989 = vmatpush1.msra.mxu0 0.0
    %990 = vmatprep.subr.mxu0 0.0
    %991 = vmatpush1.msra.mxu0 0.0
    %992 = vmatprep.subr.mxu0 0.0
    %993 = vmatpush1.msra.mxu0 0.0
    %994 = vmatprep.subr.mxu0 0.0
    %995 = vmatpush1.msra.mxu0 0.0
    %996 = vmatprep.subr.mxu0 0.0
    %997 = vmatpush1.msra.mxu0 0.0
    %998 = vmatprep.subr.mxu0 0.0
    %999 = vmatpush1.msra.mxu0 0.0
    %1000 = vmatprep.subr.mxu0 0.0
    %1001 = vmatpush1.msra.mxu0 0.0
    %1002 = vmatprep.subr.mxu0 0.0
    %1003 = vmatpush1.msra.mxu0 0.0
    %1004 = vmatprep.subr.mxu0 0.0
    %1005 = vmatpush1.msra.mxu0 0.0
    %1006 = vmatprep.subr.mxu0 0.0
    %1007 = vmatpush1.msra.mxu0 0.0
    %1008 = vmatprep.subr.mxu0 0.0
    %1009 = vmatpush1.msra.mxu0 0.0
    %1010 = vmatprep.subr.mxu0 0.0
    %1011 = vmatpush1.msra.mxu0 0.0
    %1012 = vmatprep.subr.mxu0 0.0
    %1013 = vmatpush1.msra.mxu0 0.0
    %1014 = vmatprep.subr.mxu0 0.0
    %1015 = vmatpush1.msra.mxu0 0.0
    %1016 = vmatprep.subr.mxu0 0.0
    %1017 = vmatpush1.msra.mxu0 0.0
    %1018 = vmatprep.subr.mxu0 0.0
    %1019 = vmatpush1.msra.mxu0 0.0
    %1020 = vmatprep.subr.mxu0 0.0
    %1021 = vmatpush1.msra.mxu0 0.0
    %1022 = vmatprep.subr.mxu0 0.0
    %1023 = vmatpush1.msra.mxu0 0.0
    %1024 = vmatprep.subr.mxu0 0.0
    %1025 = vmatpush1.msra.mxu0 0.0
    %1026 = vmatprep.subr.mxu0 0.0
    %1027 = vmatpush1.msra.mxu0 0.0
    %1028 = vmatprep.subr.mxu0 0.0
    %1029 = vmatpush1.msra.mxu0 0.0
    %1030 = vmatprep.subr.mxu0 0.0
    %1031 = vmatpush1.msra.mxu0 0.0
    %1032 = vmatprep.subr.mxu0 0.0
    %1033 = vmatpush1.msra.mxu0 0.0
    %1034 = vmatprep.subr.mxu0 0.0
    %1035 = vmatpush1.msra.mxu0 0.0
    %1036 = vmatprep.subr.mxu0 0.0
    %1037 = vmatpush1.msra.mxu0 0.0
    %1038 = vmatprep.subr.mxu0 0.0
    %1039 = vmatpush1.msra.mxu0 0.0
    %1040 = vmatprep.subr.mxu0 0.0
    %1041 = vmatpush1.msra.mxu0 0.0
    %1042 = vmatprep.subr.mxu0 0.0
    %1043 = vmatpush1.msra.mxu0 0.0
    %1044 = vmatprep.subr.mxu0 0.0
    %1045 = vmatpush1.msra.mxu0 0.0
    %1046 = vmatprep.mubr.f32.mxu0 0.0
    %1047 = vmatmul.mubr.f32.gmra.mrb[0].mxu0 %v980
    %v1048 = vpop.f32.mrb[0].mxu0
    %v1049 = vadd.f32 0.0, %v1048
    %v1050 = vpop.f32.mrb[0].mxu0
    %1051 = vdwg.mxu0
    %v1053 = vsel %vm160, %v809, 0
    %1055 = vmatprep.subr.mxu0 0.0
    %1056 = vmatpush1.msra.mxu0 %v54
    %1057 = vmatprep.subr.mxu0 0.0
    %1058 = vmatpush1.msra.mxu0 %v55
    %1059 = vmatprep.subr.mxu0 0.0
    %1060 = vmatpush1.msra.mxu0 0.0
    %1061 = vmatprep.subr.mxu0 0.0
    %1062 = vmatpush1.msra.mxu0 0.0
    %1063 = vmatprep.subr.mxu0 0.0
    %1064 = vmatpush1.msra.mxu0 0.0
    %1065 = vmatprep.subr.mxu0 0.0
    %1066 = vmatpush1.msra.mxu0 0.0
    %1067 = vmatprep.subr.mxu0 0.0
    %1068 = vmatpush1.msra.mxu0 0.0
    %1069 = vmatprep.subr.mxu0 0.0
    %1070 = vmatpush1.msra.mxu0 0.0
    %1071 = vmatprep.subr.mxu0 0.0
    %1072 = vmatpush1.msra.mxu0 0.0
    %1073 = vmatprep.subr.mxu0 0.0
    %1074 = vmatpush1.msra.mxu0 0.0
    %1075 = vmatprep.subr.mxu0 0.0
    %1076 = vmatpush1.msra.mxu0 0.0
    %1077 = vmatprep.subr.mxu0 0.0
    %1078 = vmatpush1.msra.mxu0 0.0
    %1079 = vmatprep.subr.mxu0 0.0
    %1080 = vmatpush1.msra.mxu0 0.0
    %1081 = vmatprep.subr.mxu0 0.0
    %1082 = vmatpush1.msra.mxu0 0.0
    %1083 = vmatprep.subr.mxu0 0.0
    %1084 = vmatpush1.msra.mxu0 0.0
    %1085 = vmatprep.subr.mxu0 0.0
    %1086 = vmatpush1.msra.mxu0 0.0
    %1087 = vmatprep.subr.mxu0 0.0
    %1088 = vmatpush1.msra.mxu0 0.0
    %1089 = vmatprep.subr.mxu0 0.0
    %1090 = vmatpush1.msra.mxu0 0.0
    %1091 = vmatprep.subr.mxu0 0.0
    %1092 = vmatpush1.msra.mxu0 0.0
    %1093 = vmatprep.subr.mxu0 0.0
    %1094 = vmatpush1.msra.mxu0 0.0
    %1095 = vmatprep.subr.mxu0 0.0
    %1096 = vmatpush1.msra.mxu0 0.0
    %1097 = vmatprep.subr.mxu0 0.0
    %1098 = vmatpush1.msra.mxu0 0.0
    %1099 = vmatprep.subr.mxu0 0.0
    %1100 = vmatpush1.msra.mxu0 0.0
    %1101 = vmatprep.subr.mxu0 0.0
    %1102 = vmatpush1.msra.mxu0 0.0
    %1103 = vmatprep.subr.mxu0 0.0
    %1104 = vmatpush1.msra.mxu0 0.0
    %1105 = vmatprep.subr.mxu0 0.0
    %1106 = vmatpush1.msra.mxu0 0.0
    %1107 = vmatprep.subr.mxu0 0.0
    %1108 = vmatpush1.msra.mxu0 0.0
    %1109 = vmatprep.subr.mxu0 0.0
    %1110 = vmatpush1.msra.mxu0 0.0
    %1111 = vmatprep.subr.mxu0 0.0
    %1112 = vmatpush1.msra.mxu0 0.0
    %1113 = vmatprep.subr.mxu0 0.0
    %1114 = vmatpush1.msra.mxu0 0.0
    %1115 = vmatprep.subr.mxu0 0.0
    %1116 = vmatpush1.msra.mxu0 0.0
    %1117 = vmatprep.subr.mxu0 0.0
    %1118 = vmatpush1.msra.mxu0 0.0
    %1119 = vmatprep.mubr.f32.mxu0 0.0
    %1120 = vmatmul.mubr.f32.gmra.mrb[0].mxu0 %v1053
    %v1121 = vpop.f32.mrb[0].mxu0
    %v1122 = vadd.f32 %v1049, %v1121
    %v1123 = vpop.f32.mrb[0].mxu0
    %1124 = vdwg.mxu0
    %v1125 = vlaneseq
    %v1126 = vshrl.u32 %v1125, 7
    %v1127 = vsub.s32 1, %v1126
    %v1128 = vrot.slane %v70, %v1127
    %v1129 = vadd.f32 %v639, %v1128
    %v1130 = vadd.f32 %v1122, %v1128
    %v1131 = vadd.f32 %v45, %v1129
    %v1132 = vadd.f32 %v46, %v1130
    %v1133 = vsel %vm75, %v1131, 0.0
    %1134 = vadd.xlane.f32.xlu0 %v1133
    %v1135 = vpop.xlane.xlu0 %1134
    %v1136 = vsel %vm75, %v1132, 0.0
    %1137 = vadd.xlane.f32.xlu0 %v1136
    %v1138 = vpop.xlane.xlu0 %1137
    %v1139 = vrcp.pop 32.0
    %v1140 = vmul.f32 %v1135, %v1139
    %v1141 = vmul.f32 %v1138, %v1139
    %v1142 = vsub.f32 %v1131, %v1140
    %v1143 = vsub.f32 %v1132, %v1141
    %v1144 = vmul.f32 %v1142, %v1142
    %v1145 = vmul.f32 %v1143, %v1143
    %v1146 = vsel %vm75, %v1144, 0.0
    %1147 = vadd.xlane.f32.xlu0 %v1146
    %v1148 = vpop.xlane.xlu0 %1147
    %v1149 = vsel %vm75, %v1145, 0.0
    %1150 = vadd.xlane.f32.xlu0 %v1149
    %v1151 = vpop.xlane.xlu0 %1150
    %v1152 = vmul.f32 %v1148, %v1139
    %v1153 = vmul.f32 %v1151, %v1139
    %v1154 = vadd.f32 %v1152, 1e-12
    %v1155 = vadd.f32 %v1153, 1e-12
    %v1156 = vrsqrt.pop %v1154
    %v1157 = vrsqrt.pop %v1155
    %v1158 = vmul.f32 %v1142, %v1156
    %v1159 = vmul.f32 %v1143, %v1157
    %v1160 = vlaneseq
    %v1161 = vshrl.u32 %v1160, 7
    %v1162 = vsub.s32 2, %v1161
    %v1163 = vrot.slane %v70, %v1162
    %v1164 = vmul.f32 %v1158, %v1163
    %v1165 = vmul.f32 %v1159, %v1163
    %v1166 = vlaneseq
    %v1167 = vshrl.u32 %v1166, 7
    %v1168 = vsub.s32 3, %v1167
    %v1169 = vrot.slane %v70, %v1168
    %v1170 = vadd.f32 %v1164, %v1169
    %v1171 = vadd.f32 %v1165, %v1169
    %v1172 = vlaneseq
    %v1173 = vshrl.u32 %v1172, 7
    %v1174 = vsub.s32 4, %v1173
    %v1175 = vrot.slane %v70, %v1174
    %v1177 = vsel %vm75, %v1170, 0
    %v1180 = vsel %vm75, %v1171, 0
    %1182 = vmatprep.subr.mxu0 0.0
    %1183 = vmatpush1.msra.mxu0 %v58
    %1184 = vmatprep.subr.mxu0 0.0
    %1185 = vmatpush1.msra.mxu0 %v59
    %1186 = vmatprep.subr.mxu0 0.0
    %1187 = vmatpush1.msra.mxu0 %v60
    %1188 = vmatprep.subr.mxu0 0.0
    %1189 = vmatpush1.msra.mxu0 %v61
    %1190 = vmatprep.subr.mxu0 0.0
    %1191 = vmatpush1.msra.mxu0 0.0
    %1192 = vmatprep.subr.mxu0 0.0
    %1193 = vmatpush1.msra.mxu0 0.0
    %1194 = vmatprep.subr.mxu0 0.0
    %1195 = vmatpush1.msra.mxu0 0.0
    %1196 = vmatprep.subr.mxu0 0.0
    %1197 = vmatpush1.msra.mxu0 0.0
    %1198 = vmatprep.subr.mxu0 0.0
    %1199 = vmatpush1.msra.mxu0 0.0
    %1200 = vmatprep.subr.mxu0 0.0
    %1201 = vmatpush1.msra.mxu0 0.0
    %1202 = vmatprep.subr.mxu0 0.0
    %1203 = vmatpush1.msra.mxu0 0.0
    %1204 = vmatprep.subr.mxu0 0.0
    %1205 = vmatpush1.msra.mxu0 0.0
    %1206 = vmatprep.subr.mxu0 0.0
    %1207 = vmatpush1.msra.mxu0 0.0
    %1208 = vmatprep.subr.mxu0 0.0
    %1209 = vmatpush1.msra.mxu0 0.0
    %1210 = vmatprep.subr.mxu0 0.0
    %1211 = vmatpush1.msra.mxu0 0.0
    %1212 = vmatprep.subr.mxu0 0.0
    %1213 = vmatpush1.msra.mxu0 0.0
    %1214 = vmatprep.subr.mxu0 0.0
    %1215 = vmatpush1.msra.mxu0 0.0
    %1216 = vmatprep.subr.mxu0 0.0
    %1217 = vmatpush1.msra.mxu0 0.0
    %1218 = vmatprep.subr.mxu0 0.0
    %1219 = vmatpush1.msra.mxu0 0.0
    %1220 = vmatprep.subr.mxu0 0.0
    %1221 = vmatpush1.msra.mxu0 0.0
    %1222 = vmatprep.subr.mxu0 0.0
    %1223 = vmatpush1.msra.mxu0 0.0
    %1224 = vmatprep.subr.mxu0 0.0
    %1225 = vmatpush1.msra.mxu0 0.0
    %1226 = vmatprep.subr.mxu0 0.0
    %1227 = vmatpush1.msra.mxu0 0.0
    %1228 = vmatprep.subr.mxu0 0.0
    %1229 = vmatpush1.msra.mxu0 0.0
    %1230 = vmatprep.subr.mxu0 0.0
    %1231 = vmatpush1.msra.mxu0 0.0
    %1232 = vmatprep.subr.mxu0 0.0
    %1233 = vmatpush1.msra.mxu0 0.0
    %1234 = vmatprep.subr.mxu0 0.0
    %1235 = vmatpush1.msra.mxu0 0.0
    %1236 = vmatprep.subr.mxu0 0.0
    %1237 = vmatpush1.msra.mxu0 0.0
    %1238 = vmatprep.subr.mxu0 0.0
    %1239 = vmatpush1.msra.mxu0 0.0
    %1240 = vmatprep.subr.mxu0 0.0
    %1241 = vmatpush1.msra.mxu0 0.0
    %1242 = vmatprep.subr.mxu0 0.0
    %1243 = vmatpush1.msra.mxu0 0.0
    %1244 = vmatprep.subr.mxu0 0.0
    %1245 = vmatpush1.msra.mxu0 0.0
    %1246 = vmatprep.mubr.f32.mxu0 0.0
    %1247 = vmatmul.mubr.f32.gmra.mrb[0].mxu0 %v1177
    %v1248 = vpop.f32.mrb[0].mxu0
    %v1249 = vadd.f32 %v1175, %v1248
    %v1250 = vpop.f32.mrb[0].mxu0
    %1251 = vmatprep.mubr.f32.mxu0 0.0
    %1252 = vmatmul.mubr.f32.gmra.mrb[0].mxu0 %v1180
    %v1253 = vpop.f32.mrb[0].mxu0
    %v1254 = vadd.f32 %v1175, %v1253
    %v1255 = vpop.f32.mrb[0].mxu0
    %1256 = vdwg.mxu0
    %v1257 = vmul.f32 %v1249, %v1249
    %v1258 = vmul.f32 %v1254, %v1254
    %v1259 = vmul.f32 %v1249, %v1257
    %v1260 = vmul.f32 %v1254, %v1258
    %v1261 = vmul.f32 %v1259, 0.044715
    %v1262 = vmul.f32 %v1260, 0.044715
    %v1263 = vadd.f32 %v1249, %v1261
    %v1264 = vadd.f32 %v1254, %v1262
    %v1265 = vmul.f32 %v1263, 0.7978846
    %v1266 = vmul.f32 %v1264, 0.7978846
    %v1267 = vtanh.pop %v1265
    %v1268 = vtanh.pop %v1266
    %v1269 = vadd.f32 %v1267, 1.0
    %v1270 = vadd.f32 %v1268, 1.0
    %v1271 = vmul.f32 %v1269, 0.5
    %v1272 = vmul.f32 %v1270, 0.5
    %v1273 = vmul.f32 %v1249, %v1271
    %v1274 = vmul.f32 %v1254, %v1272
    %v1275 = vlaneseq
    %v1276 = vshrl.u32 %v1275, 7
    %v1277 = vsub.s32 5, %v1276
    %v1278 = vrot.slane %v70, %v1277
    %vm1279 = vcmask 523264
    %v1281 = vsel %vm1279, %v1273, 0
    %v1284 = vsel %vm1279, %v1274, 0
    %1286 = vmatprep.subr.mxu0 0.0
    %1287 = vmatpush1.msra.mxu0 %v62
    %1288 = vmatprep.subr.mxu0 0.0
    %1289 = vmatpush1.msra.mxu0 %v63
    %1290 = vmatprep.subr.mxu0 0.0
    %1291 = vmatpush1.msra.mxu0 %v64
    %1292 = vmatprep.subr.mxu0 0.0
    %1293 = vmatpush1.msra.mxu0 %v65
    %1294 = vmatprep.subr.mxu0 0.0
    %1295 = vmatpush1.msra.mxu0 %v66
    %1296 = vmatprep.subr.mxu0 0.0
    %1297 = vmatpush1.msra.mxu0 %v67
    %1298 = vmatprep.subr.mxu0 0.0
    %1299 = vmatpush1.msra.mxu0 %v68
    %1300 = vmatprep.subr.mxu0 0.0
    %1301 = vmatpush1.msra.mxu0 %v69
    %1302 = vmatprep.subr.mxu0 0.0
    %1303 = vmatpush1.msra.mxu0 0.0
    %1304 = vmatprep.subr.mxu0 0.0
    %1305 = vmatpush1.msra.mxu0 0.0
    %1306 = vmatprep.subr.mxu0 0.0
    %1307 = vmatpush1.msra.mxu0 0.0
    %1308 = vmatprep.subr.mxu0 0.0
    %1309 = vmatpush1.msra.mxu0 0.0
    %1310 = vmatprep.subr.mxu0 0.0
    %1311 = vmatpush1.msra.mxu0 0.0
    %1312 = vmatprep.subr.mxu0 0.0
    %1313 = vmatpush1.msra.mxu0 0.0
    %1314 = vmatprep.subr.mxu0 0.0
    %1315 = vmatpush1.msra.mxu0 0.0
    %1316 = vmatprep.subr.mxu0 0.0
    %1317 = vmatpush1.msra.mxu0 0.0
    %1318 = vmatprep.subr.mxu0 0.0
    %1319 = vmatpush1.msra.mxu0 0.0
    %1320 = vmatprep.subr.mxu0 0.0
    %1321 = vmatpush1.msra.mxu0 0.0
    %1322 = vmatprep.subr.mxu0 0.0
    %1323 = vmatpush1.msra.mxu0 0.0
    %1324 = vmatprep.subr.mxu0 0.0
    %1325 = vmatpush1.msra.mxu0 0.0
    %1326 = vmatprep.subr.mxu0 0.0
    %1327 = vmatpush1.msra.mxu0 0.0
    %1328 = vmatprep.subr.mxu0 0.0
    %1329 = vmatpush1.msra.mxu0 0.0
    %1330 = vmatprep.subr.mxu0 0.0
    %1331 = vmatpush1.msra.mxu0 0.0
    %1332 = vmatprep.subr.mxu0 0.0
    %1333 = vmatpush1.msra.mxu0 0.0
    %1334 = vmatprep.subr.mxu0 0.0
    %1335 = vmatpush1.msra.mxu0 0.0
    %1336 = vmatprep.subr.mxu0 0.0
    %1337 = vmatpush1.msra.mxu0 0.0
    %1338 = vmatprep.subr.mxu0 0.0
    %1339 = vmatpush1.msra.mxu0 0.0
    %1340 = vmatprep.subr.mxu0 0.0
    %1341 = vmatpush1.msra.mxu0 0.0
    %1342 = vmatprep.subr.mxu0 0.0
    %1343 = vmatpush1.msra.mxu0 0.0
    %1344 = vmatprep.subr.mxu0 0.0
    %1345 = vmatpush1.msra.mxu0 0.0
    %1346 = vmatprep.subr.mxu0 0.0
    %1347 = vmatpush1.msra.mxu0 0.0
    %1348 = vmatprep.subr.mxu0 0.0
    %1349 = vmatpush1.msra.mxu0 0.0
    %1350 = vmatprep.mubr.f32.mxu0 0.0
    %1351 = vmatmul.mubr.f32.gmra.mrb[0].mxu0 %v1281
    %v1352 = vpop.f32.mrb[0].mxu0
    %v1353 = vadd.f32 %v1278, %v1352
    %v1354 = vpop.f32.mrb[0].mxu0
    %1355 = vmatprep.mubr.f32.mxu0 0.0
    %1356 = vmatmul.mubr.f32.gmra.mrb[0].mxu0 %v1284
    %v1357 = vpop.f32.mrb[0].mxu0
    %v1358 = vadd.f32 %v1278, %v1357
    %v1359 = vpop.f32.mrb[0].mxu0
    %1360 = vdwg.mxu0
    %v1361 = vadd.f32 %v1170, %v1353
    %v1362 = vadd.f32 %v1171, %v1358
    %v1363 = vsel %vm75, %v1361, 0.0
    %1364 = vadd.xlane.f32.xlu0 %v1363
    %v1365 = vpop.xlane.xlu0 %1364
    %v1366 = vsel %vm75, %v1362, 0.0
    %1367 = vadd.xlane.f32.xlu0 %v1366
    %v1368 = vpop.xlane.xlu0 %1367
    %v1369 = vmul.f32 %v1365, %v1139
    %v1370 = vmul.f32 %v1368, %v1139
    %v1371 = vsub.f32 %v1361, %v1369
    %v1372 = vsub.f32 %v1362, %v1370
    %v1373 = vmul.f32 %v1371, %v1371
    %v1374 = vmul.f32 %v1372, %v1372
    %v1375 = vsel %vm75, %v1373, 0.0
    %1376 = vadd.xlane.f32.xlu0 %v1375
    %v1377 = vpop.xlane.xlu0 %1376
    %v1378 = vsel %vm75, %v1374, 0.0
    %1379 = vadd.xlane.f32.xlu0 %v1378
    %v1380 = vpop.xlane.xlu0 %1379
    %v1381 = vmul.f32 %v1377, %v1139
    %v1382 = vmul.f32 %v1380, %v1139
    %v1383 = vadd.f32 %v1381, 1e-12
    %v1384 = vadd.f32 %v1382, 1e-12
    %v1385 = vrsqrt.pop %v1383
    %v1386 = vrsqrt.pop %v1384
    %v1387 = vmul.f32 %v1371, %v1385
    %v1388 = vmul.f32 %v1372, %v1386
    %v1389 = vlaneseq
    %v1390 = vshrl.u32 %v1389, 7
    %v1391 = vsub.s32 6, %v1390
    %v1392 = vrot.slane %v70, %v1391
    %v1393 = vmul.f32 %v1387, %v1392
    %v1394 = vmul.f32 %v1388, %v1392
    %v1395 = vlaneseq
    %v1396 = vshrl.u32 %v1395, 7
    %v1397 = vsub.s32 7, %v1396
    %v1398 = vrot.slane %v70, %v1397
    %v1399 = vadd.f32 %v1393, %v1398
    %v1400 = vadd.f32 %v1394, %v1398
    %s1401 = scalar_lea.vmem %s3, 32
    %v1402 = vld [vmem:[%s1401] sm:$0xff]
    %v1403 = vld [vmem:[%s1401 + $0x8] sm:$0xff]
    %v1404 = vld [vmem:[%s1401 + $0x10] sm:$0xff]
    %v1405 = vld [vmem:[%s1401 + $0x18] sm:$0xff]
    %s1406 = scalar_lea.vmem %s4, 32
    %v1407 = vld [vmem:[%s1406] sm:$0xff]
    %v1408 = vld [vmem:[%s1406 + $0x8] sm:$0xff]
    %v1409 = vld [vmem:[%s1406 + $0x10] sm:$0xff]
    %v1410 = vld [vmem:[%s1406 + $0x18] sm:$0xff]
    %s1411 = scalar_lea.vmem %s5, 32
    %v1412 = vld [vmem:[%s1411] sm:$0xff]
    %v1413 = vld [vmem:[%s1411 + $0x8] sm:$0xff]
    %v1414 = vld [vmem:[%s1411 + $0x10] sm:$0xff]
    %v1415 = vld [vmem:[%s1411 + $0x18] sm:$0xff]
    %s1416 = scalar_lea.vmem %s6, 64
    %v1417 = vld [vmem:[%s1416] sm:$0xff]
    %v1418 = vld [vmem:[%s1416 + $0x8] sm:$0xff]
    %v1419 = vld [vmem:[%s1416 + $0x10] sm:$0xff]
    %v1420 = vld [vmem:[%s1416 + $0x18] sm:$0xff]
    %v1421 = vld [vmem:[%s1416 + $0x20] sm:$0xff]
    %v1422 = vld [vmem:[%s1416 + $0x28] sm:$0xff]
    %v1423 = vld [vmem:[%s1416 + $0x30] sm:$0xff]
    %v1424 = vld [vmem:[%s1416 + $0x38] sm:$0xff]
    %s1425 = scalar_lea.vmem %s7, 8
    %v1426 = vld [vmem:[%s1425] sm:$0xff]
    %v1427 = vlaneseq
    %v1428 = vshrl.u32 %v1427, 7
    %v1429 = vsub.s32 0, %v1428
    %v1430 = vrot.slane %v1426, %v1429
    %v1432 = vsel %vm75, %v1399, 0
    %v1435 = vsel %vm75, %v1400, 0
    %1437 = vmatprep.subr.mxu0 0.0
    %1438 = vmatpush1.msra.mxu0 %v1402
    %1439 = vmatprep.subr.mxu0 0.0
    %1440 = vmatpush1.msra.mxu0 %v1403
    %1441 = vmatprep.subr.mxu0 0.0
    %1442 = vmatpush1.msra.mxu0 %v1404
    %1443 = vmatprep.subr.mxu0 0.0
    %1444 = vmatpush1.msra.mxu0 %v1405
    %1445 = vmatprep.subr.mxu0 0.0
    %1446 = vmatpush1.msra.mxu0 0.0
    %1447 = vmatprep.subr.mxu0 0.0
    %1448 = vmatpush1.msra.mxu0 0.0
    %1449 = vmatprep.subr.mxu0 0.0
    %1450 = vmatpush1.msra.mxu0 0.0
    %1451 = vmatprep.subr.mxu0 0.0
    %1452 = vmatpush1.msra.mxu0 0.0
    %1453 = vmatprep.subr.mxu0 0.0
    %1454 = vmatpush1.msra.mxu0 0.0
    %1455 = vmatprep.subr.mxu0 0.0
    %1456 = vmatpush1.msra.mxu0 0.0
    %1457 = vmatprep.subr.mxu0 0.0
    %1458 = vmatpush1.msra.mxu0 0.0
    %1459 = vmatprep.subr.mxu0 0.0
    %1460 = vmatpush1.msra.mxu0 0.0
    %1461 = vmatprep.subr.mxu0 0.0
    %1462 = vmatpush1.msra.mxu0 0.0
    %1463 = vmatprep.subr.mxu0 0.0
    %1464 = vmatpush1.msra.mxu0 0.0
    %1465 = vmatprep.subr.mxu0 0.0
    %1466 = vmatpush1.msra.mxu0 0.0
    %1467 = vmatprep.subr.mxu0 0.0
    %1468 = vmatpush1.msra.mxu0 0.0
    %1469 = vmatprep.subr.mxu0 0.0
    %1470 = vmatpush1.msra.mxu0 0.0
    %1471 = vmatprep.subr.mxu0 0.0
    %1472 = vmatpush1.msra.mxu0 0.0
    %1473 = vmatprep.subr.mxu0 0.0
    %1474 = vmatpush1.msra.mxu0 0.0
    %1475 = vmatprep.subr.mxu0 0.0
    %1476 = vmatpush1.msra.mxu0 0.0
    %1477 = vmatprep.subr.mxu0 0.0
    %1478 = vmatpush1.msra.mxu0 0.0
    %1479 = vmatprep.subr.mxu0 0.0
    %1480 = vmatpush1.msra.mxu0 0.0
    %1481 = vmatprep.subr.mxu0 0.0
    %1482 = vmatpush1.msra.mxu0 0.0
    %1483 = vmatprep.subr.mxu0 0.0
    %1484 = vmatpush1.msra.mxu0 0.0
    %1485 = vmatprep.subr.mxu0 0.0
    %1486 = vmatpush1.msra.mxu0 0.0
    %1487 = vmatprep.subr.mxu0 0.0
    %1488 = vmatpush1.msra.mxu0 0.0
    %1489 = vmatprep.subr.mxu0 0.0
    %1490 = vmatpush1.msra.mxu0 0.0
    %1491 = vmatprep.subr.mxu0 0.0
    %1492 = vmatpush1.msra.mxu0 0.0
    %1493 = vmatprep.subr.mxu0 0.0
    %1494 = vmatpush1.msra.mxu0 0.0
    %1495 = vmatprep.subr.mxu0 0.0
    %1496 = vmatpush1.msra.mxu0 0.0
    %1497 = vmatprep.subr.mxu0 0.0
    %1498 = vmatpush1.msra.mxu0 0.0
    %1499 = vmatprep.subr.mxu0 0.0
    %1500 = vmatpush1.msra.mxu0 0.0
    %1501 = vmatprep.mubr.f32.mxu0 0.0
    %1502 = vmatmul.mubr.f32.gmra.mrb[0].mxu0 %v1432
    %v1503 = vpop.f32.mrb[0].mxu0
    %v1504 = vadd.f32 %v1430, %v1503
    %v1505 = vpop.f32.mrb[0].mxu0
    %1506 = vmatprep.mubr.f32.mxu0 0.0
    %1507 = vmatmul.mubr.f32.gmra.mrb[0].mxu0 %v1435
    %v1508 = vpop.f32.mrb[0].mxu0
    %v1509 = vadd.f32 %v1430, %v1508
    %v1510 = vpop.f32.mrb[0].mxu0
    %1511 = vdwg.mxu0
    %1513 = vrot.lane.b32.xlu0 %v1504, 96
    %v1514 = vpop.permute.xlu0 %1513
    %v1515 = vsel %vm160, %v1504, 0
    %v1517 = vsel %vm160, %v1514, 0
    %1519 = vmatprep.subr.mxu0 0.0
    %1520 = vmatpush1.xpose.msra.mxu0 %v1517
    %1521 = vmatprep.subr.mxu0 0.0
    %1522 = vmatpush1.xpose.msra.mxu0 0.0
    %1523 = vmatprep.subr.mxu0 0.0
    %1524 = vmatpush1.xpose.msra.mxu0 0.0
    %1525 = vmatprep.subr.mxu0 0.0
    %1526 = vmatpush1.xpose.msra.mxu0 0.0
    %1527 = vmatprep.subr.mxu0 0.0
    %1528 = vmatpush1.xpose.msra.mxu0 0.0
    %1529 = vmatprep.subr.mxu0 0.0
    %1530 = vmatpush1.xpose.msra.mxu0 0.0
    %1531 = vmatprep.subr.mxu0 0.0
    %1532 = vmatpush1.xpose.msra.mxu0 0.0
    %1533 = vmatprep.subr.mxu0 0.0
    %1534 = vmatpush1.xpose.msra.mxu0 0.0
    %1535 = vmatprep.subr.mxu0 0.0
    %1536 = vmatpush1.xpose.msra.mxu0 0.0
    %1537 = vmatprep.subr.mxu0 0.0
    %1538 = vmatpush1.xpose.msra.mxu0 0.0
    %1539 = vmatprep.subr.mxu0 0.0
    %1540 = vmatpush1.xpose.msra.mxu0 0.0
    %1541 = vmatprep.subr.mxu0 0.0
    %1542 = vmatpush1.xpose.msra.mxu0 0.0
    %1543 = vmatprep.subr.mxu0 0.0
    %1544 = vmatpush1.xpose.msra.mxu0 0.0
    %1545 = vmatprep.subr.mxu0 0.0
    %1546 = vmatpush1.xpose.msra.mxu0 0.0
    %1547 = vmatprep.subr.mxu0 0.0
    %1548 = vmatpush1.xpose.msra.mxu0 0.0
    %1549 = vmatprep.subr.mxu0 0.0
    %1550 = vmatpush1.xpose.msra.mxu0 0.0
    %1551 = vmatprep.subr.mxu0 0.0
    %1552 = vmatpush1.xpose.msra.mxu0 0.0
    %1553 = vmatprep.subr.mxu0 0.0
    %1554 = vmatpush1.xpose.msra.mxu0 0.0
    %1555 = vmatprep.subr.mxu0 0.0
    %1556 = vmatpush1.xpose.msra.mxu0 0.0
    %1557 = vmatprep.subr.mxu0 0.0
    %1558 = vmatpush1.xpose.msra.mxu0 0.0
    %1559 = vmatprep.subr.mxu0 0.0
    %1560 = vmatpush1.xpose.msra.mxu0 0.0
    %1561 = vmatprep.subr.mxu0 0.0
    %1562 = vmatpush1.xpose.msra.mxu0 0.0
    %1563 = vmatprep.subr.mxu0 0.0
    %1564 = vmatpush1.xpose.msra.mxu0 0.0
    %1565 = vmatprep.subr.mxu0 0.0
    %1566 = vmatpush1.xpose.msra.mxu0 0.0
    %1567 = vmatprep.subr.mxu0 0.0
    %1568 = vmatpush1.xpose.msra.mxu0 0.0
    %1569 = vmatprep.subr.mxu0 0.0
    %1570 = vmatpush1.xpose.msra.mxu0 0.0
    %1571 = vmatprep.subr.mxu0 0.0
    %1572 = vmatpush1.xpose.msra.mxu0 0.0
    %1573 = vmatprep.subr.mxu0 0.0
    %1574 = vmatpush1.xpose.msra.mxu0 0.0
    %1575 = vmatprep.subr.mxu0 0.0
    %1576 = vmatpush1.xpose.msra.mxu0 0.0
    %1577 = vmatprep.subr.mxu0 0.0
    %1578 = vmatpush1.xpose.msra.mxu0 0.0
    %1579 = vmatprep.subr.mxu0 0.0
    %1580 = vmatpush1.xpose.msra.mxu0 0.0
    %1581 = vmatprep.subr.mxu0 0.0
    %1582 = vmatpush1.xpose.msra.mxu0 0.0
    %1583 = vmatprep.mubr.f32.mxu0 0.0
    %1584 = vmatmul.mubr.f32.gmra.mrb[0].mxu0 %v1515
    %v1585 = vpop.f32.mrb[0].mxu0
    %v1586 = vadd.f32 0.0, %v1585
    %v1587 = vpop.f32.mrb[0].mxu0
    %1588 = vdwg.mxu0
    %v1589 = vmul.f32 %v1586, 0.25
    %v1590 = vadd.f32 %v1589, %v239
    %v1591 = vsel %vm241, %v1590, -inf
    %1592 = vmax.xlane.f32.xlu0 %v1591
    %v1593 = vpop.xlane.xlu0 %1592
    %v1594 = vsub.f32 %v1590, %v1593
    %v1595 = vmul.f32 %v1594, 1.442695
    %v1596 = vpow.pop %v1595
    %v1597 = vsel %vm241, %v1596, 0.0
    %1598 = vadd.xlane.f32.xlu0 %v1597
    %v1599 = vpop.xlane.xlu0 %1598
    %v1600 = vrcp.pop %v1599
    %v1601 = vmul.f32 %v1596, %v1600
    %1602 = vrot.lane.b32.xlu0 %v1504, 64
    %v1603 = vpop.permute.xlu0 %1602
    %v1606 = vsel %vm241, %v1601, 0
    %1608 = vmatprep.subr.mxu0 0.0
    %1609 = vmatpush1.msra.mxu0 %v1603
    %1610 = vmatprep.subr.mxu0 0.0
    %1611 = vmatpush1.msra.mxu0 0.0
    %1612 = vmatprep.subr.mxu0 0.0
    %1613 = vmatpush1.msra.mxu0 0.0
    %1614 = vmatprep.subr.mxu0 0.0
    %1615 = vmatpush1.msra.mxu0 0.0
    %1616 = vmatprep.subr.mxu0 0.0
    %1617 = vmatpush1.msra.mxu0 0.0
    %1618 = vmatprep.subr.mxu0 0.0
    %1619 = vmatpush1.msra.mxu0 0.0
    %1620 = vmatprep.subr.mxu0 0.0
    %1621 = vmatpush1.msra.mxu0 0.0
    %1622 = vmatprep.subr.mxu0 0.0
    %1623 = vmatpush1.msra.mxu0 0.0
    %1624 = vmatprep.subr.mxu0 0.0
    %1625 = vmatpush1.msra.mxu0 0.0
    %1626 = vmatprep.subr.mxu0 0.0
    %1627 = vmatpush1.msra.mxu0 0.0
    %1628 = vmatprep.subr.mxu0 0.0
    %1629 = vmatpush1.msra.mxu0 0.0
    %1630 = vmatprep.subr.mxu0 0.0
    %1631 = vmatpush1.msra.mxu0 0.0
    %1632 = vmatprep.subr.mxu0 0.0
    %1633 = vmatpush1.msra.mxu0 0.0
    %1634 = vmatprep.subr.mxu0 0.0
    %1635 = vmatpush1.msra.mxu0 0.0
    %1636 = vmatprep.subr.mxu0 0.0
    %1637 = vmatpush1.msra.mxu0 0.0
    %1638 = vmatprep.subr.mxu0 0.0
    %1639 = vmatpush1.msra.mxu0 0.0
    %1640 = vmatprep.subr.mxu0 0.0
    %1641 = vmatpush1.msra.mxu0 0.0
    %1642 = vmatprep.subr.mxu0 0.0
    %1643 = vmatpush1.msra.mxu0 0.0
    %1644 = vmatprep.subr.mxu0 0.0
    %1645 = vmatpush1.msra.mxu0 0.0
    %1646 = vmatprep.subr.mxu0 0.0
    %1647 = vmatpush1.msra.mxu0 0.0
    %1648 = vmatprep.subr.mxu0 0.0
    %1649 = vmatpush1.msra.mxu0 0.0
    %1650 = vmatprep.subr.mxu0 0.0
    %1651 = vmatpush1.msra.mxu0 0.0
    %1652 = vmatprep.subr.mxu0 0.0
    %1653 = vmatpush1.msra.mxu0 0.0
    %1654 = vmatprep.subr.mxu0 0.0
    %1655 = vmatpush1.msra.mxu0 0.0
    %1656 = vmatprep.subr.mxu0 0.0
    %1657 = vmatpush1.msra.mxu0 0.0
    %1658 = vmatprep.subr.mxu0 0.0
    %1659 = vmatpush1.msra.mxu0 0.0
    %1660 = vmatprep.subr.mxu0 0.0
    %1661 = vmatpush1.msra.mxu0 0.0
    %1662 = vmatprep.subr.mxu0 0.0
    %1663 = vmatpush1.msra.mxu0 0.0
    %1664 = vmatprep.subr.mxu0 0.0
    %1665 = vmatpush1.msra.mxu0 0.0
    %1666 = vmatprep.subr.mxu0 0.0
    %1667 = vmatpush1.msra.mxu0 0.0
    %1668 = vmatprep.subr.mxu0 0.0
    %1669 = vmatpush1.msra.mxu0 0.0
    %1670 = vmatprep.subr.mxu0 0.0
    %1671 = vmatpush1.msra.mxu0 0.0
    %1672 = vmatprep.mubr.f32.mxu0 0.0
    %1673 = vmatmul.mubr.f32.gmra.mrb[0].mxu0 %v1606
    %v1674 = vpop.f32.mrb[0].mxu0
    %v1675 = vadd.f32 0.0, %v1674
    %v1676 = vpop.f32.mrb[0].mxu0
    %1677 = vdwg.mxu0
    %1678 = vrot.lane.b32.xlu0 %v1504, 112
    %v1679 = vpop.permute.xlu0 %1678
    %1680 = vrot.lane.b32.xlu0 %v1504, 80
    %v1681 = vpop.permute.xlu0 %1680
    %v1682 = vsel %vm160, %v1679, 0
    %v1684 = vsel %vm160, %v1681, 0
    %1686 = vmatprep.subr.mxu0 0.0
    %1687 = vmatpush1.xpose.msra.mxu0 %v1684
    %1688 = vmatprep.subr.mxu0 0.0
    %1689 = vmatpush1.xpose.msra.mxu0 0.0
    %1690 = vmatprep.subr.mxu0 0.0
    %1691 = vmatpush1.xpose.msra.mxu0 0.0
    %1692 = vmatprep.subr.mxu0 0.0
    %1693 = vmatpush1.xpose.msra.mxu0 0.0
    %1694 = vmatprep.subr.mxu0 0.0
    %1695 = vmatpush1.xpose.msra.mxu0 0.0
    %1696 = vmatprep.subr.mxu0 0.0
    %1697 = vmatpush1.xpose.msra.mxu0 0.0
    %1698 = vmatprep.subr.mxu0 0.0
    %1699 = vmatpush1.xpose.msra.mxu0 0.0
    %1700 = vmatprep.subr.mxu0 0.0
    %1701 = vmatpush1.xpose.msra.mxu0 0.0
    %1702 = vmatprep.subr.mxu0 0.0
    %1703 = vmatpush1.xpose.msra.mxu0 0.0
    %1704 = vmatprep.subr.mxu0 0.0
    %1705 = vmatpush1.xpose.msra.mxu0 0.0
    %1706 = vmatprep.subr.mxu0 0.0
    %1707 = vmatpush1.xpose.msra.mxu0 0.0
    %1708 = vmatprep.subr.mxu0 0.0
    %1709 = vmatpush1.xpose.msra.mxu0 0.0
    %1710 = vmatprep.subr.mxu0 0.0
    %1711 = vmatpush1.xpose.msra.mxu0 0.0
    %1712 = vmatprep.subr.mxu0 0.0
    %1713 = vmatpush1.xpose.msra.mxu0 0.0
    %1714 = vmatprep.subr.mxu0 0.0
    %1715 = vmatpush1.xpose.msra.mxu0 0.0
    %1716 = vmatprep.subr.mxu0 0.0
    %1717 = vmatpush1.xpose.msra.mxu0 0.0
    %1718 = vmatprep.subr.mxu0 0.0
    %1719 = vmatpush1.xpose.msra.mxu0 0.0
    %1720 = vmatprep.subr.mxu0 0.0
    %1721 = vmatpush1.xpose.msra.mxu0 0.0
    %1722 = vmatprep.subr.mxu0 0.0
    %1723 = vmatpush1.xpose.msra.mxu0 0.0
    %1724 = vmatprep.subr.mxu0 0.0
    %1725 = vmatpush1.xpose.msra.mxu0 0.0
    %1726 = vmatprep.subr.mxu0 0.0
    %1727 = vmatpush1.xpose.msra.mxu0 0.0
    %1728 = vmatprep.subr.mxu0 0.0
    %1729 = vmatpush1.xpose.msra.mxu0 0.0
    %1730 = vmatprep.subr.mxu0 0.0
    %1731 = vmatpush1.xpose.msra.mxu0 0.0
    %1732 = vmatprep.subr.mxu0 0.0
    %1733 = vmatpush1.xpose.msra.mxu0 0.0
    %1734 = vmatprep.subr.mxu0 0.0
    %1735 = vmatpush1.xpose.msra.mxu0 0.0
    %1736 = vmatprep.subr.mxu0 0.0
    %1737 = vmatpush1.xpose.msra.mxu0 0.0
    %1738 = vmatprep.subr.mxu0 0.0
    %1739 = vmatpush1.xpose.msra.mxu0 0.0
    %1740 = vmatprep.subr.mxu0 0.0
    %1741 = vmatpush1.xpose.msra.mxu0 0.0
    %1742 = vmatprep.subr.mxu0 0.0
    %1743 = vmatpush1.xpose.msra.mxu0 0.0
    %1744 = vmatprep.subr.mxu0 0.0
    %1745 = vmatpush1.xpose.msra.mxu0 0.0
    %1746 = vmatprep.subr.mxu0 0.0
    %1747 = vmatpush1.xpose.msra.mxu0 0.0
    %1748 = vmatprep.subr.mxu0 0.0
    %1749 = vmatpush1.xpose.msra.mxu0 0.0
    %1750 = vmatprep.mubr.f32.mxu0 0.0
    %1751 = vmatmul.mubr.f32.gmra.mrb[0].mxu0 %v1682
    %v1752 = vpop.f32.mrb[0].mxu0
    %v1753 = vadd.f32 0.0, %v1752
    %v1754 = vpop.f32.mrb[0].mxu0
    %1755 = vdwg.mxu0
    %v1756 = vmul.f32 %v1753, 0.25
    %v1757 = vadd.f32 %v1756, %v239
    %v1758 = vsel %vm241, %v1757, -inf
    %1759 = vmax.xlane.f32.xlu0 %v1758
    %v1760 = vpop.xlane.xlu0 %1759
    %v1761 = vsub.f32 %v1757, %v1760
    %v1762 = vmul.f32 %v1761, 1.442695
    %v1763 = vpow.pop %v1762
    %v1764 = vsel %vm241, %v1763, 0.0
    %1765 = vadd.xlane.f32.xlu0 %v1764
    %v1766 = vpop.xlane.xlu0 %1765
    %v1767 = vrcp.pop %v1766
    %v1768 = vmul.f32 %v1763, %v1767
    %1769 = vrot.lane.b32.xlu0 %v1504, 48
    %v1770 = vpop.permute.xlu0 %1769
    %v1773 = vsel %vm241, %v1768, 0
    %1775 = vmatprep.subr.mxu0 0.0
    %1776 = vmatpush1.msra.mxu0 %v1770
    %1777 = vmatprep.subr.mxu0 0.0
    %1778 = vmatpush1.msra.mxu0 0.0
    %1779 = vmatprep.subr.mxu0 0.0
    %1780 = vmatpush1.msra.mxu0 0.0
    %1781 = vmatprep.subr.mxu0 0.0
    %1782 = vmatpush1.msra.mxu0 0.0
    %1783 = vmatprep.subr.mxu0 0.0
    %1784 = vmatpush1.msra.mxu0 0.0
    %1785 = vmatprep.subr.mxu0 0.0
    %1786 = vmatpush1.msra.mxu0 0.0
    %1787 = vmatprep.subr.mxu0 0.0
    %1788 = vmatpush1.msra.mxu0 0.0
    %1789 = vmatprep.subr.mxu0 0.0
    %1790 = vmatpush1.msra.mxu0 0.0
    %1791 = vmatprep.subr.mxu0 0.0
    %1792 = vmatpush1.msra.mxu0 0.0
    %1793 = vmatprep.subr.mxu0 0.0
    %1794 = vmatpush1.msra.mxu0 0.0
    %1795 = vmatprep.subr.mxu0 0.0
    %1796 = vmatpush1.msra.mxu0 0.0
    %1797 = vmatprep.subr.mxu0 0.0
    %1798 = vmatpush1.msra.mxu0 0.0
    %1799 = vmatprep.subr.mxu0 0.0
    %1800 = vmatpush1.msra.mxu0 0.0
    %1801 = vmatprep.subr.mxu0 0.0
    %1802 = vmatpush1.msra.mxu0 0.0
    %1803 = vmatprep.subr.mxu0 0.0
    %1804 = vmatpush1.msra.mxu0 0.0
    %1805 = vmatprep.subr.mxu0 0.0
    %1806 = vmatpush1.msra.mxu0 0.0
    %1807 = vmatprep.subr.mxu0 0.0
    %1808 = vmatpush1.msra.mxu0 0.0
    %1809 = vmatprep.subr.mxu0 0.0
    %1810 = vmatpush1.msra.mxu0 0.0
    %1811 = vmatprep.subr.mxu0 0.0
    %1812 = vmatpush1.msra.mxu0 0.0
    %1813 = vmatprep.subr.mxu0 0.0
    %1814 = vmatpush1.msra.mxu0 0.0
    %1815 = vmatprep.subr.mxu0 0.0
    %1816 = vmatpush1.msra.mxu0 0.0
    %1817 = vmatprep.subr.mxu0 0.0
    %1818 = vmatpush1.msra.mxu0 0.0
    %1819 = vmatprep.subr.mxu0 0.0
    %1820 = vmatpush1.msra.mxu0 0.0
    %1821 = vmatprep.subr.mxu0 0.0
    %1822 = vmatpush1.msra.mxu0 0.0
    %1823 = vmatprep.subr.mxu0 0.0
    %1824 = vmatpush1.msra.mxu0 0.0
    %1825 = vmatprep.subr.mxu0 0.0
    %1826 = vmatpush1.msra.mxu0 0.0
    %1827 = vmatprep.subr.mxu0 0.0
    %1828 = vmatpush1.msra.mxu0 0.0
    %1829 = vmatprep.subr.mxu0 0.0
    %1830 = vmatpush1.msra.mxu0 0.0
    %1831 = vmatprep.subr.mxu0 0.0
    %1832 = vmatpush1.msra.mxu0 0.0
    %1833 = vmatprep.subr.mxu0 0.0
    %1834 = vmatpush1.msra.mxu0 0.0
    %1835 = vmatprep.subr.mxu0 0.0
    %1836 = vmatpush1.msra.mxu0 0.0
    %1837 = vmatprep.subr.mxu0 0.0
    %1838 = vmatpush1.msra.mxu0 0.0
    %1839 = vmatprep.mubr.f32.mxu0 0.0
    %1840 = vmatmul.mubr.f32.gmra.mrb[0].mxu0 %v1773
    %v1841 = vpop.f32.mrb[0].mxu0
    %v1842 = vadd.f32 0.0, %v1841
    %v1843 = vpop.f32.mrb[0].mxu0
    %1844 = vdwg.mxu0
    %v1846 = vsel %vm160, %v1842, 0
    %1848 = vmatprep.subr.mxu0 0.0
    %1849 = vmatpush1.msra.mxu0 %v1409
    %1850 = vmatprep.subr.mxu0 0.0
    %1851 = vmatpush1.msra.mxu0 %v1410
    %1852 = vmatprep.subr.mxu0 0.0
    %1853 = vmatpush1.msra.mxu0 0.0
    %1854 = vmatprep.subr.mxu0 0.0
    %1855 = vmatpush1.msra.mxu0 0.0
    %1856 = vmatprep.subr.mxu0 0.0
    %1857 = vmatpush1.msra.mxu0 0.0
    %1858 = vmatprep.subr.mxu0 0.0
    %1859 = vmatpush1.msra.mxu0 0.0
    %1860 = vmatprep.subr.mxu0 0.0
    %1861 = vmatpush1.msra.mxu0 0.0
    %1862 = vmatprep.subr.mxu0 0.0
    %1863 = vmatpush1.msra.mxu0 0.0
    %1864 = vmatprep.subr.mxu0 0.0
    %1865 = vmatpush1.msra.mxu0 0.0
    %1866 = vmatprep.subr.mxu0 0.0
    %1867 = vmatpush1.msra.mxu0 0.0
    %1868 = vmatprep.subr.mxu0 0.0
    %1869 = vmatpush1.msra.mxu0 0.0
    %1870 = vmatprep.subr.mxu0 0.0
    %1871 = vmatpush1.msra.mxu0 0.0
    %1872 = vmatprep.subr.mxu0 0.0
    %1873 = vmatpush1.msra.mxu0 0.0
    %1874 = vmatprep.subr.mxu0 0.0
    %1875 = vmatpush1.msra.mxu0 0.0
    %1876 = vmatprep.subr.mxu0 0.0
    %1877 = vmatpush1.msra.mxu0 0.0
    %1878 = vmatprep.subr.mxu0 0.0
    %1879 = vmatpush1.msra.mxu0 0.0
    %1880 = vmatprep.subr.mxu0 0.0
    %1881 = vmatpush1.msra.mxu0 0.0
    %1882 = vmatprep.subr.mxu0 0.0
    %1883 = vmatpush1.msra.mxu0 0.0
    %1884 = vmatprep.subr.mxu0 0.0
    %1885 = vmatpush1.msra.mxu0 0.0
    %1886 = vmatprep.subr.mxu0 0.0
    %1887 = vmatpush1.msra.mxu0 0.0
    %1888 = vmatprep.subr.mxu0 0.0
    %1889 = vmatpush1.msra.mxu0 0.0
    %1890 = vmatprep.subr.mxu0 0.0
    %1891 = vmatpush1.msra.mxu0 0.0
    %1892 = vmatprep.subr.mxu0 0.0
    %1893 = vmatpush1.msra.mxu0 0.0
    %1894 = vmatprep.subr.mxu0 0.0
    %1895 = vmatpush1.msra.mxu0 0.0
    %1896 = vmatprep.subr.mxu0 0.0
    %1897 = vmatpush1.msra.mxu0 0.0
    %1898 = vmatprep.subr.mxu0 0.0
    %1899 = vmatpush1.msra.mxu0 0.0
    %1900 = vmatprep.subr.mxu0 0.0
    %1901 = vmatpush1.msra.mxu0 0.0
    %1902 = vmatprep.subr.mxu0 0.0
    %1903 = vmatpush1.msra.mxu0 0.0
    %1904 = vmatprep.subr.mxu0 0.0
    %1905 = vmatpush1.msra.mxu0 0.0
    %1906 = vmatprep.subr.mxu0 0.0
    %1907 = vmatpush1.msra.mxu0 0.0
    %1908 = vmatprep.subr.mxu0 0.0
    %1909 = vmatpush1.msra.mxu0 0.0
    %1910 = vmatprep.subr.mxu0 0.0
    %1911 = vmatpush1.msra.mxu0 0.0
    %1912 = vmatprep.mubr.f32.mxu0 0.0
    %1913 = vmatmul.mubr.f32.gmra.mrb[0].mxu0 %v1846
    %v1914 = vpop.f32.mrb[0].mxu0
    %v1915 = vadd.f32 0.0, %v1914
    %v1916 = vpop.f32.mrb[0].mxu0
    %1917 = vdwg.mxu0
    %v1919 = vsel %vm160, %v1675, 0
    %1921 = vmatprep.subr.mxu0 0.0
    %1922 = vmatpush1.msra.mxu0 %v1407
    %1923 = vmatprep.subr.mxu0 0.0
    %1924 = vmatpush1.msra.mxu0 %v1408
    %1925 = vmatprep.subr.mxu0 0.0
    %1926 = vmatpush1.msra.mxu0 0.0
    %1927 = vmatprep.subr.mxu0 0.0
    %1928 = vmatpush1.msra.mxu0 0.0
    %1929 = vmatprep.subr.mxu0 0.0
    %1930 = vmatpush1.msra.mxu0 0.0
    %1931 = vmatprep.subr.mxu0 0.0
    %1932 = vmatpush1.msra.mxu0 0.0
    %1933 = vmatprep.subr.mxu0 0.0
    %1934 = vmatpush1.msra.mxu0 0.0
    %1935 = vmatprep.subr.mxu0 0.0
    %1936 = vmatpush1.msra.mxu0 0.0
    %1937 = vmatprep.subr.mxu0 0.0
    %1938 = vmatpush1.msra.mxu0 0.0
    %1939 = vmatprep.subr.mxu0 0.0
    %1940 = vmatpush1.msra.mxu0 0.0
    %1941 = vmatprep.subr.mxu0 0.0
    %1942 = vmatpush1.msra.mxu0 0.0
    %1943 = vmatprep.subr.mxu0 0.0
    %1944 = vmatpush1.msra.mxu0 0.0
    %1945 = vmatprep.subr.mxu0 0.0
    %1946 = vmatpush1.msra.mxu0 0.0
    %1947 = vmatprep.subr.mxu0 0.0
    %1948 = vmatpush1.msra.mxu0 0.0
    %1949 = vmatprep.subr.mxu0 0.0
    %1950 = vmatpush1.msra.mxu0 0.0
    %1951 = vmatprep.subr.mxu0 0.0
    %1952 = vmatpush1.msra.mxu0 0.0
    %1953 = vmatprep.subr.mxu0 0.0
    %1954 = vmatpush1.msra.mxu0 0.0
    %1955 = vmatprep.subr.mxu0 0.0
    %1956 = vmatpush1.msra.mxu0 0.0
    %1957 = vmatprep.subr.mxu0 0.0
    %1958 = vmatpush1.msra.mxu0 0.0
    %1959 = vmatprep.subr.mxu0 0.0
    %1960 = vmatpush1.msra.mxu0 0.0
    %1961 = vmatprep.subr.mxu0 0.0
    %1962 = vmatpush1.msra.mxu0 0.0
    %1963 = vmatprep.subr.mxu0 0.0
    %1964 = vmatpush1.msra.mxu0 0.0
    %1965 = vmatprep.subr.mxu0 0.0
    %1966 = vmatpush1.msra.mxu0 0.0
    %1967 = vmatprep.subr.mxu0 0.0
    %1968 = vmatpush1.msra.mxu0 0.0
    %1969 = vmatprep.subr.mxu0 0.0
    %1970 = vmatpush1.msra.mxu0 0.0
    %1971 = vmatprep.subr.mxu0 0.0
    %1972 = vmatpush1.msra.mxu0 0.0
    %1973 = vmatprep.subr.mxu0 0.0
    %1974 = vmatpush1.msra.mxu0 0.0
    %1975 = vmatprep.subr.mxu0 0.0
    %1976 = vmatpush1.msra.mxu0 0.0
    %1977 = vmatprep.subr.mxu0 0.0
    %1978 = vmatpush1.msra.mxu0 0.0
    %1979 = vmatprep.subr.mxu0 0.0
    %1980 = vmatpush1.msra.mxu0 0.0
    %1981 = vmatprep.subr.mxu0 0.0
    %1982 = vmatpush1.msra.mxu0 0.0
    %1983 = vmatprep.subr.mxu0 0.0
    %1984 = vmatpush1.msra.mxu0 0.0
    %1985 = vmatprep.mubr.f32.mxu0 0.0
    %1986 = vmatmul.mubr.f32.gmra.mrb[0].mxu0 %v1919
    %v1987 = vpop.f32.mrb[0].mxu0
    %v1988 = vadd.f32 %v1915, %v1987
    %v1989 = vpop.f32.mrb[0].mxu0
    %1990 = vdwg.mxu0
    %1992 = vrot.lane.b32.xlu0 %v1509, 96
    %v1993 = vpop.permute.xlu0 %1992
    %v1994 = vsel %vm160, %v1509, 0
    %v1996 = vsel %vm160, %v1993, 0
    %1998 = vmatprep.subr.mxu0 0.0
    %1999 = vmatpush1.xpose.msra.mxu0 %v1996
    %2000 = vmatprep.subr.mxu0 0.0
    %2001 = vmatpush1.xpose.msra.mxu0 0.0
    %2002 = vmatprep.subr.mxu0 0.0
    %2003 = vmatpush1.xpose.msra.mxu0 0.0
    %2004 = vmatprep.subr.mxu0 0.0
    %2005 = vmatpush1.xpose.msra.mxu0 0.0
    %2006 = vmatprep.subr.mxu0 0.0
    %2007 = vmatpush1.xpose.msra.mxu0 0.0
    %2008 = vmatprep.subr.mxu0 0.0
    %2009 = vmatpush1.xpose.msra.mxu0 0.0
    %2010 = vmatprep.subr.mxu0 0.0
    %2011 = vmatpush1.xpose.msra.mxu0 0.0
    %2012 = vmatprep.subr.mxu0 0.0
    %2013 = vmatpush1.xpose.msra.mxu0 0.0
    %2014 = vmatprep.subr.mxu0 0.0
    %2015 = vmatpush1.xpose.msra.mxu0 0.0
    %2016 = vmatprep.subr.mxu0 0.0
    %2017 = vmatpush1.xpose.msra.mxu0 0.0
    %2018 = vmatprep.subr.mxu0 0.0
    %2019 = vmatpush1.xpose.msra.mxu0 0.0
    %2020 = vmatprep.subr.mxu0 0.0
    %2021 = vmatpush1.xpose.msra.mxu0 0.0
    %2022 = vmatprep.subr.mxu0 0.0
    %2023 = vmatpush1.xpose.msra.mxu0 0.0
    %2024 = vmatprep.subr.mxu0 0.0
    %2025 = vmatpush1.xpose.msra.mxu0 0.0
    %2026 = vmatprep.subr.mxu0 0.0
    %2027 = vmatpush1.xpose.msra.mxu0 0.0
    %2028 = vmatprep.subr.mxu0 0.0
    %2029 = vmatpush1.xpose.msra.mxu0 0.0
    %2030 = vmatprep.subr.mxu0 0.0
    %2031 = vmatpush1.xpose.msra.mxu0 0.0
    %2032 = vmatprep.subr.mxu0 0.0
    %2033 = vmatpush1.xpose.msra.mxu0 0.0
    %2034 = vmatprep.subr.mxu0 0.0
    %2035 = vmatpush1.xpose.msra.mxu0 0.0
    %2036 = vmatprep.subr.mxu0 0.0
    %2037 = vmatpush1.xpose.msra.mxu0 0.0
    %2038 = vmatprep.subr.mxu0 0.0
    %2039 = vmatpush1.xpose.msra.mxu0 0.0
    %2040 = vmatprep.subr.mxu0 0.0
    %2041 = vmatpush1.xpose.msra.mxu0 0.0
    %2042 = vmatprep.subr.mxu0 0.0
    %2043 = vmatpush1.xpose.msra.mxu0 0.0
    %2044 = vmatprep.subr.mxu0 0.0
    %2045 = vmatpush1.xpose.msra.mxu0 0.0
    %2046 = vmatprep.subr.mxu0 0.0
    %2047 = vmatpush1.xpose.msra.mxu0 0.0
    %2048 = vmatprep.subr.mxu0 0.0
    %2049 = vmatpush1.xpose.msra.mxu0 0.0
    %2050 = vmatprep.subr.mxu0 0.0
    %2051 = vmatpush1.xpose.msra.mxu0 0.0
    %2052 = vmatprep.subr.mxu0 0.0
    %2053 = vmatpush1.xpose.msra.mxu0 0.0
    %2054 = vmatprep.subr.mxu0 0.0
    %2055 = vmatpush1.xpose.msra.mxu0 0.0
    %2056 = vmatprep.subr.mxu0 0.0
    %2057 = vmatpush1.xpose.msra.mxu0 0.0
    %2058 = vmatprep.subr.mxu0 0.0
    %2059 = vmatpush1.xpose.msra.mxu0 0.0
    %2060 = vmatprep.subr.mxu0 0.0
    %2061 = vmatpush1.xpose.msra.mxu0 0.0
    %2062 = vmatprep.mubr.f32.mxu0 0.0
    %2063 = vmatmul.mubr.f32.gmra.mrb[0].mxu0 %v1994
    %v2064 = vpop.f32.mrb[0].mxu0
    %v2065 = vadd.f32 0.0, %v2064
    %v2066 = vpop.f32.mrb[0].mxu0
    %2067 = vdwg.mxu0
    %v2068 = vmul.f32 %v2065, 0.25
    %v2069 = vadd.f32 %v2068, %v723
    %v2070 = vsel %vm241, %v2069, -inf
    %2071 = vmax.xlane.f32.xlu0 %v2070
    %v2072 = vpop.xlane.xlu0 %2071
    %v2073 = vsub.f32 %v2069, %v2072
    %v2074 = vmul.f32 %v2073, 1.442695
    %v2075 = vpow.pop %v2074
    %v2076 = vsel %vm241, %v2075, 0.0
    %2077 = vadd.xlane.f32.xlu0 %v2076
    %v2078 = vpop.xlane.xlu0 %2077
    %v2079 = vrcp.pop %v2078
    %v2080 = vmul.f32 %v2075, %v2079
    %2081 = vrot.lane.b32.xlu0 %v1509, 64
    %v2082 = vpop.permute.xlu0 %2081
    %v2085 = vsel %vm241, %v2080, 0
    %2087 = vmatprep.subr.mxu0 0.0
    %2088 = vmatpush1.msra.mxu0 %v2082
    %2089 = vmatprep.subr.mxu0 0.0
    %2090 = vmatpush1.msra.mxu0 0.0
    %2091 = vmatprep.subr.mxu0 0.0
    %2092 = vmatpush1.msra.mxu0 0.0
    %2093 = vmatprep.subr.mxu0 0.0
    %2094 = vmatpush1.msra.mxu0 0.0
    %2095 = vmatprep.subr.mxu0 0.0
    %2096 = vmatpush1.msra.mxu0 0.0
    %2097 = vmatprep.subr.mxu0 0.0
    %2098 = vmatpush1.msra.mxu0 0.0
    %2099 = vmatprep.subr.mxu0 0.0
    %2100 = vmatpush1.msra.mxu0 0.0
    %2101 = vmatprep.subr.mxu0 0.0
    %2102 = vmatpush1.msra.mxu0 0.0
    %2103 = vmatprep.subr.mxu0 0.0
    %2104 = vmatpush1.msra.mxu0 0.0
    %2105 = vmatprep.subr.mxu0 0.0
    %2106 = vmatpush1.msra.mxu0 0.0
    %2107 = vmatprep.subr.mxu0 0.0
    %2108 = vmatpush1.msra.mxu0 0.0
    %2109 = vmatprep.subr.mxu0 0.0
    %2110 = vmatpush1.msra.mxu0 0.0
    %2111 = vmatprep.subr.mxu0 0.0
    %2112 = vmatpush1.msra.mxu0 0.0
    %2113 = vmatprep.subr.mxu0 0.0
    %2114 = vmatpush1.msra.mxu0 0.0
    %2115 = vmatprep.subr.mxu0 0.0
    %2116 = vmatpush1.msra.mxu0 0.0
    %2117 = vmatprep.subr.mxu0 0.0
    %2118 = vmatpush1.msra.mxu0 0.0
    %2119 = vmatprep.subr.mxu0 0.0
    %2120 = vmatpush1.msra.mxu0 0.0
    %2121 = vmatprep.subr.mxu0 0.0
    %2122 = vmatpush1.msra.mxu0 0.0
    %2123 = vmatprep.subr.mxu0 0.0
    %2124 = vmatpush1.msra.mxu0 0.0
    %2125 = vmatprep.subr.mxu0 0.0
    %2126 = vmatpush1.msra.mxu0 0.0
    %2127 = vmatprep.subr.mxu0 0.0
    %2128 = vmatpush1.msra.mxu0 0.0
    %2129 = vmatprep.subr.mxu0 0.0
    %2130 = vmatpush1.msra.mxu0 0.0
    %2131 = vmatprep.subr.mxu0 0.0
    %2132 = vmatpush1.msra.mxu0 0.0
    %2133 = vmatprep.subr.mxu0 0.0
    %2134 = vmatpush1.msra.mxu0 0.0
    %2135 = vmatprep.subr.mxu0 0.0
    %2136 = vmatpush1.msra.mxu0 0.0
    %2137 = vmatprep.subr.mxu0 0.0
    %2138 = vmatpush1.msra.mxu0 0.0
    %2139 = vmatprep.subr.mxu0 0.0
    %2140 = vmatpush1.msra.mxu0 0.0
    %2141 = vmatprep.subr.mxu0 0.0
    %2142 = vmatpush1.msra.mxu0 0.0
    %2143 = vmatprep.subr.mxu0 0.0
    %2144 = vmatpush1.msra.mxu0 0.0
    %2145 = vmatprep.subr.mxu0 0.0
    %2146 = vmatpush1.msra.mxu0 0.0
    %2147 = vmatprep.subr.mxu0 0.0
    %2148 = vmatpush1.msra.mxu0 0.0
    %2149 = vmatprep.subr.mxu0 0.0
    %2150 = vmatpush1.msra.mxu0 0.0
    %2151 = vmatprep.mubr.f32.mxu0 0.0
    %2152 = vmatmul.mubr.f32.gmra.mrb[0].mxu0 %v2085
    %v2153 = vpop.f32.mrb[0].mxu0
    %v2154 = vadd.f32 0.0, %v2153
    %v2155 = vpop.f32.mrb[0].mxu0
    %2156 = vdwg.mxu0
    %2157 = vrot.lane.b32.xlu0 %v1509, 112
    %v2158 = vpop.permute.xlu0 %2157
    %2159 = vrot.lane.b32.xlu0 %v1509, 80
    %v2160 = vpop.permute.xlu0 %2159
    %v2161 = vsel %vm160, %v2158, 0
    %v2163 = vsel %vm160, %v2160, 0
    %2165 = vmatprep.subr.mxu0 0.0
    %2166 = vmatpush1.xpose.msra.mxu0 %v2163
    %2167 = vmatprep.subr.mxu0 0.0
    %2168 = vmatpush1.xpose.msra.mxu0 0.0
    %2169 = vmatprep.subr.mxu0 0.0
    %2170 = vmatpush1.xpose.msra.mxu0 0.0
    %2171 = vmatprep.subr.mxu0 0.0
    %2172 = vmatpush1.xpose.msra.mxu0 0.0
    %2173 = vmatprep.subr.mxu0 0.0
    %2174 = vmatpush1.xpose.msra.mxu0 0.0
    %2175 = vmatprep.subr.mxu0 0.0
    %2176 = vmatpush1.xpose.msra.mxu0 0.0
    %2177 = vmatprep.subr.mxu0 0.0
    %2178 = vmatpush1.xpose.msra.mxu0 0.0
    %2179 = vmatprep.subr.mxu0 0.0
    %2180 = vmatpush1.xpose.msra.mxu0 0.0
    %2181 = vmatprep.subr.mxu0 0.0
    %2182 = vmatpush1.xpose.msra.mxu0 0.0
    %2183 = vmatprep.subr.mxu0 0.0
    %2184 = vmatpush1.xpose.msra.mxu0 0.0
    %2185 = vmatprep.subr.mxu0 0.0
    %2186 = vmatpush1.xpose.msra.mxu0 0.0
    %2187 = vmatprep.subr.mxu0 0.0
    %2188 = vmatpush1.xpose.msra.mxu0 0.0
    %2189 = vmatprep.subr.mxu0 0.0
    %2190 = vmatpush1.xpose.msra.mxu0 0.0
    %2191 = vmatprep.subr.mxu0 0.0
    %2192 = vmatpush1.xpose.msra.mxu0 0.0
    %2193 = vmatprep.subr.mxu0 0.0
    %2194 = vmatpush1.xpose.msra.mxu0 0.0
    %2195 = vmatprep.subr.mxu0 0.0
    %2196 = vmatpush1.xpose.msra.mxu0 0.0
    %2197 = vmatprep.subr.mxu0 0.0
    %2198 = vmatpush1.xpose.msra.mxu0 0.0
    %2199 = vmatprep.subr.mxu0 0.0
    %2200 = vmatpush1.xpose.msra.mxu0 0.0
    %2201 = vmatprep.subr.mxu0 0.0
    %2202 = vmatpush1.xpose.msra.mxu0 0.0
    %2203 = vmatprep.subr.mxu0 0.0
    %2204 = vmatpush1.xpose.msra.mxu0 0.0
    %2205 = vmatprep.subr.mxu0 0.0
    %2206 = vmatpush1.xpose.msra.mxu0 0.0
    %2207 = vmatprep.subr.mxu0 0.0
    %2208 = vmatpush1.xpose.msra.mxu0 0.0
    %2209 = vmatprep.subr.mxu0 0.0
    %2210 = vmatpush1.xpose.msra.mxu0 0.0
    %2211 = vmatprep.subr.mxu0 0.0
    %2212 = vmatpush1.xpose.msra.mxu0 0.0
    %2213 = vmatprep.subr.mxu0 0.0
    %2214 = vmatpush1.xpose.msra.mxu0 0.0
    %2215 = vmatprep.subr.mxu0 0.0
    %2216 = vmatpush1.xpose.msra.mxu0 0.0
    %2217 = vmatprep.subr.mxu0 0.0
    %2218 = vmatpush1.xpose.msra.mxu0 0.0
    %2219 = vmatprep.subr.mxu0 0.0
    %2220 = vmatpush1.xpose.msra.mxu0 0.0
    %2221 = vmatprep.subr.mxu0 0.0
    %2222 = vmatpush1.xpose.msra.mxu0 0.0
    %2223 = vmatprep.subr.mxu0 0.0
    %2224 = vmatpush1.xpose.msra.mxu0 0.0
    %2225 = vmatprep.subr.mxu0 0.0
    %2226 = vmatpush1.xpose.msra.mxu0 0.0
    %2227 = vmatprep.subr.mxu0 0.0
    %2228 = vmatpush1.xpose.msra.mxu0 0.0
    %2229 = vmatprep.mubr.f32.mxu0 0.0
    %2230 = vmatmul.mubr.f32.gmra.mrb[0].mxu0 %v2161
    %v2231 = vpop.f32.mrb[0].mxu0
    %v2232 = vadd.f32 0.0, %v2231
    %v2233 = vpop.f32.mrb[0].mxu0
    %2234 = vdwg.mxu0
    %v2235 = vmul.f32 %v2232, 0.25
    %v2236 = vadd.f32 %v2235, %v723
    %v2237 = vsel %vm241, %v2236, -inf
    %2238 = vmax.xlane.f32.xlu0 %v2237
    %v2239 = vpop.xlane.xlu0 %2238
    %v2240 = vsub.f32 %v2236, %v2239
    %v2241 = vmul.f32 %v2240, 1.442695
    %v2242 = vpow.pop %v2241
    %v2243 = vsel %vm241, %v2242, 0.0
    %2244 = vadd.xlane.f32.xlu0 %v2243
    %v2245 = vpop.xlane.xlu0 %2244
    %v2246 = vrcp.pop %v2245
    %v2247 = vmul.f32 %v2242, %v2246
    %2248 = vrot.lane.b32.xlu0 %v1509, 48
    %v2249 = vpop.permute.xlu0 %2248
    %v2252 = vsel %vm241, %v2247, 0
    %2254 = vmatprep.subr.mxu0 0.0
    %2255 = vmatpush1.msra.mxu0 %v2249
    %2256 = vmatprep.subr.mxu0 0.0
    %2257 = vmatpush1.msra.mxu0 0.0
    %2258 = vmatprep.subr.mxu0 0.0
    %2259 = vmatpush1.msra.mxu0 0.0
    %2260 = vmatprep.subr.mxu0 0.0
    %2261 = vmatpush1.msra.mxu0 0.0
    %2262 = vmatprep.subr.mxu0 0.0
    %2263 = vmatpush1.msra.mxu0 0.0
    %2264 = vmatprep.subr.mxu0 0.0
    %2265 = vmatpush1.msra.mxu0 0.0
    %2266 = vmatprep.subr.mxu0 0.0
    %2267 = vmatpush1.msra.mxu0 0.0
    %2268 = vmatprep.subr.mxu0 0.0
    %2269 = vmatpush1.msra.mxu0 0.0
    %2270 = vmatprep.subr.mxu0 0.0
    %2271 = vmatpush1.msra.mxu0 0.0
    %2272 = vmatprep.subr.mxu0 0.0
    %2273 = vmatpush1.msra.mxu0 0.0
    %2274 = vmatprep.subr.mxu0 0.0
    %2275 = vmatpush1.msra.mxu0 0.0
    %2276 = vmatprep.subr.mxu0 0.0
    %2277 = vmatpush1.msra.mxu0 0.0
    %2278 = vmatprep.subr.mxu0 0.0
    %2279 = vmatpush1.msra.mxu0 0.0
    %2280 = vmatprep.subr.mxu0 0.0
    %2281 = vmatpush1.msra.mxu0 0.0
    %2282 = vmatprep.subr.mxu0 0.0
    %2283 = vmatpush1.msra.mxu0 0.0
    %2284 = vmatprep.subr.mxu0 0.0
    %2285 = vmatpush1.msra.mxu0 0.0
    %2286 = vmatprep.subr.mxu0 0.0
    %2287 = vmatpush1.msra.mxu0 0.0
    %2288 = vmatprep.subr.mxu0 0.0
    %2289 = vmatpush1.msra.mxu0 0.0
    %2290 = vmatprep.subr.mxu0 0.0
    %2291 = vmatpush1.msra.mxu0 0.0
    %2292 = vmatprep.subr.mxu0 0.0
    %2293 = vmatpush1.msra.mxu0 0.0
    %2294 = vmatprep.subr.mxu0 0.0
    %2295 = vmatpush1.msra.mxu0 0.0
    %2296 = vmatprep.subr.mxu0 0.0
    %2297 = vmatpush1.msra.mxu0 0.0
    %2298 = vmatprep.subr.mxu0 0.0
    %2299 = vmatpush1.msra.mxu0 0.0
    %2300 = vmatprep.subr.mxu0 0.0
    %2301 = vmatpush1.msra.mxu0 0.0
    %2302 = vmatprep.subr.mxu0 0.0
    %2303 = vmatpush1.msra.mxu0 0.0
    %2304 = vmatprep.subr.mxu0 0.0
    %2305 = vmatpush1.msra.mxu0 0.0
    %2306 = vmatprep.subr.mxu0 0.0
    %2307 = vmatpush1.msra.mxu0 0.0
    %2308 = vmatprep.subr.mxu0 0.0
    %2309 = vmatpush1.msra.mxu0 0.0
    %2310 = vmatprep.subr.mxu0 0.0
    %2311 = vmatpush1.msra.mxu0 0.0
    %2312 = vmatprep.subr.mxu0 0.0
    %2313 = vmatpush1.msra.mxu0 0.0
    %2314 = vmatprep.subr.mxu0 0.0
    %2315 = vmatpush1.msra.mxu0 0.0
    %2316 = vmatprep.subr.mxu0 0.0
    %2317 = vmatpush1.msra.mxu0 0.0
    %2318 = vmatprep.mubr.f32.mxu0 0.0
    %2319 = vmatmul.mubr.f32.gmra.mrb[0].mxu0 %v2252
    %v2320 = vpop.f32.mrb[0].mxu0
    %v2321 = vadd.f32 0.0, %v2320
    %v2322 = vpop.f32.mrb[0].mxu0
    %2323 = vdwg.mxu0
    %v2325 = vsel %vm160, %v2321, 0
    %2327 = vmatprep.subr.mxu0 0.0
    %2328 = vmatpush1.msra.mxu0 %v1409
    %2329 = vmatprep.subr.mxu0 0.0
    %2330 = vmatpush1.msra.mxu0 %v1410
    %2331 = vmatprep.subr.mxu0 0.0
    %2332 = vmatpush1.msra.mxu0 0.0
    %2333 = vmatprep.subr.mxu0 0.0
    %2334 = vmatpush1.msra.mxu0 0.0
    %2335 = vmatprep.subr.mxu0 0.0
    %2336 = vmatpush1.msra.mxu0 0.0
    %2337 = vmatprep.subr.mxu0 0.0
    %2338 = vmatpush1.msra.mxu0 0.0
    %2339 = vmatprep.subr.mxu0 0.0
    %2340 = vmatpush1.msra.mxu0 0.0
    %2341 = vmatprep.subr.mxu0 0.0
    %2342 = vmatpush1.msra.mxu0 0.0
    %2343 = vmatprep.subr.mxu0 0.0
    %2344 = vmatpush1.msra.mxu0 0.0
    %2345 = vmatprep.subr.mxu0 0.0
    %2346 = vmatpush1.msra.mxu0 0.0
    %2347 = vmatprep.subr.mxu0 0.0
    %2348 = vmatpush1.msra.mxu0 0.0
    %2349 = vmatprep.subr.mxu0 0.0
    %2350 = vmatpush1.msra.mxu0 0.0
    %2351 = vmatprep.subr.mxu0 0.0
    %2352 = vmatpush1.msra.mxu0 0.0
    %2353 = vmatprep.subr.mxu0 0.0
    %2354 = vmatpush1.msra.mxu0 0.0
    %2355 = vmatprep.subr.mxu0 0.0
    %2356 = vmatpush1.msra.mxu0 0.0
    %2357 = vmatprep.subr.mxu0 0.0
    %2358 = vmatpush1.msra.mxu0 0.0
    %2359 = vmatprep.subr.mxu0 0.0
    %2360 = vmatpush1.msra.mxu0 0.0
    %2361 = vmatprep.subr.mxu0 0.0
    %2362 = vmatpush1.msra.mxu0 0.0
    %2363 = vmatprep.subr.mxu0 0.0
    %2364 = vmatpush1.msra.mxu0 0.0
    %2365 = vmatprep.subr.mxu0 0.0
    %2366 = vmatpush1.msra.mxu0 0.0
    %2367 = vmatprep.subr.mxu0 0.0
    %2368 = vmatpush1.msra.mxu0 0.0
    %2369 = vmatprep.subr.mxu0 0.0
    %2370 = vmatpush1.msra.mxu0 0.0
    %2371 = vmatprep.subr.mxu0 0.0
    %2372 = vmatpush1.msra.mxu0 0.0
    %2373 = vmatprep.subr.mxu0 0.0
    %2374 = vmatpush1.msra.mxu0 0.0
    %2375 = vmatprep.subr.mxu0 0.0
    %2376 = vmatpush1.msra.mxu0 0.0
    %2377 = vmatprep.subr.mxu0 0.0
    %2378 = vmatpush1.msra.mxu0 0.0
    %2379 = vmatprep.subr.mxu0 0.0
    %2380 = vmatpush1.msra.mxu0 0.0
    %2381 = vmatprep.subr.mxu0 0.0
    %2382 = vmatpush1.msra.mxu0 0.0
    %2383 = vmatprep.subr.mxu0 0.0
    %2384 = vmatpush1.msra.mxu0 0.0
    %2385 = vmatprep.subr.mxu0 0.0
    %2386 = vmatpush1.msra.mxu0 0.0
    %2387 = vmatprep.subr.mxu0 0.0
    %2388 = vmatpush1.msra.mxu0 0.0
    %2389 = vmatprep.subr.mxu0 0.0
    %2390 = vmatpush1.msra.mxu0 0.0
    %2391 = vmatprep.mubr.f32.mxu0 0.0
    %2392 = vmatmul.mubr.f32.gmra.mrb[0].mxu0 %v2325
    %v2393 = vpop.f32.mrb[0].mxu0
    %v2394 = vadd.f32 0.0, %v2393
    %v2395 = vpop.f32.mrb[0].mxu0
    %2396 = vdwg.mxu0
    %v2398 = vsel %vm160, %v2154, 0
    %2400 = vmatprep.subr.mxu0 0.0
    %2401 = vmatpush1.msra.mxu0 %v1407
    %2402 = vmatprep.subr.mxu0 0.0
    %2403 = vmatpush1.msra.mxu0 %v1408
    %2404 = vmatprep.subr.mxu0 0.0
    %2405 = vmatpush1.msra.mxu0 0.0
    %2406 = vmatprep.subr.mxu0 0.0
    %2407 = vmatpush1.msra.mxu0 0.0
    %2408 = vmatprep.subr.mxu0 0.0
    %2409 = vmatpush1.msra.mxu0 0.0
    %2410 = vmatprep.subr.mxu0 0.0
    %2411 = vmatpush1.msra.mxu0 0.0
    %2412 = vmatprep.subr.mxu0 0.0
    %2413 = vmatpush1.msra.mxu0 0.0
    %2414 = vmatprep.subr.mxu0 0.0
    %2415 = vmatpush1.msra.mxu0 0.0
    %2416 = vmatprep.subr.mxu0 0.0
    %2417 = vmatpush1.msra.mxu0 0.0
    %2418 = vmatprep.subr.mxu0 0.0
    %2419 = vmatpush1.msra.mxu0 0.0
    %2420 = vmatprep.subr.mxu0 0.0
    %2421 = vmatpush1.msra.mxu0 0.0
    %2422 = vmatprep.subr.mxu0 0.0
    %2423 = vmatpush1.msra.mxu0 0.0
    %2424 = vmatprep.subr.mxu0 0.0
    %2425 = vmatpush1.msra.mxu0 0.0
    %2426 = vmatprep.subr.mxu0 0.0
    %2427 = vmatpush1.msra.mxu0 0.0
    %2428 = vmatprep.subr.mxu0 0.0
    %2429 = vmatpush1.msra.mxu0 0.0
    %2430 = vmatprep.subr.mxu0 0.0
    %2431 = vmatpush1.msra.mxu0 0.0
    %2432 = vmatprep.subr.mxu0 0.0
    %2433 = vmatpush1.msra.mxu0 0.0
    %2434 = vmatprep.subr.mxu0 0.0
    %2435 = vmatpush1.msra.mxu0 0.0
    %2436 = vmatprep.subr.mxu0 0.0
    %2437 = vmatpush1.msra.mxu0 0.0
    %2438 = vmatprep.subr.mxu0 0.0
    %2439 = vmatpush1.msra.mxu0 0.0
    %2440 = vmatprep.subr.mxu0 0.0
    %2441 = vmatpush1.msra.mxu0 0.0
    %2442 = vmatprep.subr.mxu0 0.0
    %2443 = vmatpush1.msra.mxu0 0.0
    %2444 = vmatprep.subr.mxu0 0.0
    %2445 = vmatpush1.msra.mxu0 0.0
    %2446 = vmatprep.subr.mxu0 0.0
    %2447 = vmatpush1.msra.mxu0 0.0
    %2448 = vmatprep.subr.mxu0 0.0
    %2449 = vmatpush1.msra.mxu0 0.0
    %2450 = vmatprep.subr.mxu0 0.0
    %2451 = vmatpush1.msra.mxu0 0.0
    %2452 = vmatprep.subr.mxu0 0.0
    %2453 = vmatpush1.msra.mxu0 0.0
    %2454 = vmatprep.subr.mxu0 0.0
    %2455 = vmatpush1.msra.mxu0 0.0
    %2456 = vmatprep.subr.mxu0 0.0
    %2457 = vmatpush1.msra.mxu0 0.0
    %2458 = vmatprep.subr.mxu0 0.0
    %2459 = vmatpush1.msra.mxu0 0.0
    %2460 = vmatprep.subr.mxu0 0.0
    %2461 = vmatpush1.msra.mxu0 0.0
    %2462 = vmatprep.subr.mxu0 0.0
    %2463 = vmatpush1.msra.mxu0 0.0
    %2464 = vmatprep.mubr.f32.mxu0 0.0
    %2465 = vmatmul.mubr.f32.gmra.mrb[0].mxu0 %v2398
    %v2466 = vpop.f32.mrb[0].mxu0
    %v2467 = vadd.f32 %v2394, %v2466
    %v2468 = vpop.f32.mrb[0].mxu0
    %2469 = vdwg.mxu0
    %v2470 = vlaneseq
    %v2471 = vshrl.u32 %v2470, 7
    %v2472 = vsub.s32 1, %v2471
    %v2473 = vrot.slane %v1426, %v2472
    %v2474 = vadd.f32 %v1988, %v2473
    %v2475 = vadd.f32 %v2467, %v2473
    %v2476 = vadd.f32 %v1399, %v2474
    %v2477 = vadd.f32 %v1400, %v2475
    %v2478 = vsel %vm75, %v2476, 0.0
    %2479 = vadd.xlane.f32.xlu0 %v2478
    %v2480 = vpop.xlane.xlu0 %2479
    %v2481 = vsel %vm75, %v2477, 0.0
    %2482 = vadd.xlane.f32.xlu0 %v2481
    %v2483 = vpop.xlane.xlu0 %2482
    %v2484 = vmul.f32 %v2480, %v1139
    %v2485 = vmul.f32 %v2483, %v1139
    %v2486 = vsub.f32 %v2476, %v2484
    %v2487 = vsub.f32 %v2477, %v2485
    %v2488 = vmul.f32 %v2486, %v2486
    %v2489 = vmul.f32 %v2487, %v2487
    %v2490 = vsel %vm75, %v2488, 0.0
    %2491 = vadd.xlane.f32.xlu0 %v2490
    %v2492 = vpop.xlane.xlu0 %2491
    %v2493 = vsel %vm75, %v2489, 0.0
    %2494 = vadd.xlane.f32.xlu0 %v2493
    %v2495 = vpop.xlane.xlu0 %2494
    %v2496 = vmul.f32 %v2492, %v1139
    %v2497 = vmul.f32 %v2495, %v1139
    %v2498 = vadd.f32 %v2496, 1e-12
    %v2499 = vadd.f32 %v2497, 1e-12
    %v2500 = vrsqrt.pop %v2498
    %v2501 = vrsqrt.pop %v2499
    %v2502 = vmul.f32 %v2486, %v2500
    %v2503 = vmul.f32 %v2487, %v2501
    %v2504 = vlaneseq
    %v2505 = vshrl.u32 %v2504, 7
    %v2506 = vsub.s32 2, %v2505
    %v2507 = vrot.slane %v1426, %v2506
    %v2508 = vmul.f32 %v2502, %v2507
    %v2509 = vmul.f32 %v2503, %v2507
    %v2510 = vlaneseq
    %v2511 = vshrl.u32 %v2510, 7
    %v2512 = vsub.s32 3, %v2511
    %v2513 = vrot.slane %v1426, %v2512
    %v2514 = vadd.f32 %v2508, %v2513
    %v2515 = vadd.f32 %v2509, %v2513
    %v2516 = vlaneseq
    %v2517 = vshrl.u32 %v2516, 7
    %v2518 = vsub.s32 4, %v2517
    %v2519 = vrot.slane %v1426, %v2518
    %v2521 = vsel %vm75, %v2514, 0
    %v2524 = vsel %vm75, %v2515, 0
    %2526 = vmatprep.subr.mxu0 0.0
    %2527 = vmatpush1.msra.mxu0 %v1412
    %2528 = vmatprep.subr.mxu0 0.0
    %2529 = vmatpush1.msra.mxu0 %v1413
    %2530 = vmatprep.subr.mxu0 0.0
    %2531 = vmatpush1.msra.mxu0 %v1414
    %2532 = vmatprep.subr.mxu0 0.0
    %2533 = vmatpush1.msra.mxu0 %v1415
    %2534 = vmatprep.subr.mxu0 0.0
    %2535 = vmatpush1.msra.mxu0 0.0
    %2536 = vmatprep.subr.mxu0 0.0
    %2537 = vmatpush1.msra.mxu0 0.0
    %2538 = vmatprep.subr.mxu0 0.0
    %2539 = vmatpush1.msra.mxu0 0.0
    %2540 = vmatprep.subr.mxu0 0.0
    %2541 = vmatpush1.msra.mxu0 0.0
    %2542 = vmatprep.subr.mxu0 0.0
    %2543 = vmatpush1.msra.mxu0 0.0
    %2544 = vmatprep.subr.mxu0 0.0
    %2545 = vmatpush1.msra.mxu0 0.0
    %2546 = vmatprep.subr.mxu0 0.0
    %2547 = vmatpush1.msra.mxu0 0.0
    %2548 = vmatprep.subr.mxu0 0.0
    %2549 = vmatpush1.msra.mxu0 0.0
    %2550 = vmatprep.subr.mxu0 0.0
    %2551 = vmatpush1.msra.mxu0 0.0
    %2552 = vmatprep.subr.mxu0 0.0
    %2553 = vmatpush1.msra.mxu0 0.0
    %2554 = vmatprep.subr.mxu0 0.0
    %2555 = vmatpush1.msra.mxu0 0.0
    %2556 = vmatprep.subr.mxu0 0.0
    %2557 = vmatpush1.msra.mxu0 0.0
    %2558 = vmatprep.subr.mxu0 0.0
    %2559 = vmatpush1.msra.mxu0 0.0
    %2560 = vmatprep.subr.mxu0 0.0
    %2561 = vmatpush1.msra.mxu0 0.0
    %2562 = vmatprep.subr.mxu0 0.0
    %2563 = vmatpush1.msra.mxu0 0.0
    %2564 = vmatprep.subr.mxu0 0.0
    %2565 = vmatpush1.msra.mxu0 0.0
    %2566 = vmatprep.subr.mxu0 0.0
    %2567 = vmatpush1.msra.mxu0 0.0
    %2568 = vmatprep.subr.mxu0 0.0
    %2569 = vmatpush1.msra.mxu0 0.0
    %2570 = vmatprep.subr.mxu0 0.0
    %2571 = vmatpush1.msra.mxu0 0.0
    %2572 = vmatprep.subr.mxu0 0.0
    %2573 = vmatpush1.msra.mxu0 0.0
    %2574 = vmatprep.subr.mxu0 0.0
    %2575 = vmatpush1.msra.mxu0 0.0
    %2576 = vmatprep.subr.mxu0 0.0
    %2577 = vmatpush1.msra.mxu0 0.0
    %2578 = vmatprep.subr.mxu0 0.0
    %2579 = vmatpush1.msra.mxu0 0.0
    %2580 = vmatprep.subr.mxu0 0.0
    %2581 = vmatpush1.msra.mxu0 0.0
    %2582 = vmatprep.subr.mxu0 0.0
    %2583 = vmatpush1.msra.mxu0 0.0
    %2584 = vmatprep.subr.mxu0 0.0
    %2585 = vmatpush1.msra.mxu0 0.0
    %2586 = vmatprep.subr.mxu0 0.0
    %2587 = vmatpush1.msra.mxu0 0.0
    %2588 = vmatprep.subr.mxu0 0.0
    %2589 = vmatpush1.msra.mxu0 0.0
    %2590 = vmatprep.mubr.f32.mxu0 0.0
    %2591 = vmatmul.mubr.f32.gmra.mrb[0].mxu0 %v2521
    %v2592 = vpop.f32.mrb[0].mxu0
    %v2593 = vadd.f32 %v2519, %v2592
    %v2594 = vpop.f32.mrb[0].mxu0
    %2595 = vmatprep.mubr.f32.mxu0 0.0
    %2596 = vmatmul.mubr.f32.gmra.mrb[0].mxu0 %v2524
    %v2597 = vpop.f32.mrb[0].mxu0
    %v2598 = vadd.f32 %v2519, %v2597
    %v2599 = vpop.f32.mrb[0].mxu0
    %2600 = vdwg.mxu0
    %v2601 = vmul.f32 %v2593, %v2593
    %v2602 = vmul.f32 %v2598, %v2598
    %v2603 = vmul.f32 %v2593, %v2601
    %v2604 = vmul.f32 %v2598, %v2602
    %v2605 = vmul.f32 %v2603, 0.044715
    %v2606 = vmul.f32 %v2604, 0.044715
    %v2607 = vadd.f32 %v2593, %v2605
    %v2608 = vadd.f32 %v2598, %v2606
    %v2609 = vmul.f32 %v2607, 0.7978846
    %v2610 = vmul.f32 %v2608, 0.7978846
    %v2611 = vtanh.pop %v2609
    %v2612 = vtanh.pop %v2610
    %v2613 = vadd.f32 %v2611, 1.0
    %v2614 = vadd.f32 %v2612, 1.0
    %v2615 = vmul.f32 %v2613, 0.5
    %v2616 = vmul.f32 %v2614, 0.5
    %v2617 = vmul.f32 %v2593, %v2615
    %v2618 = vmul.f32 %v2598, %v2616
    %v2619 = vlaneseq
    %v2620 = vshrl.u32 %v2619, 7
    %v2621 = vsub.s32 5, %v2620
    %v2622 = vrot.slane %v1426, %v2621
    %v2624 = vsel %vm1279, %v2617, 0
    %v2627 = vsel %vm1279, %v2618, 0
    %2629 = vmatprep.subr.mxu0 0.0
    %2630 = vmatpush1.msra.mxu0 %v1417
    %2631 = vmatprep.subr.mxu0 0.0
    %2632 = vmatpush1.msra.mxu0 %v1418
    %2633 = vmatprep.subr.mxu0 0.0
    %2634 = vmatpush1.msra.mxu0 %v1419
    %2635 = vmatprep.subr.mxu0 0.0
    %2636 = vmatpush1.msra.mxu0 %v1420
    %2637 = vmatprep.subr.mxu0 0.0
    %2638 = vmatpush1.msra.mxu0 %v1421
    %2639 = vmatprep.subr.mxu0 0.0
    %2640 = vmatpush1.msra.mxu0 %v1422
    %2641 = vmatprep.subr.mxu0 0.0
    %2642 = vmatpush1.msra.mxu0 %v1423
    %2643 = vmatprep.subr.mxu0 0.0
    %2644 = vmatpush1.msra.mxu0 %v1424
    %2645 = vmatprep.subr.mxu0 0.0
    %2646 = vmatpush1.msra.mxu0 0.0
    %2647 = vmatprep.subr.mxu0 0.0
    %2648 = vmatpush1.msra.mxu0 0.0
    %2649 = vmatprep.subr.mxu0 0.0
    %2650 = vmatpush1.msra.mxu0 0.0
    %2651 = vmatprep.subr.mxu0 0.0
    %2652 = vmatpush1.msra.mxu0 0.0
    %2653 = vmatprep.subr.mxu0 0.0
    %2654 = vmatpush1.msra.mxu0 0.0
    %2655 = vmatprep.subr.mxu0 0.0
    %2656 = vmatpush1.msra.mxu0 0.0
    %2657 = vmatprep.subr.mxu0 0.0
    %2658 = vmatpush1.msra.mxu0 0.0
    %2659 = vmatprep.subr.mxu0 0.0
    %2660 = vmatpush1.msra.mxu0 0.0
    %2661 = vmatprep.subr.mxu0 0.0
    %2662 = vmatpush1.msra.mxu0 0.0
    %2663 = vmatprep.subr.mxu0 0.0
    %2664 = vmatpush1.msra.mxu0 0.0
    %2665 = vmatprep.subr.mxu0 0.0
    %2666 = vmatpush1.msra.mxu0 0.0
    %2667 = vmatprep.subr.mxu0 0.0
    %2668 = vmatpush1.msra.mxu0 0.0
    %2669 = vmatprep.subr.mxu0 0.0
    %2670 = vmatpush1.msra.mxu0 0.0
    %2671 = vmatprep.subr.mxu0 0.0
    %2672 = vmatpush1.msra.mxu0 0.0
    %2673 = vmatprep.subr.mxu0 0.0
    %2674 = vmatpush1.msra.mxu0 0.0
    %2675 = vmatprep.subr.mxu0 0.0
    %2676 = vmatpush1.msra.mxu0 0.0
    %2677 = vmatprep.subr.mxu0 0.0
    %2678 = vmatpush1.msra.mxu0 0.0
    %2679 = vmatprep.subr.mxu0 0.0
    %2680 = vmatpush1.msra.mxu0 0.0
    %2681 = vmatprep.subr.mxu0 0.0
    %2682 = vmatpush1.msra.mxu0 0.0
    %2683 = vmatprep.subr.mxu0 0.0
    %2684 = vmatpush1.msra.mxu0 0.0
    %2685 = vmatprep.subr.mxu0 0.0
    %2686 = vmatpush1.msra.mxu0 0.0
    %2687 = vmatprep.subr.mxu0 0.0
    %2688 = vmatpush1.msra.mxu0 0.0
    %2689 = vmatprep.subr.mxu0 0.0
    %2690 = vmatpush1.msra.mxu0 0.0
    %2691 = vmatprep.subr.mxu0 0.0
    %2692 = vmatpush1.msra.mxu0 0.0
    %2693 = vmatprep.mubr.f32.mxu0 0.0
    %2694 = vmatmul.mubr.f32.gmra.mrb[0].mxu0 %v2624
    %v2695 = vpop.f32.mrb[0].mxu0
    %v2696 = vadd.f32 %v2622, %v2695
    %v2697 = vpop.f32.mrb[0].mxu0
    %2698 = vmatprep.mubr.f32.mxu0 0.0
    %2699 = vmatmul.mubr.f32.gmra.mrb[0].mxu0 %v2627
    %v2700 = vpop.f32.mrb[0].mxu0
    %v2701 = vadd.f32 %v2622, %v2700
    %v2702 = vpop.f32.mrb[0].mxu0
    %2703 = vdwg.mxu0
    %v2704 = vadd.f32 %v2514, %v2696
    %v2705 = vadd.f32 %v2515, %v2701
    %v2706 = vsel %vm75, %v2704, 0.0
    %2707 = vadd.xlane.f32.xlu0 %v2706
    %v2708 = vpop.xlane.xlu0 %2707
    %v2709 = vsel %vm75, %v2705, 0.0
    %2710 = vadd.xlane.f32.xlu0 %v2709
    %v2711 = vpop.xlane.xlu0 %2710
    %v2712 = vmul.f32 %v2708, %v1139
    %v2713 = vmul.f32 %v2711, %v1139
    %v2714 = vsub.f32 %v2704, %v2712
    %v2715 = vsub.f32 %v2705, %v2713
    %v2716 = vmul.f32 %v2714, %v2714
    %v2717 = vmul.f32 %v2715, %v2715
    %v2718 = vsel %vm75, %v2716, 0.0
    %2719 = vadd.xlane.f32.xlu0 %v2718
    %v2720 = vpop.xlane.xlu0 %2719
    %v2721 = vsel %vm75, %v2717, 0.0
    %2722 = vadd.xlane.f32.xlu0 %v2721
    %v2723 = vpop.xlane.xlu0 %2722
    %v2724 = vmul.f32 %v2720, %v1139
    %v2725 = vmul.f32 %v2723, %v1139
    %v2726 = vadd.f32 %v2724, 1e-12
    %v2727 = vadd.f32 %v2725, 1e-12
    %v2728 = vrsqrt.pop %v2726
    %v2729 = vrsqrt.pop %v2727
    %v2730 = vmul.f32 %v2714, %v2728
    %v2731 = vmul.f32 %v2715, %v2729
    %v2732 = vlaneseq
    %v2733 = vshrl.u32 %v2732, 7
    %v2734 = vsub.s32 6, %v2733
    %v2735 = vrot.slane %v1426, %v2734
    %v2736 = vmul.f32 %v2730, %v2735
    %v2737 = vmul.f32 %v2731, %v2735
    %v2738 = vlaneseq
    %v2739 = vshrl.u32 %v2738, 7
    %v2740 = vsub.s32 7, %v2739
    %v2741 = vrot.slane %v1426, %v2740
    %v2742 = vadd.f32 %v2736, %v2741
    %v2743 = vadd.f32 %v2737, %v2741
    %v2745 = vrot.slane %v2743, 7
    %vm2747 = vcmask 1040384
    %v2748 = vsel %vm2747, %v2742, %v2745
    %v2749 = vld [vmem:[%s2] sm:$0x3]
    %v2750 = vld [vmem:[%s8] sm:$0xf]
    %v2751 = vld [vmem:[%s9] sm:$0x1]
    %v2753 = vlaneseq
    %v2754 = vshrl.u32 %v2753, 7
    %v2755 = vsub.s32 0, %v2754
    %v2756 = vrot.slane %v2751, %v2755
    %vm2758 = vcmask 31744
    %v2760 = vsel %vm2758, %v2749, 0
    %vm2762 = vcmask 1043456
    %v2764 = vsel %vm2762, %v2750, 0
    %2766 = vmatprep.subr.mxu0 0.0
    %2767 = vmatpush1.msra.mxu0 %v2764
    %2768 = vmatprep.subr.mxu0 0.0
    %2769 = vmatpush1.msra.mxu0 0.0
    %2770 = vmatprep.subr.mxu0 0.0
    %2771 = vmatpush1.msra.mxu0 0.0
    %2772 = vmatprep.subr.mxu0 0.0
    %2773 = vmatpush1.msra.mxu0 0.0
    %2774 = vmatprep.subr.mxu0 0.0
    %2775 = vmatpush1.msra.mxu0 0.0
    %2776 = vmatprep.subr.mxu0 0.0
    %2777 = vmatpush1.msra.mxu0 0.0
    %2778 = vmatprep.subr.mxu0 0.0
    %2779 = vmatpush1.msra.mxu0 0.0
    %2780 = vmatprep.subr.mxu0 0.0
    %2781 = vmatpush1.msra.mxu0 0.0
    %2782 = vmatprep.subr.mxu0 0.0
    %2783 = vmatpush1.msra.mxu0 0.0
    %2784 = vmatprep.subr.mxu0 0.0
    %2785 = vmatpush1.msra.mxu0 0.0
    %2786 = vmatprep.subr.mxu0 0.0
    %2787 = vmatpush1.msra.mxu0 0.0
    %2788 = vmatprep.subr.mxu0 0.0
    %2789 = vmatpush1.msra.mxu0 0.0
    %2790 = vmatprep.subr.mxu0 0.0
    %2791 = vmatpush1.msra.mxu0 0.0
    %2792 = vmatprep.subr.mxu0 0.0
    %2793 = vmatpush1.msra.mxu0 0.0
    %2794 = vmatprep.subr.mxu0 0.0
    %2795 = vmatpush1.msra.mxu0 0.0
    %2796 = vmatprep.subr.mxu0 0.0
    %2797 = vmatpush1.msra.mxu0 0.0
    %2798 = vmatprep.subr.mxu0 0.0
    %2799 = vmatpush1.msra.mxu0 0.0
    %2800 = vmatprep.subr.mxu0 0.0
    %2801 = vmatpush1.msra.mxu0 0.0
    %2802 = vmatprep.subr.mxu0 0.0
    %2803 = vmatpush1.msra.mxu0 0.0
    %2804 = vmatprep.subr.mxu0 0.0
    %2805 = vmatpush1.msra.mxu0 0.0
    %2806 = vmatprep.subr.mxu0 0.0
    %2807 = vmatpush1.msra.mxu0 0.0
    %2808 = vmatprep.subr.mxu0 0.0
    %2809 = vmatpush1.msra.mxu0 0.0
    %2810 = vmatprep.subr.mxu0 0.0
    %2811 = vmatpush1.msra.mxu0 0.0
    %2812 = vmatprep.subr.mxu0 0.0
    %2813 = vmatpush1.msra.mxu0 0.0
    %2814 = vmatprep.subr.mxu0 0.0
    %2815 = vmatpush1.msra.mxu0 0.0
    %2816 = vmatprep.subr.mxu0 0.0
    %2817 = vmatpush1.msra.mxu0 0.0
    %2818 = vmatprep.subr.mxu0 0.0
    %2819 = vmatpush1.msra.mxu0 0.0
    %2820 = vmatprep.subr.mxu0 0.0
    %2821 = vmatpush1.msra.mxu0 0.0
    %2822 = vmatprep.subr.mxu0 0.0
    %2823 = vmatpush1.msra.mxu0 0.0
    %2824 = vmatprep.subr.mxu0 0.0
    %2825 = vmatpush1.msra.mxu0 0.0
    %2826 = vmatprep.subr.mxu0 0.0
    %2827 = vmatpush1.msra.mxu0 0.0
    %2828 = vmatprep.subr.mxu0 0.0
    %2829 = vmatpush1.msra.mxu0 0.0
    %2830 = vmatprep.mubr.f32.mxu0 0.0
    %2831 = vmatmul.mubr.f32.gmra.mrb[0].mxu0 %v2760
    %v2832 = vpop.f32.mrb[0].mxu0
    %v2833 = vadd.f32 %v2756, %v2832
    %v2834 = vpop.f32.mrb[0].mxu0
    %2835 = vdwg.mxu0
    %v2836 = vld [vmem:[%s10] sm:$0xff]
    %v2837 = vld [vmem:[%s10 + $0x8] sm:$0xff]
    %v2838 = vld [vmem:[%s10 + $0x10] sm:$0xff]
    %v2839 = vld [vmem:[%s10 + $0x18] sm:$0xff]
    %v2840 = vld [vmem:[%s11] sm:$0xff]
    %v2841 = vld [vmem:[%s11 + $0x8] sm:$0xff]
    %v2842 = vld [vmem:[%s11 + $0x10] sm:$0xff]
    %v2843 = vld [vmem:[%s11 + $0x18] sm:$0xff]
    %v2844 = vld [vmem:[%s11 + $0x20] sm:$0xff]
    %v2845 = vld [vmem:[%s11 + $0x28] sm:$0xff]
    %v2846 = vld [vmem:[%s11 + $0x30] sm:$0xff]
    %v2847 = vld [vmem:[%s11 + $0x38] sm:$0xff]
    %v2849 = vsel %vm1279, %v2833, 0
    %2851 = vmatprep.subr.mxu0 0.0
    %2852 = vmatpush1.msra.mxu0 %v2840
    %2853 = vmatprep.subr.mxu0 0.0
    %2854 = vmatpush1.msra.mxu0 %v2841
    %2855 = vmatprep.subr.mxu0 0.0
    %2856 = vmatpush1.msra.mxu0 %v2842
    %2857 = vmatprep.subr.mxu0 0.0
    %2858 = vmatpush1.msra.mxu0 %v2843
    %2859 = vmatprep.subr.mxu0 0.0
    %2860 = vmatpush1.msra.mxu0 %v2844
    %2861 = vmatprep.subr.mxu0 0.0
    %2862 = vmatpush1.msra.mxu0 %v2845
    %2863 = vmatprep.subr.mxu0 0.0
    %2864 = vmatpush1.msra.mxu0 %v2846
    %2865 = vmatprep.subr.mxu0 0.0
    %2866 = vmatpush1.msra.mxu0 %v2847
    %2867 = vmatprep.subr.mxu0 0.0
    %2868 = vmatpush1.msra.mxu0 0.0
    %2869 = vmatprep.subr.mxu0 0.0
    %2870 = vmatpush1.msra.mxu0 0.0
    %2871 = vmatprep.subr.mxu0 0.0
    %2872 = vmatpush1.msra.mxu0 0.0
    %2873 = vmatprep.subr.mxu0 0.0
    %2874 = vmatpush1.msra.mxu0 0.0
    %2875 = vmatprep.subr.mxu0 0.0
    %2876 = vmatpush1.msra.mxu0 0.0
    %2877 = vmatprep.subr.mxu0 0.0
    %2878 = vmatpush1.msra.mxu0 0.0
    %2879 = vmatprep.subr.mxu0 0.0
    %2880 = vmatpush1.msra.mxu0 0.0
    %2881 = vmatprep.subr.mxu0 0.0
    %2882 = vmatpush1.msra.mxu0 0.0
    %2883 = vmatprep.subr.mxu0 0.0
    %2884 = vmatpush1.msra.mxu0 0.0
    %2885 = vmatprep.subr.mxu0 0.0
    %2886 = vmatpush1.msra.mxu0 0.0
    %2887 = vmatprep.subr.mxu0 0.0
    %2888 = vmatpush1.msra.mxu0 0.0
    %2889 = vmatprep.subr.mxu0 0.0
    %2890 = vmatpush1.msra.mxu0 0.0
    %2891 = vmatprep.subr.mxu0 0.0
    %2892 = vmatpush1.msra.mxu0 0.0
    %2893 = vmatprep.subr.mxu0 0.0
    %2894 = vmatpush1.msra.mxu0 0.0
    %2895 = vmatprep.subr.mxu0 0.0
    %2896 = vmatpush1.msra.mxu0 0.0
    %2897 = vmatprep.subr.mxu0 0.0
    %2898 = vmatpush1.msra.mxu0 0.0
    %2899 = vmatprep.subr.mxu0 0.0
    %2900 = vmatpush1.msra.mxu0 0.0
    %2901 = vmatprep.subr.mxu0 0.0
    %2902 = vmatpush1.msra.mxu0 0.0
    %2903 = vmatprep.subr.mxu0 0.0
    %2904 = vmatpush1.msra.mxu0 0.0
    %2905 = vmatprep.subr.mxu0 0.0
    %2906 = vmatpush1.msra.mxu0 0.0
    %2907 = vmatprep.subr.mxu0 0.0
    %2908 = vmatpush1.msra.mxu0 0.0
    %2909 = vmatprep.subr.mxu0 0.0
    %2910 = vmatpush1.msra.mxu0 0.0
    %2911 = vmatprep.subr.mxu0 0.0
    %2912 = vmatpush1.msra.mxu0 0.0
    %2913 = vmatprep.subr.mxu0 0.0
    %2914 = vmatpush1.msra.mxu0 0.0
    %2915 = vmatprep.mubr.f32.mxu0 0.0
    %2916 = vmatmul.mubr.f32.gmra.mrb[0].mxu0 %v2849
    %v2917 = vpop.f32.mrb[0].mxu0
    %v2918 = vadd.f32 0.0, %v2917
    %v2919 = vpop.f32.mrb[0].mxu0
    %2920 = vdwg.mxu0
    %v2922 = vsel %vm75, %v2748, 0
    %2924 = vmatprep.subr.mxu0 0.0
    %2925 = vmatpush1.msra.mxu0 %v2836
    %2926 = vmatprep.subr.mxu0 0.0
    %2927 = vmatpush1.msra.mxu0 %v2837
    %2928 = vmatprep.subr.mxu0 0.0
    %2929 = vmatpush1.msra.mxu0 %v2838
    %2930 = vmatprep.subr.mxu0 0.0
    %2931 = vmatpush1.msra.mxu0 %v2839
    %2932 = vmatprep.subr.mxu0 0.0
    %2933 = vmatpush1.msra.mxu0 0.0
    %2934 = vmatprep.subr.mxu0 0.0
    %2935 = vmatpush1.msra.mxu0 0.0
    %2936 = vmatprep.subr.mxu0 0.0
    %2937 = vmatpush1.msra.mxu0 0.0
    %2938 = vmatprep.subr.mxu0 0.0
    %2939 = vmatpush1.msra.mxu0 0.0
    %2940 = vmatprep.subr.mxu0 0.0
    %2941 = vmatpush1.msra.mxu0 0.0
    %2942 = vmatprep.subr.mxu0 0.0
    %2943 = vmatpush1.msra.mxu0 0.0
    %2944 = vmatprep.subr.mxu0 0.0
    %2945 = vmatpush1.msra.mxu0 0.0
    %2946 = vmatprep.subr.mxu0 0.0
    %2947 = vmatpush1.msra.mxu0 0.0
    %2948 = vmatprep.subr.mxu0 0.0
    %2949 = vmatpush1.msra.mxu0 0.0
    %2950 = vmatprep.subr.mxu0 0.0
    %2951 = vmatpush1.msra.mxu0 0.0
    %2952 = vmatprep.subr.mxu0 0.0
    %2953 = vmatpush1.msra.mxu0 0.0
    %2954 = vmatprep.subr.mxu0 0.0
    %2955 = vmatpush1.msra.mxu0 0.0
    %2956 = vmatprep.subr.mxu0 0.0
    %2957 = vmatpush1.msra.mxu0 0.0
    %2958 = vmatprep.subr.mxu0 0.0
    %2959 = vmatpush1.msra.mxu0 0.0
    %2960 = vmatprep.subr.mxu0 0.0
    %2961 = vmatpush1.msra.mxu0 0.0
    %2962 = vmatprep.subr.mxu0 0.0
    %2963 = vmatpush1.msra.mxu0 0.0
    %2964 = vmatprep.subr.mxu0 0.0
    %2965 = vmatpush1.msra.mxu0 0.0
    %2966 = vmatprep.subr.mxu0 0.0
    %2967 = vmatpush1.msra.mxu0 0.0
    %2968 = vmatprep.subr.mxu0 0.0
    %2969 = vmatpush1.msra.mxu0 0.0
    %2970 = vmatprep.subr.mxu0 0.0
    %2971 = vmatpush1.msra.mxu0 0.0
    %2972 = vmatprep.subr.mxu0 0.0
    %2973 = vmatpush1.msra.mxu0 0.0
    %2974 = vmatprep.subr.mxu0 0.0
    %2975 = vmatpush1.msra.mxu0 0.0
    %2976 = vmatprep.subr.mxu0 0.0
    %2977 = vmatpush1.msra.mxu0 0.0
    %2978 = vmatprep.subr.mxu0 0.0
    %2979 = vmatpush1.msra.mxu0 0.0
    %2980 = vmatprep.subr.mxu0 0.0
    %2981 = vmatpush1.msra.mxu0 0.0
    %2982 = vmatprep.subr.mxu0 0.0
    %2983 = vmatpush1.msra.mxu0 0.0
    %2984 = vmatprep.subr.mxu0 0.0
    %2985 = vmatpush1.msra.mxu0 0.0
    %2986 = vmatprep.subr.mxu0 0.0
    %2987 = vmatpush1.msra.mxu0 0.0
    %2988 = vmatprep.mubr.f32.mxu0 0.0
    %2989 = vmatmul.mubr.f32.gmra.mrb[0].mxu0 %v2922
    %v2990 = vpop.f32.mrb[0].mxu0
    %v2991 = vadd.f32 %v2918, %v2990
    %v2992 = vpop.f32.mrb[0].mxu0
    %2993 = vdwg.mxu0
    %v2994 = vld [vmem:[%s12] sm:$0x1]
    %v2996 = vlaneseq
    %v2997 = vshrl.u32 %v2996, 7
    %v2998 = vsub.s32 0, %v2997
    %v2999 = vrot.slane %v2994, %v2998
    %v3001 = vadd.f32 %v2991, %v2999
    %vm3002 = vcmask 17408
    %3003 = vst.msk [vmem:[#allocation2] sm:$0x3] %vm3002, %v3001
    // Predicated region
    $region54: #{tpu_custom_call.1} parent=1 // pred_check
      _
    $region55: #{tpu_custom_call.1} parent=1 // pred_check_branch
      %3005 = sbr.rel (0) target = $region57
    $region56: #{tpu_custom_call.1} parent=1 // pred_region
      %s3007 = ssub.s32 32, 32
      %3008 = vsyncadd [#allocation3], %s3007
      %s3010 = sshll.u32 [#allocation2], 4
      %s3011 = int_to_ptr.vmem [resolvable:$true] %s3010
      %3013 = dma.vmem_to_hbm [thread:$0]  %s3011, 32, %s13, [#allocation3]
    $region57: #{tpu_custom_call.1} parent=1 // pred_fallthru
      _
    // Predicated region
    $region58: #{tpu_custom_call.1} parent=1 // pred_check
      _
    $region59: #{tpu_custom_call.1} parent=1 // pred_check_branch
      %3015 = sbr.rel (0) target = $region61
    $region60: #{tpu_custom_call.1} parent=1 // pred_region
      %3016 = dma.done [#allocation3], 32
    $region61: #{tpu_custom_call.1} parent=1 // pred_fallthru
      _
    %3017 = vsyncpa [#allocation3], 1

</llo_original>
